<compile_context>
chip_gen: v5e
topology: v5e:2x2
jax: 0.10.0
libtpu: 0.0.40
codegen_flags: <defaults>
</compile_context>

<pallas_src>
import jax
import jax.numpy as jnp
from jax.experimental import pallas as pl
from jax.experimental.pallas import tpu as pltpu


# -----------------------------------------------------------------------------
# Static packing layout (row offsets inside the packed parameter arrays).
# All slice starts are multiples of 16 so bf16 sublane packing stays aligned.
# -----------------------------------------------------------------------------
CW2_R0 = 0          # conv2 weight  rows [0, 144), cols [0, 64)
CW1_R0 = 144        # conv1 weight  rows [144, 153), cols [0, 16)
WH2_R0 = 160        # merged final-head weight rows [160, 288), cols [0, out_dim+1)
CONVW_ROWS = 288

FEAT_R0 = 16        # trunk layer-0 feature rows [16, 80)  (state rows are [0, state_dim))
W1_R0 = 80          # trunk layer-1 rows [80, 592)
W2_R0 = 592         # trunk layer-2 rows [592, 1104)
TRUNK_ROWS = 1104

# biases (8, 512) f32 rows: 0=b0, 1=b1, 2=b2, 3=bh1[:128], 4=cb1[:16],
#                           5=cb2[:64], 6=bh2[:out_dim+1], 7=unused


def _round_up(x, m):
    return (x + m - 1) // m * m


def _full_spec(arr):
    """Whole-array block living in VMEM (grid=(1,))."""
    nd = arr.ndim
    return pl.BlockSpec(arr.shape, lambda i, nd=nd: (0,) * nd)


# -----------------------------------------------------------------------------
# Plain-JAX glue: im2col construction (index shuffling only, fuses under jit).
# -----------------------------------------------------------------------------
def im2col_conv1_pooled(occ):
    """occ: (B,1,H,W) -> (4*B*Ho*Wo, 9); one im2col group per 2x2 pool offset."""
    B, _, H, W = occ.shape
    Ho, Wo = H // 2, W // 2
    xp = jnp.pad(occ[:, 0], ((0, 0), (1, 1), (1, 1)))           # (B, H+2, W+2)
    groups = []
    for p in range(2):
        for q in range(2):
            taps = []
            for dy in range(3):
                for dx in range(3):
                    sl = xp[:, p + dy:p + dy + 2 * Ho:2, q + dx:q + dx + 2 * Wo:2]
                    taps.append(sl.reshape(B, Ho * Wo))
            groups.append(jnp.stack(taps, axis=-1))             # (B, S1, 9)
    cols = jnp.stack(groups, axis=0)                            # (4, B, S1, 9)
    return cols.reshape(4 * B * Ho * Wo, 9)


def im2col_conv2(pooled, Ho, Wo):
    """(reference only) pooled: (B, Ho*Wo, 16) -> (B, Ho*Wo, 144), (dy,dx,cin) order."""
    B, S1, C = pooled.shape
    x = pooled.reshape(B, Ho, Wo, C)
    xp = jnp.pad(x, ((0, 0), (1, 1), (1, 1), (0, 0)))
    taps = []
    for dy in range(3):
        for dx in range(3):
            taps.append(xp[:, dy:dy + Ho, dx:dx + Wo, :].reshape(B, S1, C))
    return jnp.concatenate(taps, axis=-1)


# -----------------------------------------------------------------------------
# Deterministic synthetic parameters (shapes implied by MyModel.__init__).
# -----------------------------------------------------------------------------
def init_params(key, state_dim, out_dim):
    keys = iter(jax.random.split(key, 32))
    nxt = lambda: next(keys)

    def dense(fan_in, fan_out):
        return (jax.random.normal(nxt(), (fan_in, fan_out), jnp.float32)
                * jnp.sqrt(2.0 / fan_in))

    def vec(n, scale=0.1):
        return scale * jax.random.normal(nxt(), (1, n), jnp.float32)

    p = {}
    # feature_extractor convs in im2col-friendly (K, C_out) layout
    p["cw1"], p["cb1"] = dense(9, 16), vec(16)            # Conv2d(1, 16, 3)
    p["cw2"], p["cb2"] = dense(9 * 16, 64), vec(64)       # Conv2d(16, 64, 3)

    f0 = state_dim + 64
    p["w0"], p["b0"] = dense(f0, 512), vec(512)
    p["w1"], p["b1"] = dense(512, 512), vec(512)
    p["w2"], p["b2"] = dense(512, 512), vec(512)

    # BatchNorm1d (inference): fold (gamma, beta, running_mean, running_var)
    # into per-feature scale/shift.
    eps = 1e-5
    for i in range(3):
        gamma = 1.0 + 0.1 * jax.random.normal(nxt(), (1, 512), jnp.float32)
        beta = 0.1 * jax.random.normal(nxt(), (1, 512), jnp.float32)
        rmean = 0.1 * jax.random.normal(nxt(), (1, 512), jnp.float32)
        rvar = 1.0 + 0.1 * jax.random.uniform(nxt(), (1, 512), jnp.float32)
        scale = gamma * jax.lax.rsqrt(rvar + eps)
        p[f"s{i}"] = scale
        p[f"t{i}"] = beta - rmean * scale

    p["wp1"], p["bp1"] = dense(512, 64), vec(64)
    p["wp2"], p["bp2"] = dense(64, out_dim), vec(out_dim)
    p["wd1"], p["bd1"] = dense(512, 64), vec(64)
    p["wd2"], p["bd2"] = dense(64, 1), vec(1)
    return p


def prepare_kernel_params(params, state_dim):
    """Glue-side weight prep: fold BN, merge heads, pack operands, cast to bf16."""
    bf16 = jnp.bfloat16
    out_dim = params["wp2"].shape[1]
    assert state_dim <= FEAT_R0, "packing layout assumes state_dim <= 16"

    # --- conv + final-head weights packed into one bf16 slab (width 64). ------
    wh2 = jnp.zeros((128, 64), jnp.float32)                      # block-diag(wp2, wd2)
    wh2 = wh2.at[:64, :out_dim].set(params["wp2"])
    wh2 = wh2.at[64:, out_dim:out_dim + 1].set(params["wd2"])
    convw = jnp.zeros((CONVW_ROWS, 64), jnp.float32)
    convw = convw.at[CW2_R0:CW2_R0 + 144, :].set(params["cw2"])
    convw = convw.at[CW1_R0:CW1_R0 + 9, :16].set(params["cw1"])
    convw = convw.at[WH2_R0:WH2_R0 + 128, :].set(wh2)

    # --- trunk Linear weights with BatchNorm folded, packed into one slab. ----
    trunk = jnp.zeros((TRUNK_ROWS, 512), jnp.float32)
    w0_eff = params["w0"] * params["s0"]
    trunk = trunk.at[0:state_dim, :].set(w0_eff[:state_dim])
    trunk = trunk.at[FEAT_R0:FEAT_R0 + 64, :].set(w0_eff[state_dim:])
    trunk = trunk.at[W1_R0:W1_R0 + 512, :].set(params["w1"] * params["s1"])
    trunk = trunk.at[W2_R0:W2_R0 + 512, :].set(params["w2"] * params["s2"])

    # --- every bias/shift vector packed into one (8,512) f32 array. -----------
    biases = jnp.zeros((8, 512), jnp.float32)
    for i in range(3):
        b_eff = params[f"b{i}"] * params[f"s{i}"] + params[f"t{i}"]
        biases = biases.at[i, :].set(b_eff[0])
    bh1 = jnp.concatenate([params["bp1"], params["bd1"]], axis=1)     # (1,128)
    biases = biases.at[3, :128].set(bh1[0])
    biases = biases.at[4, :16].set(params["cb1"][0])
    biases = biases.at[5, :64].set(params["cb2"][0])
    bh2 = jnp.concatenate([params["bp2"], params["bd2"]], axis=1)     # (1,out_dim+1)
    biases = biases.at[6, :out_dim + 1].set(bh2[0])

    wh1 = jnp.concatenate([params["wp1"], params["wd1"]], axis=1)     # (512,128)

    return {"convw": convw.astype(bf16),
            "trunkw": trunk.astype(bf16),
            "wh1": wh1.astype(bf16),
            "biases": biases}


# -----------------------------------------------------------------------------
# Full forward: one fused pallas_call.
# -----------------------------------------------------------------------------
def my_model_forward(kparams, state, occ_grid, out_dim):
    B, _, H, W = occ_grid.shape
    Ho, Wo = H // 2, W // 2
    assert (Ho & (Ho - 1)) == 0 and (Wo & (Wo - 1)) == 0, "pooled dims must be pow2"
    S1 = Ho * Wo
    BS1 = B * S1
    state_dim = state.shape[1]
    half = out_dim // 2
    odp1 = out_dim + 1
    PAD = _round_up(Wo + 1, 16)                   # zero border rows of staging buffer
    log2_wo = Wo.bit_length() - 1

    cols1 = im2col_conv1_pooled(occ_grid).astype(jnp.bfloat16)   # (4*BS1, 9) glue
    state_b = state.astype(jnp.bfloat16)

    def kernel(state_ref, cols1_ref, convw_ref, biases_ref, trunkw_ref, wh1_ref,
               out_ref, pad_ref):
        f32, bf16 = jnp.float32, jnp.bfloat16

        # ---- Conv2d(1->16,3x3,pad=1) + ReLU + MaxPool2d(2,2): one flattened
        #      matmul, then an elementwise max over the 4 pool offsets.
        z = jnp.dot(cols1_ref[...], convw_ref[CW1_R0:CW1_R0 + 9, 0:16],
                    preferred_element_type=f32)                  # (4*BS1, 16)
        z = jnp.maximum(z + biases_ref[4:5, 0:16], 0.0)
        pooled = jnp.max(z.reshape(4, BS1, 16), axis=0)          # (BS1, 16)

        # ---- Conv2d(16->64,3x3,pad=1) + ReLU + AdaptiveAvgPool2d(1).
        #      Stage pooled rows in a flat 2D buffer (only the borders are
        #      zeroed), read 9 shifted row-slices, mask image boundaries with
        #      compile-time iota masks, and run ONE lane-dense K=144 matmul.
        pad_ref[0:PAD, :] = jnp.zeros((PAD, 16), f32)
        pad_ref[PAD + BS1:2 * PAD + BS1, :] = jnp.zeros((PAD, 16), f32)
        pad_ref[PAD:PAD + BS1, :] = pooled

        rows = jax.lax.broadcasted_iota(jnp.int32, (BS1, 16), 0)
        jj = rows & (Wo - 1)
        ii = (rows >> log2_wo) & (Ho - 1)
        taps = []
        for dy in range(3):
            for dx in range(3):
                off = (dy - 1) * Wo + (dx - 1)
                valid = ((ii + dy >= 1) & (ii + dy <= Ho) &
                         (jj + dx >= 1) & (jj + dx <= Wo))
                tap = pad_ref[PAD + off:PAD + off + BS1, :]
                taps.append(jnp.where(valid, tap, 0.0))
        cols2 = jnp.concatenate(taps, axis=1).astype(bf16)       # (BS1, 144)
        y2 = jnp.dot(cols2, convw_ref[CW2_R0:CW2_R0 + 144, :],
                     preferred_element_type=f32)
        y2 = jnp.maximum(y2 + biases_ref[5:6, 0:64], 0.0)        # (BS1, 64)
        feat = jnp.mean(y2.reshape(B, S1, 64), axis=1)           # (B, 64)

        # ---- MLP trunk: Linear -> (folded BatchNorm) -> ReLU, three times.
        #      Layer 0's weight rows are split state/feat = Linear(cat(state,feat)).
        h = (jnp.dot(state_ref[...], trunkw_ref[0:state_dim, :],
                     preferred_element_type=f32)
             + jnp.dot(feat.astype(bf16), trunkw_ref[FEAT_R0:FEAT_R0 + 64, :],
                       preferred_element_type=f32)
             + biases_ref[0:1, :])
        h = jnp.maximum(h, 0.0)
        h = jnp.dot(h.astype(bf16), trunkw_ref[W1_R0:W1_R0 + 512, :],
                    preferred_element_type=f32) + biases_ref[1:2, :]
        h = jnp.maximum(h, 0.0)
        h = jnp.dot(h.astype(bf16), trunkw_ref[W2_R0:W2_R0 + 512, :],
                    preferred_element_type=f32) + biases_ref[2:3, :]
        h = jnp.maximum(h, 0.0)

        # ---- Both heads: one lane-dense matmul for [param|dist] hidden, then
        #      one block-diagonal matmul producing [y_param | dist].
        hd = jnp.dot(h.astype(bf16), wh1_ref[...],
                     preferred_element_type=f32) + biases_ref[3:4, 0:128]
        hd = jnp.maximum(hd, 0.0)
        y = (jnp.dot(hd.astype(bf16), convw_ref[WH2_R0:WH2_R0 + 128, 0:odp1],
                     preferred_element_type=f32) + biases_ref[6:7, 0:odp1])

        # Columns [half, out_dim) hold the log-variance -> sigma = exp(0.5*lv).
        # exp is only evaluated on those columns (exp(0) elsewhere, no overflow).
        col = jax.lax.broadcasted_iota(jnp.int32, y.shape, 1)
        is_sigma = (col >= half) & (col < out_dim)
        expo = jnp.exp(jnp.where(is_sigma, 0.5 * y, 0.0))
        out_ref[...] = jnp.where(is_sigma, expo, y)

    args = (state_b, cols1, kparams["convw"], kparams["biases"],
            kparams["trunkw"], kparams["wh1"])

    out = pl.pallas_call(
        kernel,
        grid=(1,),
        in_specs=[_full_spec(a) for a in args],
        out_specs=pl.BlockSpec((B, odp1), lambda i: (0, 0)),
        out_shape=jax.ShapeDtypeStruct((B, odp1), jnp.float32),
        scratch_shapes=[pltpu.VMEM((BS1 + 2 * PAD, 16), jnp.float32)],
        compiler_params=pltpu.CompilerParams(
            dimension_semantics=("arbitrary",)),
    )(*args)

    mu = out[:, :half]
    sigma = out[:, half:out_dim]
    dist = out[:, out_dim:]
    return mu, sigma, dist


# -----------------------------------------------------------------------------
# Pure-JAX reference (same math & same bf16 dot operands, no Pallas).
# -----------------------------------------------------------------------------
def reference_forward(params, state, occ_grid):
    bf16, f32 = jnp.bfloat16, jnp.float32
    B, _, H, W = occ_grid.shape
    Ho, Wo = H // 2, W // 2
    out_dim = params["wp2"].shape[1]
    half = out_dim // 2

    def mm(a, w):
        return jnp.einsum("...k,kc->...c", a.astype(bf16), w.astype(bf16),
                          preferred_element_type=f32)

    cols1 = im2col_conv1_pooled(occ_grid)                                  # (4*B*S1, 9)
    z = jnp.maximum(mm(cols1, params["cw1"]) + params["cb1"], 0.0)
    pooled = jnp.max(z.reshape(4, B, Ho * Wo, 16), axis=0)                 # (B, S1, 16)

    cols2 = im2col_conv2(pooled, Ho, Wo)                                   # (B, S1, 144)
    y2 = jnp.maximum(mm(cols2, params["cw2"]) + params["cb2"], 0.0)
    feat = jnp.mean(y2, axis=1)                                            # (B, 64)

    h = jnp.concatenate([state, feat], axis=1)
    for i in range(3):
        w_eff = params[f"w{i}"] * params[f"s{i}"]                          # BN (inference)
        b_eff = params[f"b{i}"] * params[f"s{i}"] + params[f"t{i}"]
        h = jnp.maximum(mm(h, w_eff) + b_eff, 0.0)

    p = jnp.maximum(mm(h, params["wp1"]) + params["bp1"], 0.0)
    y = mm(p, params["wp2"]) + params["bp2"]
    d = jnp.maximum(mm(h, params["wd1"]) + params["bd1"], 0.0)
    dist = mm(d, params["wd2"]) + params["bd2"]
    return y[:, :half], jnp.exp(y[:, half:] * 0.5), dist


if __name__ == "__main__":
    state_dim, out_dim = 4, 8
    B, H, W = 2, 16, 16

    key = jax.random.PRNGKey(0)
    k_param, k_state, k_occ = jax.random.split(key, 3)
    params = init_params(k_param, state_dim, out_dim)
    state = jax.random.normal(k_state, (B, state_dim), jnp.float32)
    occ_grid = (jax.random.uniform(k_occ, (B, 1, H, W)) > 0.5).astype(jnp.float32)

    kparams = prepare_kernel_params(params, state_dim)

    fwd = jax.jit(my_model_forward, static_argnames="out_dim")
    mu, sigma, dist = jax.block_until_ready(
        fwd(kparams, state, occ_grid, out_dim=out_dim))

    assert mu.shape == (B, out_dim // 2)
    assert sigma.shape == (B, out_dim - out_dim // 2)
    assert dist.shape == (B, 1)

    rmu, rsigma, rdist = reference_forward(params, state, occ_grid)
    for got, ref in ((mu, rmu), (sigma, rsigma), (dist, rdist)):
        if not jnp.allclose(got, ref, rtol=1e-3, atol=1e-3):
            raise AssertionError("Pallas output mismatch vs JAX reference")

    print("KERNEL_OK")
</pallas_src>

<mosaic_0001>
module attributes {stable_mosaic.version = 11 : i64} {
  func.func @kernel(%arg0: i32, %arg1: memref<2x4xbf16, #tpu.memory_space<vmem>>, %arg2: memref<512x9xbf16, #tpu.memory_space<vmem>>, %arg3: memref<288x64xbf16, #tpu.memory_space<vmem>>, %arg4: memref<8x512xf32, #tpu.memory_space<vmem>>, %arg5: memref<1104x512xbf16, #tpu.memory_space<vmem>>, %arg6: memref<512x128xbf16, #tpu.memory_space<vmem>>, %arg7: memref<2x9xf32, #tpu.memory_space<vmem>>, %arg8: memref<160x16xf32, #tpu.memory_space<vmem>>) attributes {dimension_semantics = [#tpu.dimension_semantics<arbitrary>], iteration_bounds = array<i64: 1>, scalar_prefetch = 0 : i64, scratch_operands = 1 : i64, tpu.core_type = #tpu.core_type<tc>, window_params = [{pipeline_mode = #tpu.pipeline_mode<synchronous>, transform_indices = @transform_0, window_bounds = array<i64: 2, 4>}, {pipeline_mode = #tpu.pipeline_mode<synchronous>, transform_indices = @transform_1, window_bounds = array<i64: 512, 9>}, {pipeline_mode = #tpu.pipeline_mode<synchronous>, transform_indices = @transform_2, window_bounds = array<i64: 288, 64>}, {pipeline_mode = #tpu.pipeline_mode<synchronous>, transform_indices = @transform_3, window_bounds = array<i64: 8, 512>}, {pipeline_mode = #tpu.pipeline_mode<synchronous>, transform_indices = @transform_4, window_bounds = array<i64: 1104, 512>}, {pipeline_mode = #tpu.pipeline_mode<synchronous>, transform_indices = @transform_5, window_bounds = array<i64: 512, 128>}, {pipeline_mode = #tpu.pipeline_mode<synchronous>, transform_indices = @transform_6, window_bounds = array<i64: 2, 9>}]} {
    %c0 = arith.constant 0 : index
    %c0_0 = arith.constant 0 : index
    %0 = vector.load %arg2[%c0, %c0_0] : memref<512x9xbf16, #tpu.memory_space<vmem>>, vector<512x9xbf16>
    %c144 = arith.constant 144 : index
    %c0_1 = arith.constant 0 : index
    %1 = vector.load %arg3[%c144, %c0_1] : memref<288x64xbf16, #tpu.memory_space<vmem>>, vector<9x16xbf16>
    %cst = arith.constant dense<0.000000e+00> : vector<512x16xf32>
    %2 = tpu.matmul %0, %1, %cst {dimension_numbers = #tpu.dot_dimension_numbers<[1], [0], [0], [1], [0, 0, 1, 1], [], []>} : vector<512x9xbf16>, vector<9x16xbf16>, vector<512x16xf32> -> vector<512x16xf32>
    %c4 = arith.constant 4 : index
    %c0_2 = arith.constant 0 : index
    %3 = vector.load %arg4[%c4, %c0_2] : memref<8x512xf32, #tpu.memory_space<vmem>>, vector<1x16xf32>
    %4 = vector.broadcast %3 : vector<1x16xf32> to vector<512x16xf32>
    %5 = arith.addf %2, %4 : vector<512x16xf32>
    %cst_3 = arith.constant 0.000000e+00 : f32
    %6 = vector.broadcast %cst_3 : f32 to vector<512x16xf32>
    %7 = arith.maximumf %5, %6 : vector<512x16xf32>
    %8 = vector.shape_cast %7 : vector<512x16xf32> to vector<4x128x16xf32>
    %cst_4 = arith.constant dense<0xFF800000> : vector<128x16xf32>
    %9 = vector.multi_reduction <maximumf>, %8, %cst_4 [0] : vector<4x128x16xf32> to vector<128x16xf32>
    %cst_5 = arith.constant 0.000000e+00 : f32
    %10 = vector.broadcast %cst_5 : f32 to vector<16x16xf32>
    %c0_6 = arith.constant 0 : index
    %c0_7 = arith.constant 0 : index
    %11 = vector.load %arg8[%c0_6, %c0_7] : memref<160x16xf32, #tpu.memory_space<vmem>>, vector<16x16xf32>
    tpu.vector_store %arg8[%c0_6, %c0_7], %10 {strides = array<i32>} : memref<160x16xf32, #tpu.memory_space<vmem>>, vector<16x16xf32>,
    %cst_8 = arith.constant 0.000000e+00 : f32
    %12 = vector.broadcast %cst_8 : f32 to vector<16x16xf32>
    %c144_9 = arith.constant 144 : index
    %c0_10 = arith.constant 0 : index
    %13 = vector.load %arg8[%c144_9, %c0_10] : memref<160x16xf32, #tpu.memory_space<vmem>>, vector<16x16xf32>
    tpu.vector_store %arg8[%c144_9, %c0_10], %12 {strides = array<i32>} : memref<160x16xf32, #tpu.memory_space<vmem>>, vector<16x16xf32>,
    %c16 = arith.constant 16 : index
    %c0_11 = arith.constant 0 : index
    %14 = vector.load %arg8[%c16, %c0_11] : memref<160x16xf32, #tpu.memory_space<vmem>>, vector<128x16xf32>
    tpu.vector_store %arg8[%c16, %c0_11], %9 {strides = array<i32>} : memref<160x16xf32, #tpu.memory_space<vmem>>, vector<128x16xf32>,
    %15 = tpu.iota {dimensions = array<i32: 0>} : vector<128x16xi32>
    %c7_i32 = arith.constant 7 : i32
    %16 = vector.broadcast %c7_i32 : i32 to vector<128x16xi32>
    %17 = arith.andi %15, %16 : vector<128x16xi32>
    %c3_i32 = arith.constant 3 : i32
    %18 = vector.broadcast %c3_i32 : i32 to vector<128x16xi32>
    %19 = arith.shrsi %15, %18 : vector<128x16xi32>
    %c7_i32_12 = arith.constant 7 : i32
    %20 = vector.broadcast %c7_i32_12 : i32 to vector<128x16xi32>
    %21 = arith.andi %19, %20 : vector<128x16xi32>
    %c0_i32 = arith.constant 0 : i32
    %22 = vector.broadcast %c0_i32 : i32 to vector<128x16xi32>
    %23 = arith.addi %21, %22 : vector<128x16xi32>
    %c1_i32 = arith.constant 1 : i32
    %24 = vector.broadcast %c1_i32 : i32 to vector<128x16xi32>
    %25 = arith.cmpi sge, %23, %24 : vector<128x16xi32>
    %c0_i32_13 = arith.constant 0 : i32
    %26 = vector.broadcast %c0_i32_13 : i32 to vector<128x16xi32>
    %27 = arith.addi %21, %26 : vector<128x16xi32>
    %c8_i32 = arith.constant 8 : i32
    %28 = vector.broadcast %c8_i32 : i32 to vector<128x16xi32>
    %29 = arith.cmpi sle, %27, %28 : vector<128x16xi32>
    %30 = arith.andi %25, %29 : vector<128x16xi1>
    %c0_i32_14 = arith.constant 0 : i32
    %31 = vector.broadcast %c0_i32_14 : i32 to vector<128x16xi32>
    %32 = arith.addi %17, %31 : vector<128x16xi32>
    %c1_i32_15 = arith.constant 1 : i32
    %33 = vector.broadcast %c1_i32_15 : i32 to vector<128x16xi32>
    %34 = arith.cmpi sge, %32, %33 : vector<128x16xi32>
    %35 = arith.andi %30, %34 : vector<128x16xi1>
    %c0_i32_16 = arith.constant 0 : i32
    %36 = vector.broadcast %c0_i32_16 : i32 to vector<128x16xi32>
    %37 = arith.addi %17, %36 : vector<128x16xi32>
    %c8_i32_17 = arith.constant 8 : i32
    %38 = vector.broadcast %c8_i32_17 : i32 to vector<128x16xi32>
    %39 = arith.cmpi sle, %37, %38 : vector<128x16xi32>
    %40 = arith.andi %35, %39 : vector<128x16xi1>
    %c7 = arith.constant 7 : index
    %c0_18 = arith.constant 0 : index
    %41 = vector.load %arg8[%c7, %c0_18] : memref<160x16xf32, #tpu.memory_space<vmem>>, vector<128x16xf32>
    %cst_19 = arith.constant 0.000000e+00 : f32
    %42 = vector.broadcast %cst_19 : f32 to vector<128x16xf32>
    %43 = arith.select %40, %41, %42 : vector<128x16xi1>, vector<128x16xf32>
    %c0_i32_20 = arith.constant 0 : i32
    %44 = vector.broadcast %c0_i32_20 : i32 to vector<128x16xi32>
    %45 = arith.addi %21, %44 : vector<128x16xi32>
    %c1_i32_21 = arith.constant 1 : i32
    %46 = vector.broadcast %c1_i32_21 : i32 to vector<128x16xi32>
    %47 = arith.cmpi sge, %45, %46 : vector<128x16xi32>
    %c0_i32_22 = arith.constant 0 : i32
    %48 = vector.broadcast %c0_i32_22 : i32 to vector<128x16xi32>
    %49 = arith.addi %21, %48 : vector<128x16xi32>
    %c8_i32_23 = arith.constant 8 : i32
    %50 = vector.broadcast %c8_i32_23 : i32 to vector<128x16xi32>
    %51 = arith.cmpi sle, %49, %50 : vector<128x16xi32>
    %52 = arith.andi %47, %51 : vector<128x16xi1>
    %c1_i32_24 = arith.constant 1 : i32
    %53 = vector.broadcast %c1_i32_24 : i32 to vector<128x16xi32>
    %54 = arith.addi %17, %53 : vector<128x16xi32>
    %c1_i32_25 = arith.constant 1 : i32
    %55 = vector.broadcast %c1_i32_25 : i32 to vector<128x16xi32>
    %56 = arith.cmpi sge, %54, %55 : vector<128x16xi32>
    %57 = arith.andi %52, %56 : vector<128x16xi1>
    %c1_i32_26 = arith.constant 1 : i32
    %58 = vector.broadcast %c1_i32_26 : i32 to vector<128x16xi32>
    %59 = arith.addi %17, %58 : vector<128x16xi32>
    %c8_i32_27 = arith.constant 8 : i32
    %60 = vector.broadcast %c8_i32_27 : i32 to vector<128x16xi32>
    %61 = arith.cmpi sle, %59, %60 : vector<128x16xi32>
    %62 = arith.andi %57, %61 : vector<128x16xi1>
    %c8 = arith.constant 8 : index
    %c0_28 = arith.constant 0 : index
    %63 = vector.load %arg8[%c8, %c0_28] : memref<160x16xf32, #tpu.memory_space<vmem>>, vector<128x16xf32>
    %cst_29 = arith.constant 0.000000e+00 : f32
    %64 = vector.broadcast %cst_29 : f32 to vector<128x16xf32>
    %65 = arith.select %62, %63, %64 : vector<128x16xi1>, vector<128x16xf32>
    %c0_i32_30 = arith.constant 0 : i32
    %66 = vector.broadcast %c0_i32_30 : i32 to vector<128x16xi32>
    %67 = arith.addi %21, %66 : vector<128x16xi32>
    %c1_i32_31 = arith.constant 1 : i32
    %68 = vector.broadcast %c1_i32_31 : i32 to vector<128x16xi32>
    %69 = arith.cmpi sge, %67, %68 : vector<128x16xi32>
    %c0_i32_32 = arith.constant 0 : i32
    %70 = vector.broadcast %c0_i32_32 : i32 to vector<128x16xi32>
    %71 = arith.addi %21, %70 : vector<128x16xi32>
    %c8_i32_33 = arith.constant 8 : i32
    %72 = vector.broadcast %c8_i32_33 : i32 to vector<128x16xi32>
    %73 = arith.cmpi sle, %71, %72 : vector<128x16xi32>
    %74 = arith.andi %69, %73 : vector<128x16xi1>
    %c2_i32 = arith.constant 2 : i32
    %75 = vector.broadcast %c2_i32 : i32 to vector<128x16xi32>
    %76 = arith.addi %17, %75 : vector<128x16xi32>
    %c1_i32_34 = arith.constant 1 : i32
    %77 = vector.broadcast %c1_i32_34 : i32 to vector<128x16xi32>
    %78 = arith.cmpi sge, %76, %77 : vector<128x16xi32>
    %79 = arith.andi %74, %78 : vector<128x16xi1>
    %c2_i32_35 = arith.constant 2 : i32
    %80 = vector.broadcast %c2_i32_35 : i32 to vector<128x16xi32>
    %81 = arith.addi %17, %80 : vector<128x16xi32>
    %c8_i32_36 = arith.constant 8 : i32
    %82 = vector.broadcast %c8_i32_36 : i32 to vector<128x16xi32>
    %83 = arith.cmpi sle, %81, %82 : vector<128x16xi32>
    %84 = arith.andi %79, %83 : vector<128x16xi1>
    %c9 = arith.constant 9 : index
    %c0_37 = arith.constant 0 : index
    %85 = vector.load %arg8[%c9, %c0_37] : memref<160x16xf32, #tpu.memory_space<vmem>>, vector<128x16xf32>
    %cst_38 = arith.constant 0.000000e+00 : f32
    %86 = vector.broadcast %cst_38 : f32 to vector<128x16xf32>
    %87 = arith.select %84, %85, %86 : vector<128x16xi1>, vector<128x16xf32>
    %c1_i32_39 = arith.constant 1 : i32
    %88 = vector.broadcast %c1_i32_39 : i32 to vector<128x16xi32>
    %89 = arith.addi %21, %88 : vector<128x16xi32>
    %c1_i32_40 = arith.constant 1 : i32
    %90 = vector.broadcast %c1_i32_40 : i32 to vector<128x16xi32>
    %91 = arith.cmpi sge, %89, %90 : vector<128x16xi32>
    %c1_i32_41 = arith.constant 1 : i32
    %92 = vector.broadcast %c1_i32_41 : i32 to vector<128x16xi32>
    %93 = arith.addi %21, %92 : vector<128x16xi32>
    %c8_i32_42 = arith.constant 8 : i32
    %94 = vector.broadcast %c8_i32_42 : i32 to vector<128x16xi32>
    %95 = arith.cmpi sle, %93, %94 : vector<128x16xi32>
    %96 = arith.andi %91, %95 : vector<128x16xi1>
    %c0_i32_43 = arith.constant 0 : i32
    %97 = vector.broadcast %c0_i32_43 : i32 to vector<128x16xi32>
    %98 = arith.addi %17, %97 : vector<128x16xi32>
    %c1_i32_44 = arith.constant 1 : i32
    %99 = vector.broadcast %c1_i32_44 : i32 to vector<128x16xi32>
    %100 = arith.cmpi sge, %98, %99 : vector<128x16xi32>
    %101 = arith.andi %96, %100 : vector<128x16xi1>
    %c0_i32_45 = arith.constant 0 : i32
    %102 = vector.broadcast %c0_i32_45 : i32 to vector<128x16xi32>
    %103 = arith.addi %17, %102 : vector<128x16xi32>
    %c8_i32_46 = arith.constant 8 : i32
    %104 = vector.broadcast %c8_i32_46 : i32 to vector<128x16xi32>
    %105 = arith.cmpi sle, %103, %104 : vector<128x16xi32>
    %106 = arith.andi %101, %105 : vector<128x16xi1>
    %c15 = arith.constant 15 : index
    %c0_47 = arith.constant 0 : index
    %107 = vector.load %arg8[%c15, %c0_47] : memref<160x16xf32, #tpu.memory_space<vmem>>, vector<128x16xf32>
    %cst_48 = arith.constant 0.000000e+00 : f32
    %108 = vector.broadcast %cst_48 : f32 to vector<128x16xf32>
    %109 = arith.select %106, %107, %108 : vector<128x16xi1>, vector<128x16xf32>
    %c1_i32_49 = arith.constant 1 : i32
    %110 = vector.broadcast %c1_i32_49 : i32 to vector<128x16xi32>
    %111 = arith.addi %21, %110 : vector<128x16xi32>
    %c1_i32_50 = arith.constant 1 : i32
    %112 = vector.broadcast %c1_i32_50 : i32 to vector<128x16xi32>
    %113 = arith.cmpi sge, %111, %112 : vector<128x16xi32>
    %c1_i32_51 = arith.constant 1 : i32
    %114 = vector.broadcast %c1_i32_51 : i32 to vector<128x16xi32>
    %115 = arith.addi %21, %114 : vector<128x16xi32>
    %c8_i32_52 = arith.constant 8 : i32
    %116 = vector.broadcast %c8_i32_52 : i32 to vector<128x16xi32>
    %117 = arith.cmpi sle, %115, %116 : vector<128x16xi32>
    %118 = arith.andi %113, %117 : vector<128x16xi1>
    %c1_i32_53 = arith.constant 1 : i32
    %119 = vector.broadcast %c1_i32_53 : i32 to vector<128x16xi32>
    %120 = arith.addi %17, %119 : vector<128x16xi32>
    %c1_i32_54 = arith.constant 1 : i32
    %121 = vector.broadcast %c1_i32_54 : i32 to vector<128x16xi32>
    %122 = arith.cmpi sge, %120, %121 : vector<128x16xi32>
    %123 = arith.andi %118, %122 : vector<128x16xi1>
    %c1_i32_55 = arith.constant 1 : i32
    %124 = vector.broadcast %c1_i32_55 : i32 to vector<128x16xi32>
    %125 = arith.addi %17, %124 : vector<128x16xi32>
    %c8_i32_56 = arith.constant 8 : i32
    %126 = vector.broadcast %c8_i32_56 : i32 to vector<128x16xi32>
    %127 = arith.cmpi sle, %125, %126 : vector<128x16xi32>
    %128 = arith.andi %123, %127 : vector<128x16xi1>
    %c16_57 = arith.constant 16 : index
    %c0_58 = arith.constant 0 : index
    %129 = vector.load %arg8[%c16_57, %c0_58] : memref<160x16xf32, #tpu.memory_space<vmem>>, vector<128x16xf32>
    %cst_59 = arith.constant 0.000000e+00 : f32
    %130 = vector.broadcast %cst_59 : f32 to vector<128x16xf32>
    %131 = arith.select %128, %129, %130 : vector<128x16xi1>, vector<128x16xf32>
    %c1_i32_60 = arith.constant 1 : i32
    %132 = vector.broadcast %c1_i32_60 : i32 to vector<128x16xi32>
    %133 = arith.addi %21, %132 : vector<128x16xi32>
    %c1_i32_61 = arith.constant 1 : i32
    %134 = vector.broadcast %c1_i32_61 : i32 to vector<128x16xi32>
    %135 = arith.cmpi sge, %133, %134 : vector<128x16xi32>
    %c1_i32_62 = arith.constant 1 : i32
    %136 = vector.broadcast %c1_i32_62 : i32 to vector<128x16xi32>
    %137 = arith.addi %21, %136 : vector<128x16xi32>
    %c8_i32_63 = arith.constant 8 : i32
    %138 = vector.broadcast %c8_i32_63 : i32 to vector<128x16xi32>
    %139 = arith.cmpi sle, %137, %138 : vector<128x16xi32>
    %140 = arith.andi %135, %139 : vector<128x16xi1>
    %c2_i32_64 = arith.constant 2 : i32
    %141 = vector.broadcast %c2_i32_64 : i32 to vector<128x16xi32>
    %142 = arith.addi %17, %141 : vector<128x16xi32>
    %c1_i32_65 = arith.constant 1 : i32
    %143 = vector.broadcast %c1_i32_65 : i32 to vector<128x16xi32>
    %144 = arith.cmpi sge, %142, %143 : vector<128x16xi32>
    %145 = arith.andi %140, %144 : vector<128x16xi1>
    %c2_i32_66 = arith.constant 2 : i32
    %146 = vector.broadcast %c2_i32_66 : i32 to vector<128x16xi32>
    %147 = arith.addi %17, %146 : vector<128x16xi32>
    %c8_i32_67 = arith.constant 8 : i32
    %148 = vector.broadcast %c8_i32_67 : i32 to vector<128x16xi32>
    %149 = arith.cmpi sle, %147, %148 : vector<128x16xi32>
    %150 = arith.andi %145, %149 : vector<128x16xi1>
    %c17 = arith.constant 17 : index
    %c0_68 = arith.constant 0 : index
    %151 = vector.load %arg8[%c17, %c0_68] : memref<160x16xf32, #tpu.memory_space<vmem>>, vector<128x16xf32>
    %cst_69 = arith.constant 0.000000e+00 : f32
    %152 = vector.broadcast %cst_69 : f32 to vector<128x16xf32>
    %153 = arith.select %150, %151, %152 : vector<128x16xi1>, vector<128x16xf32>
    %c2_i32_70 = arith.constant 2 : i32
    %154 = vector.broadcast %c2_i32_70 : i32 to vector<128x16xi32>
    %155 = arith.addi %21, %154 : vector<128x16xi32>
    %c1_i32_71 = arith.constant 1 : i32
    %156 = vector.broadcast %c1_i32_71 : i32 to vector<128x16xi32>
    %157 = arith.cmpi sge, %155, %156 : vector<128x16xi32>
    %c2_i32_72 = arith.constant 2 : i32
    %158 = vector.broadcast %c2_i32_72 : i32 to vector<128x16xi32>
    %159 = arith.addi %21, %158 : vector<128x16xi32>
    %c8_i32_73 = arith.constant 8 : i32
    %160 = vector.broadcast %c8_i32_73 : i32 to vector<128x16xi32>
    %161 = arith.cmpi sle, %159, %160 : vector<128x16xi32>
    %162 = arith.andi %157, %161 : vector<128x16xi1>
    %c0_i32_74 = arith.constant 0 : i32
    %163 = vector.broadcast %c0_i32_74 : i32 to vector<128x16xi32>
    %164 = arith.addi %17, %163 : vector<128x16xi32>
    %c1_i32_75 = arith.constant 1 : i32
    %165 = vector.broadcast %c1_i32_75 : i32 to vector<128x16xi32>
    %166 = arith.cmpi sge, %164, %165 : vector<128x16xi32>
    %167 = arith.andi %162, %166 : vector<128x16xi1>
    %c0_i32_76 = arith.constant 0 : i32
    %168 = vector.broadcast %c0_i32_76 : i32 to vector<128x16xi32>
    %169 = arith.addi %17, %168 : vector<128x16xi32>
    %c8_i32_77 = arith.constant 8 : i32
    %170 = vector.broadcast %c8_i32_77 : i32 to vector<128x16xi32>
    %171 = arith.cmpi sle, %169, %170 : vector<128x16xi32>
    %172 = arith.andi %167, %171 : vector<128x16xi1>
    %c23 = arith.constant 23 : index
    %c0_78 = arith.constant 0 : index
    %173 = vector.load %arg8[%c23, %c0_78] : memref<160x16xf32, #tpu.memory_space<vmem>>, vector<128x16xf32>
    %cst_79 = arith.constant 0.000000e+00 : f32
    %174 = vector.broadcast %cst_79 : f32 to vector<128x16xf32>
    %175 = arith.select %172, %173, %174 : vector<128x16xi1>, vector<128x16xf32>
    %c2_i32_80 = arith.constant 2 : i32
    %176 = vector.broadcast %c2_i32_80 : i32 to vector<128x16xi32>
    %177 = arith.addi %21, %176 : vector<128x16xi32>
    %c1_i32_81 = arith.constant 1 : i32
    %178 = vector.broadcast %c1_i32_81 : i32 to vector<128x16xi32>
    %179 = arith.cmpi sge, %177, %178 : vector<128x16xi32>
    %c2_i32_82 = arith.constant 2 : i32
    %180 = vector.broadcast %c2_i32_82 : i32 to vector<128x16xi32>
    %181 = arith.addi %21, %180 : vector<128x16xi32>
    %c8_i32_83 = arith.constant 8 : i32
    %182 = vector.broadcast %c8_i32_83 : i32 to vector<128x16xi32>
    %183 = arith.cmpi sle, %181, %182 : vector<128x16xi32>
    %184 = arith.andi %179, %183 : vector<128x16xi1>
    %c1_i32_84 = arith.constant 1 : i32
    %185 = vector.broadcast %c1_i32_84 : i32 to vector<128x16xi32>
    %186 = arith.addi %17, %185 : vector<128x16xi32>
    %c1_i32_85 = arith.constant 1 : i32
    %187 = vector.broadcast %c1_i32_85 : i32 to vector<128x16xi32>
    %188 = arith.cmpi sge, %186, %187 : vector<128x16xi32>
    %189 = arith.andi %184, %188 : vector<128x16xi1>
    %c1_i32_86 = arith.constant 1 : i32
    %190 = vector.broadcast %c1_i32_86 : i32 to vector<128x16xi32>
    %191 = arith.addi %17, %190 : vector<128x16xi32>
    %c8_i32_87 = arith.constant 8 : i32
    %192 = vector.broadcast %c8_i32_87 : i32 to vector<128x16xi32>
    %193 = arith.cmpi sle, %191, %192 : vector<128x16xi32>
    %194 = arith.andi %189, %193 : vector<128x16xi1>
    %c24 = arith.constant 24 : index
    %c0_88 = arith.constant 0 : index
    %195 = vector.load %arg8[%c24, %c0_88] : memref<160x16xf32, #tpu.memory_space<vmem>>, vector<128x16xf32>
    %cst_89 = arith.constant 0.000000e+00 : f32
    %196 = vector.broadcast %cst_89 : f32 to vector<128x16xf32>
    %197 = arith.select %194, %195, %196 : vector<128x16xi1>, vector<128x16xf32>
    %c2_i32_90 = arith.constant 2 : i32
    %198 = vector.broadcast %c2_i32_90 : i32 to vector<128x16xi32>
    %199 = arith.addi %21, %198 : vector<128x16xi32>
    %c1_i32_91 = arith.constant 1 : i32
    %200 = vector.broadcast %c1_i32_91 : i32 to vector<128x16xi32>
    %201 = arith.cmpi sge, %199, %200 : vector<128x16xi32>
    %c2_i32_92 = arith.constant 2 : i32
    %202 = vector.broadcast %c2_i32_92 : i32 to vector<128x16xi32>
    %203 = arith.addi %21, %202 : vector<128x16xi32>
    %c8_i32_93 = arith.constant 8 : i32
    %204 = vector.broadcast %c8_i32_93 : i32 to vector<128x16xi32>
    %205 = arith.cmpi sle, %203, %204 : vector<128x16xi32>
    %206 = arith.andi %201, %205 : vector<128x16xi1>
    %c2_i32_94 = arith.constant 2 : i32
    %207 = vector.broadcast %c2_i32_94 : i32 to vector<128x16xi32>
    %208 = arith.addi %17, %207 : vector<128x16xi32>
    %c1_i32_95 = arith.constant 1 : i32
    %209 = vector.broadcast %c1_i32_95 : i32 to vector<128x16xi32>
    %210 = arith.cmpi sge, %208, %209 : vector<128x16xi32>
    %211 = arith.andi %206, %210 : vector<128x16xi1>
    %c2_i32_96 = arith.constant 2 : i32
    %212 = vector.broadcast %c2_i32_96 : i32 to vector<128x16xi32>
    %213 = arith.addi %17, %212 : vector<128x16xi32>
    %c8_i32_97 = arith.constant 8 : i32
    %214 = vector.broadcast %c8_i32_97 : i32 to vector<128x16xi32>
    %215 = arith.cmpi sle, %213, %214 : vector<128x16xi32>
    %216 = arith.andi %211, %215 : vector<128x16xi1>
    %c25 = arith.constant 25 : index
    %c0_98 = arith.constant 0 : index
    %217 = vector.load %arg8[%c25, %c0_98] : memref<160x16xf32, #tpu.memory_space<vmem>>, vector<128x16xf32>
    %cst_99 = arith.constant 0.000000e+00 : f32
    %218 = vector.broadcast %cst_99 : f32 to vector<128x16xf32>
    %219 = arith.select %216, %217, %218 : vector<128x16xi1>, vector<128x16xf32>
    %220 = tpu.concatenate %43, %65, %87, %109, %131, %153, %175, %197, %219 in 1 : vector<128x16xf32>, vector<128x16xf32>, vector<128x16xf32>, vector<128x16xf32>, vector<128x16xf32>, vector<128x16xf32>, vector<128x16xf32>, vector<128x16xf32>, vector<128x16xf32> -> vector<128x144xf32>
    %221 = arith.truncf %220 : vector<128x144xf32> to vector<128x144xbf16>
    %c0_100 = arith.constant 0 : index
    %c0_101 = arith.constant 0 : index
    %222 = vector.load %arg3[%c0_100, %c0_101] : memref<288x64xbf16, #tpu.memory_space<vmem>>, vector<144x64xbf16>
    %cst_102 = arith.constant dense<0.000000e+00> : vector<128x64xf32>
    %223 = tpu.matmul %221, %222, %cst_102 {dimension_numbers = #tpu.dot_dimension_numbers<[1], [0], [0], [1], [0, 0, 1, 1], [], []>} : vector<128x144xbf16>, vector<144x64xbf16>, vector<128x64xf32> -> vector<128x64xf32>
    %c5 = arith.constant 5 : index
    %c0_103 = arith.constant 0 : index
    %224 = vector.load %arg4[%c5, %c0_103] : memref<8x512xf32, #tpu.memory_space<vmem>>, vector<1x64xf32>
    %225 = vector.broadcast %224 : vector<1x64xf32> to vector<128x64xf32>
    %226 = arith.addf %223, %225 : vector<128x64xf32>
    %cst_104 = arith.constant 0.000000e+00 : f32
    %227 = vector.broadcast %cst_104 : f32 to vector<128x64xf32>
    %228 = arith.maximumf %226, %227 : vector<128x64xf32>
    %229 = vector.shape_cast %228 : vector<128x64xf32> to vector<2x64x64xf32>
    %cst_105 = arith.constant dense<0.000000e+00> : vector<2x64xf32>
    %230 = vector.multi_reduction <add>, %229, %cst_105 [1] : vector<2x64x64xf32> to vector<2x64xf32>
    %cst_106 = arith.constant 6.400000e+01 : f32
    %231 = vector.broadcast %cst_106 : f32 to vector<2x64xf32>
    %232 = arith.divf %230, %231 : vector<2x64xf32>
    %c0_107 = arith.constant 0 : index
    %c0_108 = arith.constant 0 : index
    %233 = vector.load %arg1[%c0_107, %c0_108] : memref<2x4xbf16, #tpu.memory_space<vmem>>, vector<2x4xbf16>
    %c0_109 = arith.constant 0 : index
    %c0_110 = arith.constant 0 : index
    %234 = vector.load %arg5[%c0_109, %c0_110] : memref<1104x512xbf16, #tpu.memory_space<vmem>>, vector<4x512xbf16>
    %cst_111 = arith.constant dense<0.000000e+00> : vector<2x512xf32>
    %235 = tpu.matmul %233, %234, %cst_111 {dimension_numbers = #tpu.dot_dimension_numbers<[1], [0], [0], [1], [0, 0, 1, 1], [], []>} : vector<2x4xbf16>, vector<4x512xbf16>, vector<2x512xf32> -> vector<2x512xf32>
    %236 = arith.truncf %232 : vector<2x64xf32> to vector<2x64xbf16>
    %c16_112 = arith.constant 16 : index
    %c0_113 = arith.constant 0 : index
    %237 = vector.load %arg5[%c16_112, %c0_113] : memref<1104x512xbf16, #tpu.memory_space<vmem>>, vector<64x512xbf16>
    %cst_114 = arith.constant dense<0.000000e+00> : vector<2x512xf32>
    %238 = tpu.matmul %236, %237, %cst_114 {dimension_numbers = #tpu.dot_dimension_numbers<[1], [0], [0], [1], [0, 0, 1, 1], [], []>} : vector<2x64xbf16>, vector<64x512xbf16>, vector<2x512xf32> -> vector<2x512xf32>
    %239 = arith.addf %235, %238 : vector<2x512xf32>
    %c0_115 = arith.constant 0 : index
    %c0_116 = arith.constant 0 : index
    %240 = vector.load %arg4[%c0_115, %c0_116] : memref<8x512xf32, #tpu.memory_space<vmem>>, vector<1x512xf32>
    %241 = vector.broadcast %240 : vector<1x512xf32> to vector<2x512xf32>
    %242 = arith.addf %239, %241 : vector<2x512xf32>
    %cst_117 = arith.constant 0.000000e+00 : f32
    %243 = vector.broadcast %cst_117 : f32 to vector<2x512xf32>
    %244 = arith.maximumf %242, %243 : vector<2x512xf32>
    %245 = arith.truncf %244 : vector<2x512xf32> to vector<2x512xbf16>
    %c80 = arith.constant 80 : index
    %c0_118 = arith.constant 0 : index
    %246 = vector.load %arg5[%c80, %c0_118] : memref<1104x512xbf16, #tpu.memory_space<vmem>>, vector<512x512xbf16>
    %cst_119 = arith.constant dense<0.000000e+00> : vector<2x512xf32>
    %247 = tpu.matmul %245, %246, %cst_119 {dimension_numbers = #tpu.dot_dimension_numbers<[1], [0], [0], [1], [0, 0, 1, 1], [], []>} : vector<2x512xbf16>, vector<512x512xbf16>, vector<2x512xf32> -> vector<2x512xf32>
    %c1 = arith.constant 1 : index
    %c0_120 = arith.constant 0 : index
    %248 = vector.load %arg4[%c1, %c0_120] : memref<8x512xf32, #tpu.memory_space<vmem>>, vector<1x512xf32>
    %249 = vector.broadcast %248 : vector<1x512xf32> to vector<2x512xf32>
    %250 = arith.addf %247, %249 : vector<2x512xf32>
    %cst_121 = arith.constant 0.000000e+00 : f32
    %251 = vector.broadcast %cst_121 : f32 to vector<2x512xf32>
    %252 = arith.maximumf %250, %251 : vector<2x512xf32>
    %253 = arith.truncf %252 : vector<2x512xf32> to vector<2x512xbf16>
    %c592 = arith.constant 592 : index
    %c0_122 = arith.constant 0 : index
    %254 = vector.load %arg5[%c592, %c0_122] : memref<1104x512xbf16, #tpu.memory_space<vmem>>, vector<512x512xbf16>
    %cst_123 = arith.constant dense<0.000000e+00> : vector<2x512xf32>
    %255 = tpu.matmul %253, %254, %cst_123 {dimension_numbers = #tpu.dot_dimension_numbers<[1], [0], [0], [1], [0, 0, 1, 1], [], []>} : vector<2x512xbf16>, vector<512x512xbf16>, vector<2x512xf32> -> vector<2x512xf32>
    %c2 = arith.constant 2 : index
    %c0_124 = arith.constant 0 : index
    %256 = vector.load %arg4[%c2, %c0_124] : memref<8x512xf32, #tpu.memory_space<vmem>>, vector<1x512xf32>
    %257 = vector.broadcast %256 : vector<1x512xf32> to vector<2x512xf32>
    %258 = arith.addf %255, %257 : vector<2x512xf32>
    %cst_125 = arith.constant 0.000000e+00 : f32
    %259 = vector.broadcast %cst_125 : f32 to vector<2x512xf32>
    %260 = arith.maximumf %258, %259 : vector<2x512xf32>
    %261 = arith.truncf %260 : vector<2x512xf32> to vector<2x512xbf16>
    %c0_126 = arith.constant 0 : index
    %c0_127 = arith.constant 0 : index
    %262 = vector.load %arg6[%c0_126, %c0_127] : memref<512x128xbf16, #tpu.memory_space<vmem>>, vector<512x128xbf16>
    %cst_128 = arith.constant dense<0.000000e+00> : vector<2x128xf32>
    %263 = tpu.matmul %261, %262, %cst_128 {dimension_numbers = #tpu.dot_dimension_numbers<[1], [0], [0], [1], [0, 0, 1, 1], [], []>} : vector<2x512xbf16>, vector<512x128xbf16>, vector<2x128xf32> -> vector<2x128xf32>
    %c3 = arith.constant 3 : index
    %c0_129 = arith.constant 0 : index
    %264 = vector.load %arg4[%c3, %c0_129] : memref<8x512xf32, #tpu.memory_space<vmem>>, vector<1x128xf32>
    %265 = vector.broadcast %264 : vector<1x128xf32> to vector<2x128xf32>
    %266 = arith.addf %263, %265 : vector<2x128xf32>
    %cst_130 = arith.constant 0.000000e+00 : f32
    %267 = vector.broadcast %cst_130 : f32 to vector<2x128xf32>
    %268 = arith.maximumf %266, %267 : vector<2x128xf32>
    %269 = arith.truncf %268 : vector<2x128xf32> to vector<2x128xbf16>
    %c160 = arith.constant 160 : index
    %c0_131 = arith.constant 0 : index
    %270 = vector.load %arg3[%c160, %c0_131] : memref<288x64xbf16, #tpu.memory_space<vmem>>, vector<128x9xbf16>
    %cst_132 = arith.constant dense<0.000000e+00> : vector<2x9xf32>
    %271 = tpu.matmul %269, %270, %cst_132 {dimension_numbers = #tpu.dot_dimension_numbers<[1], [0], [0], [1], [0, 0, 1, 1], [], []>} : vector<2x128xbf16>, vector<128x9xbf16>, vector<2x9xf32> -> vector<2x9xf32>
    %c6 = arith.constant 6 : index
    %c0_133 = arith.constant 0 : index
    %272 = vector.load %arg4[%c6, %c0_133] : memref<8x512xf32, #tpu.memory_space<vmem>>, vector<1x9xf32>
    %273 = vector.broadcast %272 : vector<1x9xf32> to vector<2x9xf32>
    %274 = arith.addf %271, %273 : vector<2x9xf32>
    %275 = tpu.iota {dimensions = array<i32: 1>} : vector<2x9xi32>
    %c4_i32 = arith.constant 4 : i32
    %276 = vector.broadcast %c4_i32 : i32 to vector<2x9xi32>
    %277 = arith.cmpi sge, %275, %276 : vector<2x9xi32>
    %c8_i32_134 = arith.constant 8 : i32
    %278 = vector.broadcast %c8_i32_134 : i32 to vector<2x9xi32>
    %279 = arith.cmpi slt, %275, %278 : vector<2x9xi32>
    %280 = arith.andi %277, %279 : vector<2x9xi1>
    %cst_135 = arith.constant 5.000000e-01 : f32
    %281 = vector.broadcast %cst_135 : f32 to vector<2x9xf32>
    %282 = arith.mulf %281, %274 : vector<2x9xf32>
    %cst_136 = arith.constant 0.000000e+00 : f32
    %283 = vector.broadcast %cst_136 : f32 to vector<2x9xf32>
    %284 = arith.select %280, %282, %283 : vector<2x9xi1>, vector<2x9xf32>
    %285 = math.exp %284 : vector<2x9xf32>
    %286 = arith.select %280, %285, %274 : vector<2x9xi1>, vector<2x9xf32>
    %c0_137 = arith.constant 0 : index
    %c0_138 = arith.constant 0 : index
    %287 = vector.load %arg7[%c0_137, %c0_138] : memref<2x9xf32, #tpu.memory_space<vmem>>, vector<2x9xf32>
    tpu.vector_store %arg7[%c0_137, %c0_138], %286 {strides = array<i32>} : memref<2x9xf32, #tpu.memory_space<vmem>>, vector<2x9xf32>,
    return
  }
  func.func @transform_0(%arg0: i32) -> (i32, i32) {
    %c0_i32 = arith.constant 0 : i32
    %c0_i32_0 = arith.constant 0 : i32
    %c0_i32_1 = arith.constant 0 : i32
    return %c0_i32, %c0_i32_0 : i32, i32
  }
  func.func @transform_1(%arg0: i32) -> (i32, i32) {
    %c0_i32 = arith.constant 0 : i32
    %c0_i32_0 = arith.constant 0 : i32
    %c0_i32_1 = arith.constant 0 : i32
    return %c0_i32, %c0_i32_0 : i32, i32
  }
  func.func @transform_2(%arg0: i32) -> (i32, i32) {
    %c0_i32 = arith.constant 0 : i32
    %c0_i32_0 = arith.constant 0 : i32
    %c0_i32_1 = arith.constant 0 : i32
    return %c0_i32, %c0_i32_0 : i32, i32
  }
  func.func @transform_3(%arg0: i32) -> (i32, i32) {
    %c0_i32 = arith.constant 0 : i32
    %c0_i32_0 = arith.constant 0 : i32
    %c0_i32_1 = arith.constant 0 : i32
    return %c0_i32, %c0_i32_0 : i32, i32
  }
  func.func @transform_4(%arg0: i32) -> (i32, i32) {
    %c0_i32 = arith.constant 0 : i32
    %c0_i32_0 = arith.constant 0 : i32
    %c0_i32_1 = arith.constant 0 : i32
    return %c0_i32, %c0_i32_0 : i32, i32
  }
  func.func @transform_5(%arg0: i32) -> (i32, i32) {
    %c0_i32 = arith.constant 0 : i32
    %c0_i32_0 = arith.constant 0 : i32
    %c0_i32_1 = arith.constant 0 : i32
    return %c0_i32, %c0_i32_0 : i32, i32
  }
  func.func @transform_6(%arg0: i32) -> (i32, i32) {
    %c0_i32 = arith.constant 0 : i32
    %c0_i32_0 = arith.constant 0 : i32
    %c0_i32_1 = arith.constant 0 : i32
    return %c0_i32, %c0_i32_0 : i32, i32
  }
}

</mosaic_0001>

<llo_original>
// kernel: my_model_forward.1
$region0: #{my_model_forward.1}
  #allocation0 [shape = 'u32[]', space=smem, size = 0x4, offset = 0x4, fixed_abs, tag = 'smem constant byte address 0x4 - core index']
  #allocation1 [shape = 'u32[72,128]{1,0:T(1,128)}', space=vmem, size = 0x9000, scoped, tag = 'internal scratch']
  #allocation2 [shape = 'f32[160,16]{1,0:T(8,128)}', space=vmem, size = 0x14000, scoped, tag = 'scratch operand']
  %s0 = inlined_call_operand.vmem [shape: bf16[2,4], index: 0, kind: input, shape index: {}]
  %s1 = inlined_call_operand.vmem [shape: bf16[512,9], index: 1, kind: input, shape index: {}]
  %s2 = inlined_call_operand.vmem [shape: bf16[288,64], index: 2, kind: input, shape index: {}]
  %s3 = inlined_call_operand.hbm [shape: f32[8,512], index: 3, kind: input, shape index: {}]
  %s4 = inlined_call_operand.hbm [shape: bf16[1104,512], index: 4, kind: input, shape index: {}]
  %s5 = inlined_call_operand.hbm [shape: bf16[512,128], index: 5, kind: input, shape index: {}]
  %s6 = inlined_call_operand.vmem [shape: f32[2,9], index: 6, kind: output, shape index: {}]
  %s7 = sld [smem:[#allocation0]]
  $region46: #{my_model_forward.1} parent=0
    _
  %s9 = ssub.s32 1, %s7
  %s10 = scalar_select 0, %s9, %s7
  $region1: #{my_model_forward.1} parent=0
    #allocation3 [shape = 'u8[16384]{0}', space=vmem, size = 0x4000, scoped, tag = 'input window, operand 3, single buffered']
    #allocation4 [shape = 's32[1]{0}', space=sflag, size = 0x4, scoped, tag = 'scoped memory for my_model_forward.1']
    #allocation5 [shape = 'u8[1130496]{0}', space=vmem, size = 0x114000, scoped, tag = 'input window, operand 4, single buffered']
    #allocation6 [shape = 's32[1]{0}', space=sflag, size = 0x4, scoped, tag = 'scoped memory for my_model_forward.1']
    #allocation7 [shape = 'u8[131072]{0}', space=vmem, size = 0x20000, scoped, tag = 'input window, operand 5, single buffered']
    %11 = vsyncpa [#allocation4], 0
    %12 = vsyncpa [#allocation6], 0
    // Predicated region
    $region2: #{my_model_forward.1} parent=1 // pred_check
      _
    $region3: #{my_model_forward.1} parent=1 // pred_check_branch
      %14 = sbr.rel (0) target = $region5
    $region4: #{my_model_forward.1} parent=1 // pred_region
      _
    $region5: #{my_model_forward.1} parent=1 // pred_fallthru
      _
    // Predicated region
    $region6: #{my_model_forward.1} parent=1 // pred_check
      _
    $region7: #{my_model_forward.1} parent=1 // pred_check_branch
      %16 = sbr.rel (0) target = $region9
    $region8: #{my_model_forward.1} parent=1 // pred_region
      _
    $region9: #{my_model_forward.1} parent=1 // pred_fallthru
      _
    // Predicated region
    $region10: #{my_model_forward.1} parent=1 // pred_check
      _
    $region11: #{my_model_forward.1} parent=1 // pred_check_branch
      %18 = sbr.rel (0) target = $region13
    $region12: #{my_model_forward.1} parent=1 // pred_region
      _
    $region13: #{my_model_forward.1} parent=1 // pred_fallthru
      _
    // Predicated region
    $region14: #{my_model_forward.1} parent=1 // pred_check
      _
    $region15: #{my_model_forward.1} parent=1 // pred_check_branch
      %20 = sbr.rel (0) target = $region17
    $region16: #{my_model_forward.1} parent=1 // pred_region
      %22 = vsyncadd [#allocation4], 0
      %s24 = sshll.u32 %s3, 4
      %s25 = int_to_ptr.hbm [resolvable:$true] %s24
      %s26 = sshll.u32 [#allocation3], 4
      %s27 = int_to_ptr.vmem [resolvable:$true] %s26
      %29 = dma.hbm_to_vmem [thread:$0]  %s25, 512, %s27, [#allocation4]
    $region17: #{my_model_forward.1} parent=1 // pred_fallthru
      _
    // Predicated region
    $region18: #{my_model_forward.1} parent=1 // pred_check
      _
    $region19: #{my_model_forward.1} parent=1 // pred_check_branch
      %31 = sbr.rel (0) target = $region21
    $region20: #{my_model_forward.1} parent=1 // pred_region
      %33 = vsyncadd [#allocation6], 0
      %s34 = sshll.u32 %s4, 4
      %s35 = int_to_ptr.hbm [resolvable:$true] %s34
      %s36 = sshll.u32 [#allocation5], 4
      %s37 = int_to_ptr.vmem [resolvable:$true] %s36
      %42 = dma.hbm_to_vmem [thread:$0]  %s35, 35328, %s37, [#allocation6], 256, 256, 16
    $region21: #{my_model_forward.1} parent=1 // pred_fallthru
      _
    // Predicated region
    $region22: #{my_model_forward.1} parent=1 // pred_check
      _
    $region23: #{my_model_forward.1} parent=1 // pred_check_branch
      %44 = sbr.rel (0) target = $region25
    $region24: #{my_model_forward.1} parent=1 // pred_region
      %46 = vsyncadd [#allocation6], 0
      %s47 = sshll.u32 %s5, 4
      %s48 = int_to_ptr.hbm [resolvable:$true] %s47
      %s49 = sshll.u32 [#allocation7], 4
      %s50 = int_to_ptr.vmem [resolvable:$true] %s49
      %55 = dma.hbm_to_vmem [thread:$0]  %s48, 4096, %s50, [#allocation6], 64, 64, 4
    $region25: #{my_model_forward.1} parent=1 // pred_fallthru
      _
    // Predicated region
    $region26: #{my_model_forward.1} parent=1 // pred_check
      _
    $region27: #{my_model_forward.1} parent=1 // pred_check_branch
      %57 = sbr.rel (0) target = $region29
    $region28: #{my_model_forward.1} parent=1 // pred_region
      %59 = dma.done [#allocation4], 512
    $region29: #{my_model_forward.1} parent=1 // pred_fallthru
      _
    // Predicated region
    $region30: #{my_model_forward.1} parent=1 // pred_check
      _
    $region31: #{my_model_forward.1} parent=1 // pred_check_branch
      %61 = sbr.rel (0) target = $region33
    $region32: #{my_model_forward.1} parent=1 // pred_region
      %63 = dma.done [#allocation6], 35328
    $region33: #{my_model_forward.1} parent=1 // pred_fallthru
      _
    // Predicated region
    $region34: #{my_model_forward.1} parent=1 // pred_check
      _
    $region35: #{my_model_forward.1} parent=1 // pred_check_branch
      %65 = sbr.rel (0) target = $region37
    $region36: #{my_model_forward.1} parent=1 // pred_region
      %67 = dma.done [#allocation6], 4096
    $region37: #{my_model_forward.1} parent=1 // pred_fallthru
      _
    %v69 = vld [vmem:[%s1] sm:$0xf]
    %v70 = vld [vmem:[%s1 + $0x4] sm:$0xf]
    %v71 = vld [vmem:[%s1 + $0x8] sm:$0xf]
    %v72 = vld [vmem:[%s1 + $0xc] sm:$0xf]
    %v73 = vld [vmem:[%s1 + $0x10] sm:$0xf]
    %v74 = vld [vmem:[%s1 + $0x14] sm:$0xf]
    %v75 = vld [vmem:[%s1 + $0x18] sm:$0xf]
    %v76 = vld [vmem:[%s1 + $0x1c] sm:$0xf]
    %v77 = vld [vmem:[%s1 + $0x20] sm:$0xf]
    %v78 = vld [vmem:[%s1 + $0x24] sm:$0xf]
    %v79 = vld [vmem:[%s1 + $0x28] sm:$0xf]
    %v80 = vld [vmem:[%s1 + $0x2c] sm:$0xf]
    %v81 = vld [vmem:[%s1 + $0x30] sm:$0xf]
    %v82 = vld [vmem:[%s1 + $0x34] sm:$0xf]
    %v83 = vld [vmem:[%s1 + $0x38] sm:$0xf]
    %v84 = vld [vmem:[%s1 + $0x3c] sm:$0xf]
    %v85 = vld [vmem:[%s1 + $0x40] sm:$0xf]
    %v86 = vld [vmem:[%s1 + $0x44] sm:$0xf]
    %v87 = vld [vmem:[%s1 + $0x48] sm:$0xf]
    %v88 = vld [vmem:[%s1 + $0x4c] sm:$0xf]
    %v89 = vld [vmem:[%s1 + $0x50] sm:$0xf]
    %v90 = vld [vmem:[%s1 + $0x54] sm:$0xf]
    %v91 = vld [vmem:[%s1 + $0x58] sm:$0xf]
    %v92 = vld [vmem:[%s1 + $0x5c] sm:$0xf]
    %v93 = vld [vmem:[%s1 + $0x60] sm:$0xf]
    %v94 = vld [vmem:[%s1 + $0x64] sm:$0xf]
    %v95 = vld [vmem:[%s1 + $0x68] sm:$0xf]
    %v96 = vld [vmem:[%s1 + $0x6c] sm:$0xf]
    %v97 = vld [vmem:[%s1 + $0x70] sm:$0xf]
    %v98 = vld [vmem:[%s1 + $0x74] sm:$0xf]
    %v99 = vld [vmem:[%s1 + $0x78] sm:$0xf]
    %v100 = vld [vmem:[%s1 + $0x7c] sm:$0xf]
    %v101 = vld [vmem:[%s1 + $0x80] sm:$0xf]
    %v102 = vld [vmem:[%s1 + $0x84] sm:$0xf]
    %v103 = vld [vmem:[%s1 + $0x88] sm:$0xf]
    %v104 = vld [vmem:[%s1 + $0x8c] sm:$0xf]
    %v105 = vld [vmem:[%s1 + $0x90] sm:$0xf]
    %v106 = vld [vmem:[%s1 + $0x94] sm:$0xf]
    %v107 = vld [vmem:[%s1 + $0x98] sm:$0xf]
    %v108 = vld [vmem:[%s1 + $0x9c] sm:$0xf]
    %v109 = vld [vmem:[%s1 + $0xa0] sm:$0xf]
    %v110 = vld [vmem:[%s1 + $0xa4] sm:$0xf]
    %v111 = vld [vmem:[%s1 + $0xa8] sm:$0xf]
    %v112 = vld [vmem:[%s1 + $0xac] sm:$0xf]
    %v113 = vld [vmem:[%s1 + $0xb0] sm:$0xf]
    %v114 = vld [vmem:[%s1 + $0xb4] sm:$0xf]
    %v115 = vld [vmem:[%s1 + $0xb8] sm:$0xf]
    %v116 = vld [vmem:[%s1 + $0xbc] sm:$0xf]
    %v117 = vld [vmem:[%s1 + $0xc0] sm:$0xf]
    %v118 = vld [vmem:[%s1 + $0xc4] sm:$0xf]
    %v119 = vld [vmem:[%s1 + $0xc8] sm:$0xf]
    %v120 = vld [vmem:[%s1 + $0xcc] sm:$0xf]
    %v121 = vld [vmem:[%s1 + $0xd0] sm:$0xf]
    %v122 = vld [vmem:[%s1 + $0xd4] sm:$0xf]
    %v123 = vld [vmem:[%s1 + $0xd8] sm:$0xf]
    %v124 = vld [vmem:[%s1 + $0xdc] sm:$0xf]
    %v125 = vld [vmem:[%s1 + $0xe0] sm:$0xf]
    %v126 = vld [vmem:[%s1 + $0xe4] sm:$0xf]
    %v127 = vld [vmem:[%s1 + $0xe8] sm:$0xf]
    %v128 = vld [vmem:[%s1 + $0xec] sm:$0xf]
    %v129 = vld [vmem:[%s1 + $0xf0] sm:$0xf]
    %v130 = vld [vmem:[%s1 + $0xf4] sm:$0xf]
    %v131 = vld [vmem:[%s1 + $0xf8] sm:$0xf]
    %v132 = vld [vmem:[%s1 + $0xfc] sm:$0xf]
    %v133 = vld [vmem:[%s2 + $0x48] sm:$0xf]
    %v134 = vld [vmem:[%s2 + $0x4c] sm:$0x1]
    %v135 = vld [vmem:[#allocation3 + $0x4] ss:$0 sm:$0xff]
    %v200 = vunpack.c.l.b16 %v69
    %v201 = vunpack.c.l.b16 %v70
    %v202 = vunpack.c.l.b16 %v71
    %v203 = vunpack.c.l.b16 %v72
    %v204 = vunpack.c.l.b16 %v73
    %v205 = vunpack.c.l.b16 %v74
    %v206 = vunpack.c.l.b16 %v75
    %v207 = vunpack.c.l.b16 %v76
    %v208 = vunpack.c.l.b16 %v77
    %v209 = vunpack.c.l.b16 %v78
    %v210 = vunpack.c.l.b16 %v79
    %v211 = vunpack.c.l.b16 %v80
    %v212 = vunpack.c.l.b16 %v81
    %v213 = vunpack.c.l.b16 %v82
    %v214 = vunpack.c.l.b16 %v83
    %v215 = vunpack.c.l.b16 %v84
    %v216 = vunpack.c.l.b16 %v85
    %v217 = vunpack.c.l.b16 %v86
    %v218 = vunpack.c.l.b16 %v87
    %v219 = vunpack.c.l.b16 %v88
    %v220 = vunpack.c.l.b16 %v89
    %v221 = vunpack.c.l.b16 %v90
    %v222 = vunpack.c.l.b16 %v91
    %v223 = vunpack.c.l.b16 %v92
    %v224 = vunpack.c.l.b16 %v93
    %v225 = vunpack.c.l.b16 %v94
    %v226 = vunpack.c.l.b16 %v95
    %v227 = vunpack.c.l.b16 %v96
    %v228 = vunpack.c.l.b16 %v97
    %v229 = vunpack.c.l.b16 %v98
    %v230 = vunpack.c.l.b16 %v99
    %v231 = vunpack.c.l.b16 %v100
    %v232 = vunpack.c.l.b16 %v101
    %v233 = vunpack.c.l.b16 %v102
    %v234 = vunpack.c.l.b16 %v103
    %v235 = vunpack.c.l.b16 %v104
    %v236 = vunpack.c.l.b16 %v105
    %v237 = vunpack.c.l.b16 %v106
    %v238 = vunpack.c.l.b16 %v107
    %v239 = vunpack.c.l.b16 %v108
    %v240 = vunpack.c.l.b16 %v109
    %v241 = vunpack.c.l.b16 %v110
    %v242 = vunpack.c.l.b16 %v111
    %v243 = vunpack.c.l.b16 %v112
    %v244 = vunpack.c.l.b16 %v113
    %v245 = vunpack.c.l.b16 %v114
    %v246 = vunpack.c.l.b16 %v115
    %v247 = vunpack.c.l.b16 %v116
    %v248 = vunpack.c.l.b16 %v117
    %v249 = vunpack.c.l.b16 %v118
    %v250 = vunpack.c.l.b16 %v119
    %v251 = vunpack.c.l.b16 %v120
    %v252 = vunpack.c.l.b16 %v121
    %v253 = vunpack.c.l.b16 %v122
    %v254 = vunpack.c.l.b16 %v123
    %v255 = vunpack.c.l.b16 %v124
    %v256 = vunpack.c.l.b16 %v125
    %v257 = vunpack.c.l.b16 %v126
    %v258 = vunpack.c.l.b16 %v127
    %v259 = vunpack.c.l.b16 %v128
    %v260 = vunpack.c.l.b16 %v129
    %v261 = vunpack.c.l.b16 %v130
    %v262 = vunpack.c.l.b16 %v131
    %v263 = vunpack.c.l.b16 %v132
    %v264 = vpack.c.b16 %v201, %v200
    %v265 = vpack.c.b16 %v203, %v202
    %v266 = vpack.c.b16 %v205, %v204
    %v267 = vpack.c.b16 %v207, %v206
    %v268 = vpack.c.b16 %v209, %v208
    %v269 = vpack.c.b16 %v211, %v210
    %v270 = vpack.c.b16 %v213, %v212
    %v271 = vpack.c.b16 %v215, %v214
    %v272 = vpack.c.b16 %v217, %v216
    %v273 = vpack.c.b16 %v219, %v218
    %v274 = vpack.c.b16 %v221, %v220
    %v275 = vpack.c.b16 %v223, %v222
    %v276 = vpack.c.b16 %v225, %v224
    %v277 = vpack.c.b16 %v227, %v226
    %v278 = vpack.c.b16 %v229, %v228
    %v279 = vpack.c.b16 %v231, %v230
    %v280 = vpack.c.b16 %v233, %v232
    %v281 = vpack.c.b16 %v235, %v234
    %v282 = vpack.c.b16 %v237, %v236
    %v283 = vpack.c.b16 %v239, %v238
    %v284 = vpack.c.b16 %v241, %v240
    %v285 = vpack.c.b16 %v243, %v242
    %v286 = vpack.c.b16 %v245, %v244
    %v287 = vpack.c.b16 %v247, %v246
    %v288 = vpack.c.b16 %v249, %v248
    %v289 = vpack.c.b16 %v251, %v250
    %v290 = vpack.c.b16 %v253, %v252
    %v291 = vpack.c.b16 %v255, %v254
    %v292 = vpack.c.b16 %v257, %v256
    %v293 = vpack.c.b16 %v259, %v258
    %v294 = vpack.c.b16 %v261, %v260
    %v295 = vpack.c.b16 %v263, %v262
    %v298 = vunpack.c.l.b16 %v133
    %v299 = vunpack.c.l.b16 %v134
    %v300 = vpack.c.b16 %v299, %v298
    %vm301 = vcmask 72704
    %v303 = vsel %vm301, %v264, 0
    %v306 = vsel %vm301, %v265, 0
    %v309 = vsel %vm301, %v266, 0
    %v312 = vsel %vm301, %v267, 0
    %v315 = vsel %vm301, %v268, 0
    %v318 = vsel %vm301, %v269, 0
    %v321 = vsel %vm301, %v270, 0
    %v324 = vsel %vm301, %v271, 0
    %v327 = vsel %vm301, %v272, 0
    %v330 = vsel %vm301, %v273, 0
    %v333 = vsel %vm301, %v274, 0
    %v336 = vsel %vm301, %v275, 0
    %v339 = vsel %vm301, %v276, 0
    %v342 = vsel %vm301, %v277, 0
    %v345 = vsel %vm301, %v278, 0
    %v348 = vsel %vm301, %v279, 0
    %v351 = vsel %vm301, %v280, 0
    %v354 = vsel %vm301, %v281, 0
    %v357 = vsel %vm301, %v282, 0
    %v360 = vsel %vm301, %v283, 0
    %v363 = vsel %vm301, %v284, 0
    %v366 = vsel %vm301, %v285, 0
    %v369 = vsel %vm301, %v286, 0
    %v372 = vsel %vm301, %v287, 0
    %v375 = vsel %vm301, %v288, 0
    %v378 = vsel %vm301, %v289, 0
    %v381 = vsel %vm301, %v290, 0
    %v384 = vsel %vm301, %v291, 0
    %v387 = vsel %vm301, %v292, 0
    %v390 = vsel %vm301, %v293, 0
    %v393 = vsel %vm301, %v294, 0
    %v396 = vsel %vm301, %v295, 0
    %vm398 = vcmask 1043456
    %vm399 = vcmask 1044480
    %v400 = vsel %vm398, 4294967295, 65535
    %v401 = vsel %vm399, %v400, 0
    %v403 = vand.u32 %v300, %v401
    %405 = vmatpush.bf16.msra.mxu0 0
    %406 = vmatpush.bf16.msra.mxu0 0
    %407 = vmatpush.bf16.msra.mxu0 0
    %408 = vmatpush.bf16.msra.mxu0 0
    %409 = vmatpush.bf16.msra.mxu0 0
    %410 = vmatpush.bf16.msra.mxu0 0
    %411 = vmatpush.bf16.msra.mxu0 0
    %412 = vmatpush.bf16.msra.mxu0 %v403
    %413 = vmatmul.bf16.gmra.mxu0 %v303
    %v414 = vpop.f32.mrf.mxu0
    %v415 = vadd.f32 %v135, %v414
    %v416 = vpop.f32.mrf.mxu0
    %v417 = vadd.f32 %v135, %v416
    %418 = vmatmul.bf16.gmra.mxu0 %v306
    %v419 = vpop.f32.mrf.mxu0
    %v420 = vadd.f32 %v135, %v419
    %v421 = vpop.f32.mrf.mxu0
    %v422 = vadd.f32 %v135, %v421
    %423 = vmatmul.bf16.gmra.mxu0 %v309
    %v424 = vpop.f32.mrf.mxu0
    %v425 = vadd.f32 %v135, %v424
    %v426 = vpop.f32.mrf.mxu0
    %v427 = vadd.f32 %v135, %v426
    %428 = vmatmul.bf16.gmra.mxu0 %v312
    %v429 = vpop.f32.mrf.mxu0
    %v430 = vadd.f32 %v135, %v429
    %v431 = vpop.f32.mrf.mxu0
    %v432 = vadd.f32 %v135, %v431
    %433 = vmatmul.bf16.gmra.mxu0 %v315
    %v434 = vpop.f32.mrf.mxu0
    %v435 = vadd.f32 %v135, %v434
    %v436 = vpop.f32.mrf.mxu0
    %v437 = vadd.f32 %v135, %v436
    %438 = vmatmul.bf16.gmra.mxu0 %v318
    %v439 = vpop.f32.mrf.mxu0
    %v440 = vadd.f32 %v135, %v439
    %v441 = vpop.f32.mrf.mxu0
    %v442 = vadd.f32 %v135, %v441
    %443 = vmatmul.bf16.gmra.mxu0 %v321
    %v444 = vpop.f32.mrf.mxu0
    %v445 = vadd.f32 %v135, %v444
    %v446 = vpop.f32.mrf.mxu0
    %v447 = vadd.f32 %v135, %v446
    %448 = vmatmul.bf16.gmra.mxu0 %v324
    %v449 = vpop.f32.mrf.mxu0
    %v450 = vadd.f32 %v135, %v449
    %v451 = vpop.f32.mrf.mxu0
    %v452 = vadd.f32 %v135, %v451
    %453 = vmatmul.bf16.gmra.mxu0 %v327
    %v454 = vpop.f32.mrf.mxu0
    %v455 = vadd.f32 %v135, %v454
    %v456 = vpop.f32.mrf.mxu0
    %v457 = vadd.f32 %v135, %v456
    %458 = vmatmul.bf16.gmra.mxu0 %v330
    %v459 = vpop.f32.mrf.mxu0
    %v460 = vadd.f32 %v135, %v459
    %v461 = vpop.f32.mrf.mxu0
    %v462 = vadd.f32 %v135, %v461
    %463 = vmatmul.bf16.gmra.mxu0 %v333
    %v464 = vpop.f32.mrf.mxu0
    %v465 = vadd.f32 %v135, %v464
    %v466 = vpop.f32.mrf.mxu0
    %v467 = vadd.f32 %v135, %v466
    %468 = vmatmul.bf16.gmra.mxu0 %v336
    %v469 = vpop.f32.mrf.mxu0
    %v470 = vadd.f32 %v135, %v469
    %v471 = vpop.f32.mrf.mxu0
    %v472 = vadd.f32 %v135, %v471
    %473 = vmatmul.bf16.gmra.mxu0 %v339
    %v474 = vpop.f32.mrf.mxu0
    %v475 = vadd.f32 %v135, %v474
    %v476 = vpop.f32.mrf.mxu0
    %v477 = vadd.f32 %v135, %v476
    %478 = vmatmul.bf16.gmra.mxu0 %v342
    %v479 = vpop.f32.mrf.mxu0
    %v480 = vadd.f32 %v135, %v479
    %v481 = vpop.f32.mrf.mxu0
    %v482 = vadd.f32 %v135, %v481
    %483 = vmatmul.bf16.gmra.mxu0 %v345
    %v484 = vpop.f32.mrf.mxu0
    %v485 = vadd.f32 %v135, %v484
    %v486 = vpop.f32.mrf.mxu0
    %v487 = vadd.f32 %v135, %v486
    %488 = vmatmul.bf16.gmra.mxu0 %v348
    %v489 = vpop.f32.mrf.mxu0
    %v490 = vadd.f32 %v135, %v489
    %v491 = vpop.f32.mrf.mxu0
    %v492 = vadd.f32 %v135, %v491
    %493 = vmatmul.bf16.gmra.mxu0 %v351
    %v494 = vpop.f32.mrf.mxu0
    %v495 = vadd.f32 %v135, %v494
    %v496 = vpop.f32.mrf.mxu0
    %v497 = vadd.f32 %v135, %v496
    %498 = vmatmul.bf16.gmra.mxu0 %v354
    %v499 = vpop.f32.mrf.mxu0
    %v500 = vadd.f32 %v135, %v499
    %v501 = vpop.f32.mrf.mxu0
    %v502 = vadd.f32 %v135, %v501
    %503 = vmatmul.bf16.gmra.mxu0 %v357
    %v504 = vpop.f32.mrf.mxu0
    %v505 = vadd.f32 %v135, %v504
    %v506 = vpop.f32.mrf.mxu0
    %v507 = vadd.f32 %v135, %v506
    %508 = vmatmul.bf16.gmra.mxu0 %v360
    %v509 = vpop.f32.mrf.mxu0
    %v510 = vadd.f32 %v135, %v509
    %v511 = vpop.f32.mrf.mxu0
    %v512 = vadd.f32 %v135, %v511
    %513 = vmatmul.bf16.gmra.mxu0 %v363
    %v514 = vpop.f32.mrf.mxu0
    %v515 = vadd.f32 %v135, %v514
    %v516 = vpop.f32.mrf.mxu0
    %v517 = vadd.f32 %v135, %v516
    %518 = vmatmul.bf16.gmra.mxu0 %v366
    %v519 = vpop.f32.mrf.mxu0
    %v520 = vadd.f32 %v135, %v519
    %v521 = vpop.f32.mrf.mxu0
    %v522 = vadd.f32 %v135, %v521
    %523 = vmatmul.bf16.gmra.mxu0 %v369
    %v524 = vpop.f32.mrf.mxu0
    %v525 = vadd.f32 %v135, %v524
    %v526 = vpop.f32.mrf.mxu0
    %v527 = vadd.f32 %v135, %v526
    %528 = vmatmul.bf16.gmra.mxu0 %v372
    %v529 = vpop.f32.mrf.mxu0
    %v530 = vadd.f32 %v135, %v529
    %v531 = vpop.f32.mrf.mxu0
    %v532 = vadd.f32 %v135, %v531
    %533 = vmatmul.bf16.gmra.mxu0 %v375
    %v534 = vpop.f32.mrf.mxu0
    %v535 = vadd.f32 %v135, %v534
    %v536 = vpop.f32.mrf.mxu0
    %v537 = vadd.f32 %v135, %v536
    %538 = vmatmul.bf16.gmra.mxu0 %v378
    %v539 = vpop.f32.mrf.mxu0
    %v540 = vadd.f32 %v135, %v539
    %v541 = vpop.f32.mrf.mxu0
    %v542 = vadd.f32 %v135, %v541
    %543 = vmatmul.bf16.gmra.mxu0 %v381
    %v544 = vpop.f32.mrf.mxu0
    %v545 = vadd.f32 %v135, %v544
    %v546 = vpop.f32.mrf.mxu0
    %v547 = vadd.f32 %v135, %v546
    %548 = vmatmul.bf16.gmra.mxu0 %v384
    %v549 = vpop.f32.mrf.mxu0
    %v550 = vadd.f32 %v135, %v549
    %v551 = vpop.f32.mrf.mxu0
    %v552 = vadd.f32 %v135, %v551
    %553 = vmatmul.bf16.gmra.mxu0 %v387
    %v554 = vpop.f32.mrf.mxu0
    %v555 = vadd.f32 %v135, %v554
    %v556 = vpop.f32.mrf.mxu0
    %v557 = vadd.f32 %v135, %v556
    %558 = vmatmul.bf16.gmra.mxu0 %v390
    %v559 = vpop.f32.mrf.mxu0
    %v560 = vadd.f32 %v135, %v559
    %v561 = vpop.f32.mrf.mxu0
    %v562 = vadd.f32 %v135, %v561
    %563 = vmatmul.bf16.gmra.mxu0 %v393
    %v564 = vpop.f32.mrf.mxu0
    %v565 = vadd.f32 %v135, %v564
    %v566 = vpop.f32.mrf.mxu0
    %v567 = vadd.f32 %v135, %v566
    %568 = vmatmul.bf16.gmra.mxu0 %v396
    %v569 = vpop.f32.mrf.mxu0
    %v570 = vadd.f32 %v135, %v569
    %v571 = vpop.f32.mrf.mxu0
    %v572 = vadd.f32 %v135, %v571
    %573 = vdwg.mxu0
    %v574 = vmax.f32 %v415, 0.0
    %v575 = vmax.f32 %v417, 0.0
    %v576 = vmax.f32 %v420, 0.0
    %v577 = vmax.f32 %v422, 0.0
    %v578 = vmax.f32 %v425, 0.0
    %v579 = vmax.f32 %v427, 0.0
    %v580 = vmax.f32 %v430, 0.0
    %v581 = vmax.f32 %v432, 0.0
    %v582 = vmax.f32 %v435, 0.0
    %v583 = vmax.f32 %v437, 0.0
    %v584 = vmax.f32 %v440, 0.0
    %v585 = vmax.f32 %v442, 0.0
    %v586 = vmax.f32 %v445, 0.0
    %v587 = vmax.f32 %v447, 0.0
    %v588 = vmax.f32 %v450, 0.0
    %v589 = vmax.f32 %v452, 0.0
    %v590 = vmax.f32 %v455, 0.0
    %v591 = vmax.f32 %v457, 0.0
    %v592 = vmax.f32 %v460, 0.0
    %v593 = vmax.f32 %v462, 0.0
    %v594 = vmax.f32 %v465, 0.0
    %v595 = vmax.f32 %v467, 0.0
    %v596 = vmax.f32 %v470, 0.0
    %v597 = vmax.f32 %v472, 0.0
    %v598 = vmax.f32 %v475, 0.0
    %v599 = vmax.f32 %v477, 0.0
    %v600 = vmax.f32 %v480, 0.0
    %v601 = vmax.f32 %v482, 0.0
    %v602 = vmax.f32 %v485, 0.0
    %v603 = vmax.f32 %v487, 0.0
    %v604 = vmax.f32 %v490, 0.0
    %v605 = vmax.f32 %v492, 0.0
    %v606 = vmax.f32 %v495, 0.0
    %v607 = vmax.f32 %v497, 0.0
    %v608 = vmax.f32 %v500, 0.0
    %v609 = vmax.f32 %v502, 0.0
    %v610 = vmax.f32 %v505, 0.0
    %v611 = vmax.f32 %v507, 0.0
    %v612 = vmax.f32 %v510, 0.0
    %v613 = vmax.f32 %v512, 0.0
    %v614 = vmax.f32 %v515, 0.0
    %v615 = vmax.f32 %v517, 0.0
    %v616 = vmax.f32 %v520, 0.0
    %v617 = vmax.f32 %v522, 0.0
    %v618 = vmax.f32 %v525, 0.0
    %v619 = vmax.f32 %v527, 0.0
    %v620 = vmax.f32 %v530, 0.0
    %v621 = vmax.f32 %v532, 0.0
    %v622 = vmax.f32 %v535, 0.0
    %v623 = vmax.f32 %v537, 0.0
    %v624 = vmax.f32 %v540, 0.0
    %v625 = vmax.f32 %v542, 0.0
    %v626 = vmax.f32 %v545, 0.0
    %v627 = vmax.f32 %v547, 0.0
    %v628 = vmax.f32 %v550, 0.0
    %v629 = vmax.f32 %v552, 0.0
    %v630 = vmax.f32 %v555, 0.0
    %v631 = vmax.f32 %v557, 0.0
    %v632 = vmax.f32 %v560, 0.0
    %v633 = vmax.f32 %v562, 0.0
    %v634 = vmax.f32 %v565, 0.0
    %v635 = vmax.f32 %v567, 0.0
    %v636 = vmax.f32 %v570, 0.0
    %v637 = vmax.f32 %v572, 0.0
    %vm638 = vcmask 130048
    %v639 = vsel %vm638, %v574, -inf
    %v640 = vsel %vm638, %v590, -inf
    %v641 = vmax.f32 %v639, %v640
    %v642 = vsel %vm638, %v606, -inf
    %v643 = vmax.f32 %v641, %v642
    %v644 = vsel %vm638, %v622, -inf
    %v645 = vmax.f32 %v643, %v644
    %v646 = vsel %vm638, %v575, -inf
    %v647 = vsel %vm638, %v591, -inf
    %v648 = vmax.f32 %v646, %v647
    %v649 = vsel %vm638, %v607, -inf
    %v650 = vmax.f32 %v648, %v649
    %v651 = vsel %vm638, %v623, -inf
    %v652 = vmax.f32 %v650, %v651
    %v653 = vsel %vm638, %v576, -inf
    %v654 = vsel %vm638, %v592, -inf
    %v655 = vmax.f32 %v653, %v654
    %v656 = vsel %vm638, %v608, -inf
    %v657 = vmax.f32 %v655, %v656
    %v658 = vsel %vm638, %v624, -inf
    %v659 = vmax.f32 %v657, %v658
    %v660 = vsel %vm638, %v577, -inf
    %v661 = vsel %vm638, %v593, -inf
    %v662 = vmax.f32 %v660, %v661
    %v663 = vsel %vm638, %v609, -inf
    %v664 = vmax.f32 %v662, %v663
    %v665 = vsel %vm638, %v625, -inf
    %v666 = vmax.f32 %v664, %v665
    %v667 = vsel %vm638, %v578, -inf
    %v668 = vsel %vm638, %v594, -inf
    %v669 = vmax.f32 %v667, %v668
    %v670 = vsel %vm638, %v610, -inf
    %v671 = vmax.f32 %v669, %v670
    %v672 = vsel %vm638, %v626, -inf
    %v673 = vmax.f32 %v671, %v672
    %v674 = vsel %vm638, %v579, -inf
    %v675 = vsel %vm638, %v595, -inf
    %v676 = vmax.f32 %v674, %v675
    %v677 = vsel %vm638, %v611, -inf
    %v678 = vmax.f32 %v676, %v677
    %v679 = vsel %vm638, %v627, -inf
    %v680 = vmax.f32 %v678, %v679
    %v681 = vsel %vm638, %v580, -inf
    %v682 = vsel %vm638, %v596, -inf
    %v683 = vmax.f32 %v681, %v682
    %v684 = vsel %vm638, %v612, -inf
    %v685 = vmax.f32 %v683, %v684
    %v686 = vsel %vm638, %v628, -inf
    %v687 = vmax.f32 %v685, %v686
    %v688 = vsel %vm638, %v581, -inf
    %v689 = vsel %vm638, %v597, -inf
    %v690 = vmax.f32 %v688, %v689
    %v691 = vsel %vm638, %v613, -inf
    %v692 = vmax.f32 %v690, %v691
    %v693 = vsel %vm638, %v629, -inf
    %v694 = vmax.f32 %v692, %v693
    %v695 = vsel %vm638, %v582, -inf
    %v696 = vsel %vm638, %v598, -inf
    %v697 = vmax.f32 %v695, %v696
    %v698 = vsel %vm638, %v614, -inf
    %v699 = vmax.f32 %v697, %v698
    %v700 = vsel %vm638, %v630, -inf
    %v701 = vmax.f32 %v699, %v700
    %v702 = vsel %vm638, %v583, -inf
    %v703 = vsel %vm638, %v599, -inf
    %v704 = vmax.f32 %v702, %v703
    %v705 = vsel %vm638, %v615, -inf
    %v706 = vmax.f32 %v704, %v705
    %v707 = vsel %vm638, %v631, -inf
    %v708 = vmax.f32 %v706, %v707
    %v709 = vsel %vm638, %v584, -inf
    %v710 = vsel %vm638, %v600, -inf
    %v711 = vmax.f32 %v709, %v710
    %v712 = vsel %vm638, %v616, -inf
    %v713 = vmax.f32 %v711, %v712
    %v714 = vsel %vm638, %v632, -inf
    %v715 = vmax.f32 %v713, %v714
    %v716 = vsel %vm638, %v585, -inf
    %v717 = vsel %vm638, %v601, -inf
    %v718 = vmax.f32 %v716, %v717
    %v719 = vsel %vm638, %v617, -inf
    %v720 = vmax.f32 %v718, %v719
    %v721 = vsel %vm638, %v633, -inf
    %v722 = vmax.f32 %v720, %v721
    %v723 = vsel %vm638, %v586, -inf
    %v724 = vsel %vm638, %v602, -inf
    %v725 = vmax.f32 %v723, %v724
    %v726 = vsel %vm638, %v618, -inf
    %v727 = vmax.f32 %v725, %v726
    %v728 = vsel %vm638, %v634, -inf
    %v729 = vmax.f32 %v727, %v728
    %v730 = vsel %vm638, %v587, -inf
    %v731 = vsel %vm638, %v603, -inf
    %v732 = vmax.f32 %v730, %v731
    %v733 = vsel %vm638, %v619, -inf
    %v734 = vmax.f32 %v732, %v733
    %v735 = vsel %vm638, %v635, -inf
    %v736 = vmax.f32 %v734, %v735
    %v737 = vsel %vm638, %v588, -inf
    %v738 = vsel %vm638, %v604, -inf
    %v739 = vmax.f32 %v737, %v738
    %v740 = vsel %vm638, %v620, -inf
    %v741 = vmax.f32 %v739, %v740
    %v742 = vsel %vm638, %v636, -inf
    %v743 = vmax.f32 %v741, %v742
    %v744 = vsel %vm638, %v589, -inf
    %v745 = vsel %vm638, %v605, -inf
    %v746 = vmax.f32 %v744, %v745
    %v747 = vsel %vm638, %v621, -inf
    %v748 = vmax.f32 %v746, %v747
    %v749 = vsel %vm638, %v637, -inf
    %v750 = vmax.f32 %v748, %v749
    %751 = vst.msk [vmem:[#allocation2] sm:$0xff] %vm638, 0.0
    %752 = vst.msk [vmem:[#allocation2 + $0x8] sm:$0xff] %vm638, 0.0
    %753 = vst.msk [vmem:[#allocation2 + $0x90] sm:$0xff] %vm638, 0.0
    %754 = vst.msk [vmem:[#allocation2 + $0x98] sm:$0xff] %vm638, 0.0
    %755 = vst.msk [vmem:[#allocation2 + $0x10] sm:$0xff] %vm638, %v645
    %756 = vst.msk [vmem:[#allocation2 + $0x18] sm:$0xff] %vm638, %v652
    %757 = vst.msk [vmem:[#allocation2 + $0x20] sm:$0xff] %vm638, %v659
    %758 = vst.msk [vmem:[#allocation2 + $0x28] sm:$0xff] %vm638, %v666
    %759 = vst.msk [vmem:[#allocation2 + $0x30] sm:$0xff] %vm638, %v673
    %760 = vst.msk [vmem:[#allocation2 + $0x38] sm:$0xff] %vm638, %v680
    %761 = vst.msk [vmem:[#allocation2 + $0x40] sm:$0xff] %vm638, %v687
    %762 = vst.msk [vmem:[#allocation2 + $0x48] sm:$0xff] %vm638, %v694
    %763 = vst.msk [vmem:[#allocation2 + $0x50] sm:$0xff] %vm638, %v701
    %764 = vst.msk [vmem:[#allocation2 + $0x58] sm:$0xff] %vm638, %v708
    %765 = vst.msk [vmem:[#allocation2 + $0x60] sm:$0xff] %vm638, %v715
    %766 = vst.msk [vmem:[#allocation2 + $0x68] sm:$0xff] %vm638, %v722
    %767 = vst.msk [vmem:[#allocation2 + $0x70] sm:$0xff] %vm638, %v729
    %768 = vst.msk [vmem:[#allocation2 + $0x78] sm:$0xff] %vm638, %v736
    %769 = vst.msk [vmem:[#allocation2 + $0x80] sm:$0xff] %vm638, %v743
    %770 = vst.msk [vmem:[#allocation2 + $0x88] sm:$0xff] %vm638, %v750
    %v771 = vlaneseq
    %v772 = vshrl.u32 %v771, 7
    %v773 = vadd.s32 %v772, 8
    %v774 = vadd.s32 %v772, 16
    %v775 = vadd.s32 %v772, 24
    %v776 = vadd.s32 %v772, 32
    %v777 = vadd.s32 %v772, 40
    %v778 = vadd.s32 %v772, 48
    %v779 = vadd.s32 %v772, 56
    %v780 = vadd.s32 %v772, 64
    %v781 = vadd.s32 %v772, 72
    %v782 = vadd.s32 %v772, 80
    %v783 = vadd.s32 %v772, 88
    %v784 = vadd.s32 %v772, 96
    %v785 = vadd.s32 %v772, 104
    %v786 = vadd.s32 %v772, 112
    %v787 = vadd.s32 %v772, 120
    %v788 = vand.u32 %v772, 7
    %v789 = vand.u32 %v773, 7
    %v790 = vand.u32 %v774, 7
    %v791 = vand.u32 %v775, 7
    %v792 = vand.u32 %v776, 7
    %v793 = vand.u32 %v777, 7
    %v794 = vand.u32 %v778, 7
    %v795 = vand.u32 %v779, 7
    %v796 = vand.u32 %v780, 7
    %v797 = vand.u32 %v781, 7
    %v798 = vand.u32 %v782, 7
    %v799 = vand.u32 %v783, 7
    %v800 = vand.u32 %v784, 7
    %v801 = vand.u32 %v785, 7
    %v802 = vand.u32 %v786, 7
    %v803 = vand.u32 %v787, 7
    %v804 = vshra.s32 %v772, 3
    %v805 = vshra.s32 %v773, 3
    %v806 = vshra.s32 %v774, 3
    %v807 = vshra.s32 %v775, 3
    %v808 = vshra.s32 %v776, 3
    %v809 = vshra.s32 %v777, 3
    %v810 = vshra.s32 %v778, 3
    %v811 = vshra.s32 %v779, 3
    %v812 = vshra.s32 %v780, 3
    %v813 = vshra.s32 %v781, 3
    %v814 = vshra.s32 %v782, 3
    %v815 = vshra.s32 %v783, 3
    %v816 = vshra.s32 %v784, 3
    %v817 = vshra.s32 %v785, 3
    %v818 = vshra.s32 %v786, 3
    %v819 = vshra.s32 %v787, 3
    %v820 = vand.u32 %v804, 7
    %v821 = vand.u32 %v805, 7
    %v822 = vand.u32 %v806, 7
    %v823 = vand.u32 %v807, 7
    %v824 = vand.u32 %v808, 7
    %v825 = vand.u32 %v809, 7
    %v826 = vand.u32 %v810, 7
    %v827 = vand.u32 %v811, 7
    %v828 = vand.u32 %v812, 7
    %v829 = vand.u32 %v813, 7
    %v830 = vand.u32 %v814, 7
    %v831 = vand.u32 %v815, 7
    %v832 = vand.u32 %v816, 7
    %v833 = vand.u32 %v817, 7
    %v834 = vand.u32 %v818, 7
    %v835 = vand.u32 %v819, 7
    %vm836 = vcmp.ge.s32.totalorder %v820, 1
    %vm837 = vcmp.ge.s32.totalorder %v821, 1
    %vm838 = vcmp.ge.s32.totalorder %v822, 1
    %vm839 = vcmp.ge.s32.totalorder %v823, 1
    %vm840 = vcmp.ge.s32.totalorder %v824, 1
    %vm841 = vcmp.ge.s32.totalorder %v825, 1
    %vm842 = vcmp.ge.s32.totalorder %v826, 1
    %vm843 = vcmp.ge.s32.totalorder %v827, 1
    %vm844 = vcmp.ge.s32.totalorder %v828, 1
    %vm845 = vcmp.ge.s32.totalorder %v829, 1
    %vm846 = vcmp.ge.s32.totalorder %v830, 1
    %vm847 = vcmp.ge.s32.totalorder %v831, 1
    %vm848 = vcmp.ge.s32.totalorder %v832, 1
    %vm849 = vcmp.ge.s32.totalorder %v833, 1
    %vm850 = vcmp.ge.s32.totalorder %v834, 1
    %vm851 = vcmp.ge.s32.totalorder %v835, 1
    %vm852 = vcmp.le.s32.totalorder %v820, 8
    %vm853 = vcmp.le.s32.totalorder %v821, 8
    %vm854 = vcmp.le.s32.totalorder %v822, 8
    %vm855 = vcmp.le.s32.totalorder %v823, 8
    %vm856 = vcmp.le.s32.totalorder %v824, 8
    %vm857 = vcmp.le.s32.totalorder %v825, 8
    %vm858 = vcmp.le.s32.totalorder %v826, 8
    %vm859 = vcmp.le.s32.totalorder %v827, 8
    %vm860 = vcmp.le.s32.totalorder %v828, 8
    %vm861 = vcmp.le.s32.totalorder %v829, 8
    %vm862 = vcmp.le.s32.totalorder %v830, 8
    %vm863 = vcmp.le.s32.totalorder %v831, 8
    %vm864 = vcmp.le.s32.totalorder %v832, 8
    %vm865 = vcmp.le.s32.totalorder %v833, 8
    %vm866 = vcmp.le.s32.totalorder %v834, 8
    %vm867 = vcmp.le.s32.totalorder %v835, 8
    %vm868 = vmand %vm836, %vm852
    %vm869 = vmand %vm837, %vm853
    %vm870 = vmand %vm838, %vm854
    %vm871 = vmand %vm839, %vm855
    %vm872 = vmand %vm840, %vm856
    %vm873 = vmand %vm841, %vm857
    %vm874 = vmand %vm842, %vm858
    %vm875 = vmand %vm843, %vm859
    %vm876 = vmand %vm844, %vm860
    %vm877 = vmand %vm845, %vm861
    %vm878 = vmand %vm846, %vm862
    %vm879 = vmand %vm847, %vm863
    %vm880 = vmand %vm848, %vm864
    %vm881 = vmand %vm849, %vm865
    %vm882 = vmand %vm850, %vm866
    %vm883 = vmand %vm851, %vm867
    %vm884 = vcmp.ge.s32.totalorder %v788, 1
    %vm885 = vcmp.ge.s32.totalorder %v789, 1
    %vm886 = vcmp.ge.s32.totalorder %v790, 1
    %vm887 = vcmp.ge.s32.totalorder %v791, 1
    %vm888 = vcmp.ge.s32.totalorder %v792, 1
    %vm889 = vcmp.ge.s32.totalorder %v793, 1
    %vm890 = vcmp.ge.s32.totalorder %v794, 1
    %vm891 = vcmp.ge.s32.totalorder %v795, 1
    %vm892 = vcmp.ge.s32.totalorder %v796, 1
    %vm893 = vcmp.ge.s32.totalorder %v797, 1
    %vm894 = vcmp.ge.s32.totalorder %v798, 1
    %vm895 = vcmp.ge.s32.totalorder %v799, 1
    %vm896 = vcmp.ge.s32.totalorder %v800, 1
    %vm897 = vcmp.ge.s32.totalorder %v801, 1
    %vm898 = vcmp.ge.s32.totalorder %v802, 1
    %vm899 = vcmp.ge.s32.totalorder %v803, 1
    %vm900 = vmand %vm868, %vm884
    %vm901 = vmand %vm869, %vm885
    %vm902 = vmand %vm870, %vm886
    %vm903 = vmand %vm871, %vm887
    %vm904 = vmand %vm872, %vm888
    %vm905 = vmand %vm873, %vm889
    %vm906 = vmand %vm874, %vm890
    %vm907 = vmand %vm875, %vm891
    %vm908 = vmand %vm876, %vm892
    %vm909 = vmand %vm877, %vm893
    %vm910 = vmand %vm878, %vm894
    %vm911 = vmand %vm879, %vm895
    %vm912 = vmand %vm880, %vm896
    %vm913 = vmand %vm881, %vm897
    %vm914 = vmand %vm882, %vm898
    %vm915 = vmand %vm883, %vm899
    %vm916 = vcmp.le.s32.totalorder %v788, 8
    %vm917 = vcmp.le.s32.totalorder %v789, 8
    %vm918 = vcmp.le.s32.totalorder %v790, 8
    %vm919 = vcmp.le.s32.totalorder %v791, 8
    %vm920 = vcmp.le.s32.totalorder %v792, 8
    %vm921 = vcmp.le.s32.totalorder %v793, 8
    %vm922 = vcmp.le.s32.totalorder %v794, 8
    %vm923 = vcmp.le.s32.totalorder %v795, 8
    %vm924 = vcmp.le.s32.totalorder %v796, 8
    %vm925 = vcmp.le.s32.totalorder %v797, 8
    %vm926 = vcmp.le.s32.totalorder %v798, 8
    %vm927 = vcmp.le.s32.totalorder %v799, 8
    %vm928 = vcmp.le.s32.totalorder %v800, 8
    %vm929 = vcmp.le.s32.totalorder %v801, 8
    %vm930 = vcmp.le.s32.totalorder %v802, 8
    %vm931 = vcmp.le.s32.totalorder %v803, 8
    %vm932 = vmand %vm900, %vm916
    %vm933 = vmand %vm901, %vm917
    %vm934 = vmand %vm902, %vm918
    %vm935 = vmand %vm903, %vm919
    %vm936 = vmand %vm904, %vm920
    %vm937 = vmand %vm905, %vm921
    %vm938 = vmand %vm906, %vm922
    %vm939 = vmand %vm907, %vm923
    %vm940 = vmand %vm908, %vm924
    %vm941 = vmand %vm909, %vm925
    %vm942 = vmand %vm910, %vm926
    %vm943 = vmand %vm911, %vm927
    %vm944 = vmand %vm912, %vm928
    %vm945 = vmand %vm913, %vm929
    %vm946 = vmand %vm914, %vm930
    %vm947 = vmand %vm915, %vm931
    %v948 = vld [vmem:[#allocation2 + $0x7] sm:$0xff]
    %v949 = vld [vmem:[#allocation2 + $0xf] sm:$0xff]
    %v950 = vld [vmem:[#allocation2 + $0x17] sm:$0xff]
    %v951 = vld [vmem:[#allocation2 + $0x1f] sm:$0xff]
    %v952 = vld [vmem:[#allocation2 + $0x27] sm:$0xff]
    %v953 = vld [vmem:[#allocation2 + $0x2f] sm:$0xff]
    %v954 = vld [vmem:[#allocation2 + $0x37] sm:$0xff]
    %v955 = vld [vmem:[#allocation2 + $0x3f] sm:$0xff]
    %v956 = vld [vmem:[#allocation2 + $0x47] sm:$0xff]
    %v957 = vld [vmem:[#allocation2 + $0x4f] sm:$0xff]
    %v958 = vld [vmem:[#allocation2 + $0x57] sm:$0xff]
    %v959 = vld [vmem:[#allocation2 + $0x5f] sm:$0xff]
    %v960 = vld [vmem:[#allocation2 + $0x67] sm:$0xff]
    %v961 = vld [vmem:[#allocation2 + $0x6f] sm:$0xff]
    %v962 = vld [vmem:[#allocation2 + $0x77] sm:$0xff]
    %v963 = vld [vmem:[#allocation2 + $0x7f] sm:$0xff]
    %v964 = vsel %vm932, %v948, 0.0
    %v965 = vsel %vm933, %v949, 0.0
    %v966 = vsel %vm934, %v950, 0.0
    %v967 = vsel %vm935, %v951, 0.0
    %v968 = vsel %vm936, %v952, 0.0
    %v969 = vsel %vm937, %v953, 0.0
    %v970 = vsel %vm938, %v954, 0.0
    %v971 = vsel %vm939, %v955, 0.0
    %v972 = vsel %vm940, %v956, 0.0
    %v973 = vsel %vm941, %v957, 0.0
    %v974 = vsel %vm942, %v958, 0.0
    %v975 = vsel %vm943, %v959, 0.0
    %v976 = vsel %vm944, %v960, 0.0
    %v977 = vsel %vm945, %v961, 0.0
    %v978 = vsel %vm946, %v962, 0.0
    %v979 = vsel %vm947, %v963, 0.0
    %v980 = vadd.s32 %v788, 1
    %v981 = vadd.s32 %v789, 1
    %v982 = vadd.s32 %v790, 1
    %v983 = vadd.s32 %v791, 1
    %v984 = vadd.s32 %v792, 1
    %v985 = vadd.s32 %v793, 1
    %v986 = vadd.s32 %v794, 1
    %v987 = vadd.s32 %v795, 1
    %v988 = vadd.s32 %v796, 1
    %v989 = vadd.s32 %v797, 1
    %v990 = vadd.s32 %v798, 1
    %v991 = vadd.s32 %v799, 1
    %v992 = vadd.s32 %v800, 1
    %v993 = vadd.s32 %v801, 1
    %v994 = vadd.s32 %v802, 1
    %v995 = vadd.s32 %v803, 1
    %vm996 = vcmp.ge.s32.totalorder %v980, 1
    %vm997 = vcmp.ge.s32.totalorder %v981, 1
    %vm998 = vcmp.ge.s32.totalorder %v982, 1
    %vm999 = vcmp.ge.s32.totalorder %v983, 1
    %vm1000 = vcmp.ge.s32.totalorder %v984, 1
    %vm1001 = vcmp.ge.s32.totalorder %v985, 1
    %vm1002 = vcmp.ge.s32.totalorder %v986, 1
    %vm1003 = vcmp.ge.s32.totalorder %v987, 1
    %vm1004 = vcmp.ge.s32.totalorder %v988, 1
    %vm1005 = vcmp.ge.s32.totalorder %v989, 1
    %vm1006 = vcmp.ge.s32.totalorder %v990, 1
    %vm1007 = vcmp.ge.s32.totalorder %v991, 1
    %vm1008 = vcmp.ge.s32.totalorder %v992, 1
    %vm1009 = vcmp.ge.s32.totalorder %v993, 1
    %vm1010 = vcmp.ge.s32.totalorder %v994, 1
    %vm1011 = vcmp.ge.s32.totalorder %v995, 1
    %vm1012 = vmand %vm868, %vm996
    %vm1013 = vmand %vm869, %vm997
    %vm1014 = vmand %vm870, %vm998
    %vm1015 = vmand %vm871, %vm999
    %vm1016 = vmand %vm872, %vm1000
    %vm1017 = vmand %vm873, %vm1001
    %vm1018 = vmand %vm874, %vm1002
    %vm1019 = vmand %vm875, %vm1003
    %vm1020 = vmand %vm876, %vm1004
    %vm1021 = vmand %vm877, %vm1005
    %vm1022 = vmand %vm878, %vm1006
    %vm1023 = vmand %vm879, %vm1007
    %vm1024 = vmand %vm880, %vm1008
    %vm1025 = vmand %vm881, %vm1009
    %vm1026 = vmand %vm882, %vm1010
    %vm1027 = vmand %vm883, %vm1011
    %vm1028 = vcmp.le.s32.totalorder %v980, 8
    %vm1029 = vcmp.le.s32.totalorder %v981, 8
    %vm1030 = vcmp.le.s32.totalorder %v982, 8
    %vm1031 = vcmp.le.s32.totalorder %v983, 8
    %vm1032 = vcmp.le.s32.totalorder %v984, 8
    %vm1033 = vcmp.le.s32.totalorder %v985, 8
    %vm1034 = vcmp.le.s32.totalorder %v986, 8
    %vm1035 = vcmp.le.s32.totalorder %v987, 8
    %vm1036 = vcmp.le.s32.totalorder %v988, 8
    %vm1037 = vcmp.le.s32.totalorder %v989, 8
    %vm1038 = vcmp.le.s32.totalorder %v990, 8
    %vm1039 = vcmp.le.s32.totalorder %v991, 8
    %vm1040 = vcmp.le.s32.totalorder %v992, 8
    %vm1041 = vcmp.le.s32.totalorder %v993, 8
    %vm1042 = vcmp.le.s32.totalorder %v994, 8
    %vm1043 = vcmp.le.s32.totalorder %v995, 8
    %vm1044 = vmand %vm1012, %vm1028
    %vm1045 = vmand %vm1013, %vm1029
    %vm1046 = vmand %vm1014, %vm1030
    %vm1047 = vmand %vm1015, %vm1031
    %vm1048 = vmand %vm1016, %vm1032
    %vm1049 = vmand %vm1017, %vm1033
    %vm1050 = vmand %vm1018, %vm1034
    %vm1051 = vmand %vm1019, %vm1035
    %vm1052 = vmand %vm1020, %vm1036
    %vm1053 = vmand %vm1021, %vm1037
    %vm1054 = vmand %vm1022, %vm1038
    %vm1055 = vmand %vm1023, %vm1039
    %vm1056 = vmand %vm1024, %vm1040
    %vm1057 = vmand %vm1025, %vm1041
    %vm1058 = vmand %vm1026, %vm1042
    %vm1059 = vmand %vm1027, %vm1043
    %v1060 = vld [vmem:[#allocation2 + $0x8] sm:$0xff]
    %v1061 = vld [vmem:[#allocation2 + $0x10] sm:$0xff]
    %v1062 = vld [vmem:[#allocation2 + $0x18] sm:$0xff]
    %v1063 = vld [vmem:[#allocation2 + $0x20] sm:$0xff]
    %v1064 = vld [vmem:[#allocation2 + $0x28] sm:$0xff]
    %v1065 = vld [vmem:[#allocation2 + $0x30] sm:$0xff]
    %v1066 = vld [vmem:[#allocation2 + $0x38] sm:$0xff]
    %v1067 = vld [vmem:[#allocation2 + $0x40] sm:$0xff]
    %v1068 = vld [vmem:[#allocation2 + $0x48] sm:$0xff]
    %v1069 = vld [vmem:[#allocation2 + $0x50] sm:$0xff]
    %v1070 = vld [vmem:[#allocation2 + $0x58] sm:$0xff]
    %v1071 = vld [vmem:[#allocation2 + $0x60] sm:$0xff]
    %v1072 = vld [vmem:[#allocation2 + $0x68] sm:$0xff]
    %v1073 = vld [vmem:[#allocation2 + $0x70] sm:$0xff]
    %v1074 = vld [vmem:[#allocation2 + $0x78] sm:$0xff]
    %v1075 = vld [vmem:[#allocation2 + $0x80] sm:$0xff]
    %v1076 = vsel %vm1044, %v1060, 0.0
    %v1077 = vsel %vm1045, %v1061, 0.0
    %v1078 = vsel %vm1046, %v1062, 0.0
    %v1079 = vsel %vm1047, %v1063, 0.0
    %v1080 = vsel %vm1048, %v1064, 0.0
    %v1081 = vsel %vm1049, %v1065, 0.0
    %v1082 = vsel %vm1050, %v1066, 0.0
    %v1083 = vsel %vm1051, %v1067, 0.0
    %v1084 = vsel %vm1052, %v1068, 0.0
    %v1085 = vsel %vm1053, %v1069, 0.0
    %v1086 = vsel %vm1054, %v1070, 0.0
    %v1087 = vsel %vm1055, %v1071, 0.0
    %v1088 = vsel %vm1056, %v1072, 0.0
    %v1089 = vsel %vm1057, %v1073, 0.0
    %v1090 = vsel %vm1058, %v1074, 0.0
    %v1091 = vsel %vm1059, %v1075, 0.0
    %v1092 = vadd.s32 %v788, 2
    %v1093 = vadd.s32 %v789, 2
    %v1094 = vadd.s32 %v790, 2
    %v1095 = vadd.s32 %v791, 2
    %v1096 = vadd.s32 %v792, 2
    %v1097 = vadd.s32 %v793, 2
    %v1098 = vadd.s32 %v794, 2
    %v1099 = vadd.s32 %v795, 2
    %v1100 = vadd.s32 %v796, 2
    %v1101 = vadd.s32 %v797, 2
    %v1102 = vadd.s32 %v798, 2
    %v1103 = vadd.s32 %v799, 2
    %v1104 = vadd.s32 %v800, 2
    %v1105 = vadd.s32 %v801, 2
    %v1106 = vadd.s32 %v802, 2
    %v1107 = vadd.s32 %v803, 2
    %vm1108 = vcmp.ge.s32.totalorder %v1092, 1
    %vm1109 = vcmp.ge.s32.totalorder %v1093, 1
    %vm1110 = vcmp.ge.s32.totalorder %v1094, 1
    %vm1111 = vcmp.ge.s32.totalorder %v1095, 1
    %vm1112 = vcmp.ge.s32.totalorder %v1096, 1
    %vm1113 = vcmp.ge.s32.totalorder %v1097, 1
    %vm1114 = vcmp.ge.s32.totalorder %v1098, 1
    %vm1115 = vcmp.ge.s32.totalorder %v1099, 1
    %vm1116 = vcmp.ge.s32.totalorder %v1100, 1
    %vm1117 = vcmp.ge.s32.totalorder %v1101, 1
    %vm1118 = vcmp.ge.s32.totalorder %v1102, 1
    %vm1119 = vcmp.ge.s32.totalorder %v1103, 1
    %vm1120 = vcmp.ge.s32.totalorder %v1104, 1
    %vm1121 = vcmp.ge.s32.totalorder %v1105, 1
    %vm1122 = vcmp.ge.s32.totalorder %v1106, 1
    %vm1123 = vcmp.ge.s32.totalorder %v1107, 1
    %vm1124 = vmand %vm868, %vm1108
    %vm1125 = vmand %vm869, %vm1109
    %vm1126 = vmand %vm870, %vm1110
    %vm1127 = vmand %vm871, %vm1111
    %vm1128 = vmand %vm872, %vm1112
    %vm1129 = vmand %vm873, %vm1113
    %vm1130 = vmand %vm874, %vm1114
    %vm1131 = vmand %vm875, %vm1115
    %vm1132 = vmand %vm876, %vm1116
    %vm1133 = vmand %vm877, %vm1117
    %vm1134 = vmand %vm878, %vm1118
    %vm1135 = vmand %vm879, %vm1119
    %vm1136 = vmand %vm880, %vm1120
    %vm1137 = vmand %vm881, %vm1121
    %vm1138 = vmand %vm882, %vm1122
    %vm1139 = vmand %vm883, %vm1123
    %vm1140 = vcmp.le.s32.totalorder %v1092, 8
    %vm1141 = vcmp.le.s32.totalorder %v1093, 8
    %vm1142 = vcmp.le.s32.totalorder %v1094, 8
    %vm1143 = vcmp.le.s32.totalorder %v1095, 8
    %vm1144 = vcmp.le.s32.totalorder %v1096, 8
    %vm1145 = vcmp.le.s32.totalorder %v1097, 8
    %vm1146 = vcmp.le.s32.totalorder %v1098, 8
    %vm1147 = vcmp.le.s32.totalorder %v1099, 8
    %vm1148 = vcmp.le.s32.totalorder %v1100, 8
    %vm1149 = vcmp.le.s32.totalorder %v1101, 8
    %vm1150 = vcmp.le.s32.totalorder %v1102, 8
    %vm1151 = vcmp.le.s32.totalorder %v1103, 8
    %vm1152 = vcmp.le.s32.totalorder %v1104, 8
    %vm1153 = vcmp.le.s32.totalorder %v1105, 8
    %vm1154 = vcmp.le.s32.totalorder %v1106, 8
    %vm1155 = vcmp.le.s32.totalorder %v1107, 8
    %vm1156 = vmand %vm1124, %vm1140
    %vm1157 = vmand %vm1125, %vm1141
    %vm1158 = vmand %vm1126, %vm1142
    %vm1159 = vmand %vm1127, %vm1143
    %vm1160 = vmand %vm1128, %vm1144
    %vm1161 = vmand %vm1129, %vm1145
    %vm1162 = vmand %vm1130, %vm1146
    %vm1163 = vmand %vm1131, %vm1147
    %vm1164 = vmand %vm1132, %vm1148
    %vm1165 = vmand %vm1133, %vm1149
    %vm1166 = vmand %vm1134, %vm1150
    %vm1167 = vmand %vm1135, %vm1151
    %vm1168 = vmand %vm1136, %vm1152
    %vm1169 = vmand %vm1137, %vm1153
    %vm1170 = vmand %vm1138, %vm1154
    %vm1171 = vmand %vm1139, %vm1155
    %v1172 = vld [vmem:[#allocation2 + $0x9] sm:$0xff]
    %v1173 = vld [vmem:[#allocation2 + $0x11] sm:$0xff]
    %v1174 = vld [vmem:[#allocation2 + $0x19] sm:$0xff]
    %v1175 = vld [vmem:[#allocation2 + $0x21] sm:$0xff]
    %v1176 = vld [vmem:[#allocation2 + $0x29] sm:$0xff]
    %v1177 = vld [vmem:[#allocation2 + $0x31] sm:$0xff]
    %v1178 = vld [vmem:[#allocation2 + $0x39] sm:$0xff]
    %v1179 = vld [vmem:[#allocation2 + $0x41] sm:$0xff]
    %v1180 = vld [vmem:[#allocation2 + $0x49] sm:$0xff]
    %v1181 = vld [vmem:[#allocation2 + $0x51] sm:$0xff]
    %v1182 = vld [vmem:[#allocation2 + $0x59] sm:$0xff]
    %v1183 = vld [vmem:[#allocation2 + $0x61] sm:$0xff]
    %v1184 = vld [vmem:[#allocation2 + $0x69] sm:$0xff]
    %v1185 = vld [vmem:[#allocation2 + $0x71] sm:$0xff]
    %v1186 = vld [vmem:[#allocation2 + $0x79] sm:$0xff]
    %v1187 = vld [vmem:[#allocation2 + $0x81] sm:$0xff]
    %v1188 = vsel %vm1156, %v1172, 0.0
    %v1189 = vsel %vm1157, %v1173, 0.0
    %v1190 = vsel %vm1158, %v1174, 0.0
    %v1191 = vsel %vm1159, %v1175, 0.0
    %v1192 = vsel %vm1160, %v1176, 0.0
    %v1193 = vsel %vm1161, %v1177, 0.0
    %v1194 = vsel %vm1162, %v1178, 0.0
    %v1195 = vsel %vm1163, %v1179, 0.0
    %v1196 = vsel %vm1164, %v1180, 0.0
    %v1197 = vsel %vm1165, %v1181, 0.0
    %v1198 = vsel %vm1166, %v1182, 0.0
    %v1199 = vsel %vm1167, %v1183, 0.0
    %v1200 = vsel %vm1168, %v1184, 0.0
    %v1201 = vsel %vm1169, %v1185, 0.0
    %v1202 = vsel %vm1170, %v1186, 0.0
    %v1203 = vsel %vm1171, %v1187, 0.0
    %v1204 = vadd.s32 %v820, 1
    %v1205 = vadd.s32 %v821, 1
    %v1206 = vadd.s32 %v822, 1
    %v1207 = vadd.s32 %v823, 1
    %v1208 = vadd.s32 %v824, 1
    %v1209 = vadd.s32 %v825, 1
    %v1210 = vadd.s32 %v826, 1
    %v1211 = vadd.s32 %v827, 1
    %v1212 = vadd.s32 %v828, 1
    %v1213 = vadd.s32 %v829, 1
    %v1214 = vadd.s32 %v830, 1
    %v1215 = vadd.s32 %v831, 1
    %v1216 = vadd.s32 %v832, 1
    %v1217 = vadd.s32 %v833, 1
    %v1218 = vadd.s32 %v834, 1
    %v1219 = vadd.s32 %v835, 1
    %vm1220 = vcmp.ge.s32.totalorder %v1204, 1
    %vm1221 = vcmp.ge.s32.totalorder %v1205, 1
    %vm1222 = vcmp.ge.s32.totalorder %v1206, 1
    %vm1223 = vcmp.ge.s32.totalorder %v1207, 1
    %vm1224 = vcmp.ge.s32.totalorder %v1208, 1
    %vm1225 = vcmp.ge.s32.totalorder %v1209, 1
    %vm1226 = vcmp.ge.s32.totalorder %v1210, 1
    %vm1227 = vcmp.ge.s32.totalorder %v1211, 1
    %vm1228 = vcmp.ge.s32.totalorder %v1212, 1
    %vm1229 = vcmp.ge.s32.totalorder %v1213, 1
    %vm1230 = vcmp.ge.s32.totalorder %v1214, 1
    %vm1231 = vcmp.ge.s32.totalorder %v1215, 1
    %vm1232 = vcmp.ge.s32.totalorder %v1216, 1
    %vm1233 = vcmp.ge.s32.totalorder %v1217, 1
    %vm1234 = vcmp.ge.s32.totalorder %v1218, 1
    %vm1235 = vcmp.ge.s32.totalorder %v1219, 1
    %vm1236 = vcmp.le.s32.totalorder %v1204, 8
    %vm1237 = vcmp.le.s32.totalorder %v1205, 8
    %vm1238 = vcmp.le.s32.totalorder %v1206, 8
    %vm1239 = vcmp.le.s32.totalorder %v1207, 8
    %vm1240 = vcmp.le.s32.totalorder %v1208, 8
    %vm1241 = vcmp.le.s32.totalorder %v1209, 8
    %vm1242 = vcmp.le.s32.totalorder %v1210, 8
    %vm1243 = vcmp.le.s32.totalorder %v1211, 8
    %vm1244 = vcmp.le.s32.totalorder %v1212, 8
    %vm1245 = vcmp.le.s32.totalorder %v1213, 8
    %vm1246 = vcmp.le.s32.totalorder %v1214, 8
    %vm1247 = vcmp.le.s32.totalorder %v1215, 8
    %vm1248 = vcmp.le.s32.totalorder %v1216, 8
    %vm1249 = vcmp.le.s32.totalorder %v1217, 8
    %vm1250 = vcmp.le.s32.totalorder %v1218, 8
    %vm1251 = vcmp.le.s32.totalorder %v1219, 8
    %vm1252 = vmand %vm1220, %vm1236
    %vm1253 = vmand %vm1221, %vm1237
    %vm1254 = vmand %vm1222, %vm1238
    %vm1255 = vmand %vm1223, %vm1239
    %vm1256 = vmand %vm1224, %vm1240
    %vm1257 = vmand %vm1225, %vm1241
    %vm1258 = vmand %vm1226, %vm1242
    %vm1259 = vmand %vm1227, %vm1243
    %vm1260 = vmand %vm1228, %vm1244
    %vm1261 = vmand %vm1229, %vm1245
    %vm1262 = vmand %vm1230, %vm1246
    %vm1263 = vmand %vm1231, %vm1247
    %vm1264 = vmand %vm1232, %vm1248
    %vm1265 = vmand %vm1233, %vm1249
    %vm1266 = vmand %vm1234, %vm1250
    %vm1267 = vmand %vm1235, %vm1251
    %vm1268 = vmand %vm1252, %vm884
    %vm1269 = vmand %vm1253, %vm885
    %vm1270 = vmand %vm1254, %vm886
    %vm1271 = vmand %vm1255, %vm887
    %vm1272 = vmand %vm1256, %vm888
    %vm1273 = vmand %vm1257, %vm889
    %vm1274 = vmand %vm1258, %vm890
    %vm1275 = vmand %vm1259, %vm891
    %vm1276 = vmand %vm1260, %vm892
    %vm1277 = vmand %vm1261, %vm893
    %vm1278 = vmand %vm1262, %vm894
    %vm1279 = vmand %vm1263, %vm895
    %vm1280 = vmand %vm1264, %vm896
    %vm1281 = vmand %vm1265, %vm897
    %vm1282 = vmand %vm1266, %vm898
    %vm1283 = vmand %vm1267, %vm899
    %vm1284 = vmand %vm1268, %vm916
    %vm1285 = vmand %vm1269, %vm917
    %vm1286 = vmand %vm1270, %vm918
    %vm1287 = vmand %vm1271, %vm919
    %vm1288 = vmand %vm1272, %vm920
    %vm1289 = vmand %vm1273, %vm921
    %vm1290 = vmand %vm1274, %vm922
    %vm1291 = vmand %vm1275, %vm923
    %vm1292 = vmand %vm1276, %vm924
    %vm1293 = vmand %vm1277, %vm925
    %vm1294 = vmand %vm1278, %vm926
    %vm1295 = vmand %vm1279, %vm927
    %vm1296 = vmand %vm1280, %vm928
    %vm1297 = vmand %vm1281, %vm929
    %vm1298 = vmand %vm1282, %vm930
    %vm1299 = vmand %vm1283, %vm931
    %v1300 = vld [vmem:[#allocation2 + $0x87] sm:$0xff]
    %v1301 = vsel %vm1284, %v949, 0.0
    %v1302 = vsel %vm1285, %v950, 0.0
    %v1303 = vsel %vm1286, %v951, 0.0
    %v1304 = vsel %vm1287, %v952, 0.0
    %v1305 = vsel %vm1288, %v953, 0.0
    %v1306 = vsel %vm1289, %v954, 0.0
    %v1307 = vsel %vm1290, %v955, 0.0
    %v1308 = vsel %vm1291, %v956, 0.0
    %v1309 = vsel %vm1292, %v957, 0.0
    %v1310 = vsel %vm1293, %v958, 0.0
    %v1311 = vsel %vm1294, %v959, 0.0
    %v1312 = vsel %vm1295, %v960, 0.0
    %v1313 = vsel %vm1296, %v961, 0.0
    %v1314 = vsel %vm1297, %v962, 0.0
    %v1315 = vsel %vm1298, %v963, 0.0
    %v1316 = vsel %vm1299, %v1300, 0.0
    %vm1317 = vmand %vm1252, %vm996
    %vm1318 = vmand %vm1253, %vm997
    %vm1319 = vmand %vm1254, %vm998
    %vm1320 = vmand %vm1255, %vm999
    %vm1321 = vmand %vm1256, %vm1000
    %vm1322 = vmand %vm1257, %vm1001
    %vm1323 = vmand %vm1258, %vm1002
    %vm1324 = vmand %vm1259, %vm1003
    %vm1325 = vmand %vm1260, %vm1004
    %vm1326 = vmand %vm1261, %vm1005
    %vm1327 = vmand %vm1262, %vm1006
    %vm1328 = vmand %vm1263, %vm1007
    %vm1329 = vmand %vm1264, %vm1008
    %vm1330 = vmand %vm1265, %vm1009
    %vm1331 = vmand %vm1266, %vm1010
    %vm1332 = vmand %vm1267, %vm1011
    %vm1333 = vmand %vm1317, %vm1028
    %vm1334 = vmand %vm1318, %vm1029
    %vm1335 = vmand %vm1319, %vm1030
    %vm1336 = vmand %vm1320, %vm1031
    %vm1337 = vmand %vm1321, %vm1032
    %vm1338 = vmand %vm1322, %vm1033
    %vm1339 = vmand %vm1323, %vm1034
    %vm1340 = vmand %vm1324, %vm1035
    %vm1341 = vmand %vm1325, %vm1036
    %vm1342 = vmand %vm1326, %vm1037
    %vm1343 = vmand %vm1327, %vm1038
    %vm1344 = vmand %vm1328, %vm1039
    %vm1345 = vmand %vm1329, %vm1040
    %vm1346 = vmand %vm1330, %vm1041
    %vm1347 = vmand %vm1331, %vm1042
    %vm1348 = vmand %vm1332, %vm1043
    %v1349 = vld [vmem:[#allocation2 + $0x88] sm:$0xff]
    %v1350 = vsel %vm1333, %v1061, 0.0
    %v1351 = vsel %vm1334, %v1062, 0.0
    %v1352 = vsel %vm1335, %v1063, 0.0
    %v1353 = vsel %vm1336, %v1064, 0.0
    %v1354 = vsel %vm1337, %v1065, 0.0
    %v1355 = vsel %vm1338, %v1066, 0.0
    %v1356 = vsel %vm1339, %v1067, 0.0
    %v1357 = vsel %vm1340, %v1068, 0.0
    %v1358 = vsel %vm1341, %v1069, 0.0
    %v1359 = vsel %vm1342, %v1070, 0.0
    %v1360 = vsel %vm1343, %v1071, 0.0
    %v1361 = vsel %vm1344, %v1072, 0.0
    %v1362 = vsel %vm1345, %v1073, 0.0
    %v1363 = vsel %vm1346, %v1074, 0.0
    %v1364 = vsel %vm1347, %v1075, 0.0
    %v1365 = vsel %vm1348, %v1349, 0.0
    %vm1366 = vmand %vm1252, %vm1108
    %vm1367 = vmand %vm1253, %vm1109
    %vm1368 = vmand %vm1254, %vm1110
    %vm1369 = vmand %vm1255, %vm1111
    %vm1370 = vmand %vm1256, %vm1112
    %vm1371 = vmand %vm1257, %vm1113
    %vm1372 = vmand %vm1258, %vm1114
    %vm1373 = vmand %vm1259, %vm1115
    %vm1374 = vmand %vm1260, %vm1116
    %vm1375 = vmand %vm1261, %vm1117
    %vm1376 = vmand %vm1262, %vm1118
    %vm1377 = vmand %vm1263, %vm1119
    %vm1378 = vmand %vm1264, %vm1120
    %vm1379 = vmand %vm1265, %vm1121
    %vm1380 = vmand %vm1266, %vm1122
    %vm1381 = vmand %vm1267, %vm1123
    %vm1382 = vmand %vm1366, %vm1140
    %vm1383 = vmand %vm1367, %vm1141
    %vm1384 = vmand %vm1368, %vm1142
    %vm1385 = vmand %vm1369, %vm1143
    %vm1386 = vmand %vm1370, %vm1144
    %vm1387 = vmand %vm1371, %vm1145
    %vm1388 = vmand %vm1372, %vm1146
    %vm1389 = vmand %vm1373, %vm1147
    %vm1390 = vmand %vm1374, %vm1148
    %vm1391 = vmand %vm1375, %vm1149
    %vm1392 = vmand %vm1376, %vm1150
    %vm1393 = vmand %vm1377, %vm1151
    %vm1394 = vmand %vm1378, %vm1152
    %vm1395 = vmand %vm1379, %vm1153
    %vm1396 = vmand %vm1380, %vm1154
    %vm1397 = vmand %vm1381, %vm1155
    %v1398 = vld [vmem:[#allocation2 + $0x89] sm:$0xff]
    %v1399 = vsel %vm1382, %v1173, 0.0
    %v1400 = vsel %vm1383, %v1174, 0.0
    %v1401 = vsel %vm1384, %v1175, 0.0
    %v1402 = vsel %vm1385, %v1176, 0.0
    %v1403 = vsel %vm1386, %v1177, 0.0
    %v1404 = vsel %vm1387, %v1178, 0.0
    %v1405 = vsel %vm1388, %v1179, 0.0
    %v1406 = vsel %vm1389, %v1180, 0.0
    %v1407 = vsel %vm1390, %v1181, 0.0
    %v1408 = vsel %vm1391, %v1182, 0.0
    %v1409 = vsel %vm1392, %v1183, 0.0
    %v1410 = vsel %vm1393, %v1184, 0.0
    %v1411 = vsel %vm1394, %v1185, 0.0
    %v1412 = vsel %vm1395, %v1186, 0.0
    %v1413 = vsel %vm1396, %v1187, 0.0
    %v1414 = vsel %vm1397, %v1398, 0.0
    %v1415 = vadd.s32 %v820, 2
    %v1416 = vadd.s32 %v821, 2
    %v1417 = vadd.s32 %v822, 2
    %v1418 = vadd.s32 %v823, 2
    %v1419 = vadd.s32 %v824, 2
    %v1420 = vadd.s32 %v825, 2
    %v1421 = vadd.s32 %v826, 2
    %v1422 = vadd.s32 %v827, 2
    %v1423 = vadd.s32 %v828, 2
    %v1424 = vadd.s32 %v829, 2
    %v1425 = vadd.s32 %v830, 2
    %v1426 = vadd.s32 %v831, 2
    %v1427 = vadd.s32 %v832, 2
    %v1428 = vadd.s32 %v833, 2
    %v1429 = vadd.s32 %v834, 2
    %v1430 = vadd.s32 %v835, 2
    %vm1431 = vcmp.ge.s32.totalorder %v1415, 1
    %vm1432 = vcmp.ge.s32.totalorder %v1416, 1
    %vm1433 = vcmp.ge.s32.totalorder %v1417, 1
    %vm1434 = vcmp.ge.s32.totalorder %v1418, 1
    %vm1435 = vcmp.ge.s32.totalorder %v1419, 1
    %vm1436 = vcmp.ge.s32.totalorder %v1420, 1
    %vm1437 = vcmp.ge.s32.totalorder %v1421, 1
    %vm1438 = vcmp.ge.s32.totalorder %v1422, 1
    %vm1439 = vcmp.ge.s32.totalorder %v1423, 1
    %vm1440 = vcmp.ge.s32.totalorder %v1424, 1
    %vm1441 = vcmp.ge.s32.totalorder %v1425, 1
    %vm1442 = vcmp.ge.s32.totalorder %v1426, 1
    %vm1443 = vcmp.ge.s32.totalorder %v1427, 1
    %vm1444 = vcmp.ge.s32.totalorder %v1428, 1
    %vm1445 = vcmp.ge.s32.totalorder %v1429, 1
    %vm1446 = vcmp.ge.s32.totalorder %v1430, 1
    %vm1447 = vcmp.le.s32.totalorder %v1415, 8
    %vm1448 = vcmp.le.s32.totalorder %v1416, 8
    %vm1449 = vcmp.le.s32.totalorder %v1417, 8
    %vm1450 = vcmp.le.s32.totalorder %v1418, 8
    %vm1451 = vcmp.le.s32.totalorder %v1419, 8
    %vm1452 = vcmp.le.s32.totalorder %v1420, 8
    %vm1453 = vcmp.le.s32.totalorder %v1421, 8
    %vm1454 = vcmp.le.s32.totalorder %v1422, 8
    %vm1455 = vcmp.le.s32.totalorder %v1423, 8
    %vm1456 = vcmp.le.s32.totalorder %v1424, 8
    %vm1457 = vcmp.le.s32.totalorder %v1425, 8
    %vm1458 = vcmp.le.s32.totalorder %v1426, 8
    %vm1459 = vcmp.le.s32.totalorder %v1427, 8
    %vm1460 = vcmp.le.s32.totalorder %v1428, 8
    %vm1461 = vcmp.le.s32.totalorder %v1429, 8
    %vm1462 = vcmp.le.s32.totalorder %v1430, 8
    %vm1463 = vmand %vm1431, %vm1447
    %vm1464 = vmand %vm1432, %vm1448
    %vm1465 = vmand %vm1433, %vm1449
    %vm1466 = vmand %vm1434, %vm1450
    %vm1467 = vmand %vm1435, %vm1451
    %vm1468 = vmand %vm1436, %vm1452
    %vm1469 = vmand %vm1437, %vm1453
    %vm1470 = vmand %vm1438, %vm1454
    %vm1471 = vmand %vm1439, %vm1455
    %vm1472 = vmand %vm1440, %vm1456
    %vm1473 = vmand %vm1441, %vm1457
    %vm1474 = vmand %vm1442, %vm1458
    %vm1475 = vmand %vm1443, %vm1459
    %vm1476 = vmand %vm1444, %vm1460
    %vm1477 = vmand %vm1445, %vm1461
    %vm1478 = vmand %vm1446, %vm1462
    %vm1479 = vmand %vm1463, %vm884
    %vm1480 = vmand %vm1464, %vm885
    %vm1481 = vmand %vm1465, %vm886
    %vm1482 = vmand %vm1466, %vm887
    %vm1483 = vmand %vm1467, %vm888
    %vm1484 = vmand %vm1468, %vm889
    %vm1485 = vmand %vm1469, %vm890
    %vm1486 = vmand %vm1470, %vm891
    %vm1487 = vmand %vm1471, %vm892
    %vm1488 = vmand %vm1472, %vm893
    %vm1489 = vmand %vm1473, %vm894
    %vm1490 = vmand %vm1474, %vm895
    %vm1491 = vmand %vm1475, %vm896
    %vm1492 = vmand %vm1476, %vm897
    %vm1493 = vmand %vm1477, %vm898
    %vm1494 = vmand %vm1478, %vm899
    %vm1495 = vmand %vm1479, %vm916
    %vm1496 = vmand %vm1480, %vm917
    %vm1497 = vmand %vm1481, %vm918
    %vm1498 = vmand %vm1482, %vm919
    %vm1499 = vmand %vm1483, %vm920
    %vm1500 = vmand %vm1484, %vm921
    %vm1501 = vmand %vm1485, %vm922
    %vm1502 = vmand %vm1486, %vm923
    %vm1503 = vmand %vm1487, %vm924
    %vm1504 = vmand %vm1488, %vm925
    %vm1505 = vmand %vm1489, %vm926
    %vm1506 = vmand %vm1490, %vm927
    %vm1507 = vmand %vm1491, %vm928
    %vm1508 = vmand %vm1492, %vm929
    %vm1509 = vmand %vm1493, %vm930
    %vm1510 = vmand %vm1494, %vm931
    %v1511 = vld [vmem:[#allocation2 + $0x8f] sm:$0xff]
    %v1512 = vsel %vm1495, %v950, 0.0
    %v1513 = vsel %vm1496, %v951, 0.0
    %v1514 = vsel %vm1497, %v952, 0.0
    %v1515 = vsel %vm1498, %v953, 0.0
    %v1516 = vsel %vm1499, %v954, 0.0
    %v1517 = vsel %vm1500, %v955, 0.0
    %v1518 = vsel %vm1501, %v956, 0.0
    %v1519 = vsel %vm1502, %v957, 0.0
    %v1520 = vsel %vm1503, %v958, 0.0
    %v1521 = vsel %vm1504, %v959, 0.0
    %v1522 = vsel %vm1505, %v960, 0.0
    %v1523 = vsel %vm1506, %v961, 0.0
    %v1524 = vsel %vm1507, %v962, 0.0
    %v1525 = vsel %vm1508, %v963, 0.0
    %v1526 = vsel %vm1509, %v1300, 0.0
    %v1527 = vsel %vm1510, %v1511, 0.0
    %vm1528 = vmand %vm1463, %vm996
    %vm1529 = vmand %vm1464, %vm997
    %vm1530 = vmand %vm1465, %vm998
    %vm1531 = vmand %vm1466, %vm999
    %vm1532 = vmand %vm1467, %vm1000
    %vm1533 = vmand %vm1468, %vm1001
    %vm1534 = vmand %vm1469, %vm1002
    %vm1535 = vmand %vm1470, %vm1003
    %vm1536 = vmand %vm1471, %vm1004
    %vm1537 = vmand %vm1472, %vm1005
    %vm1538 = vmand %vm1473, %vm1006
    %vm1539 = vmand %vm1474, %vm1007
    %vm1540 = vmand %vm1475, %vm1008
    %vm1541 = vmand %vm1476, %vm1009
    %vm1542 = vmand %vm1477, %vm1010
    %vm1543 = vmand %vm1478, %vm1011
    %vm1544 = vmand %vm1528, %vm1028
    %vm1545 = vmand %vm1529, %vm1029
    %vm1546 = vmand %vm1530, %vm1030
    %vm1547 = vmand %vm1531, %vm1031
    %vm1548 = vmand %vm1532, %vm1032
    %vm1549 = vmand %vm1533, %vm1033
    %vm1550 = vmand %vm1534, %vm1034
    %vm1551 = vmand %vm1535, %vm1035
    %vm1552 = vmand %vm1536, %vm1036
    %vm1553 = vmand %vm1537, %vm1037
    %vm1554 = vmand %vm1538, %vm1038
    %vm1555 = vmand %vm1539, %vm1039
    %vm1556 = vmand %vm1540, %vm1040
    %vm1557 = vmand %vm1541, %vm1041
    %vm1558 = vmand %vm1542, %vm1042
    %vm1559 = vmand %vm1543, %vm1043
    %v1560 = vld [vmem:[#allocation2 + $0x90] sm:$0xff]
    %v1561 = vsel %vm1544, %v1062, 0.0
    %v1562 = vsel %vm1545, %v1063, 0.0
    %v1563 = vsel %vm1546, %v1064, 0.0
    %v1564 = vsel %vm1547, %v1065, 0.0
    %v1565 = vsel %vm1548, %v1066, 0.0
    %v1566 = vsel %vm1549, %v1067, 0.0
    %v1567 = vsel %vm1550, %v1068, 0.0
    %v1568 = vsel %vm1551, %v1069, 0.0
    %v1569 = vsel %vm1552, %v1070, 0.0
    %v1570 = vsel %vm1553, %v1071, 0.0
    %v1571 = vsel %vm1554, %v1072, 0.0
    %v1572 = vsel %vm1555, %v1073, 0.0
    %v1573 = vsel %vm1556, %v1074, 0.0
    %v1574 = vsel %vm1557, %v1075, 0.0
    %v1575 = vsel %vm1558, %v1349, 0.0
    %v1576 = vsel %vm1559, %v1560, 0.0
    %vm1577 = vmand %vm1463, %vm1108
    %vm1578 = vmand %vm1464, %vm1109
    %vm1579 = vmand %vm1465, %vm1110
    %vm1580 = vmand %vm1466, %vm1111
    %vm1581 = vmand %vm1467, %vm1112
    %vm1582 = vmand %vm1468, %vm1113
    %vm1583 = vmand %vm1469, %vm1114
    %vm1584 = vmand %vm1470, %vm1115
    %vm1585 = vmand %vm1471, %vm1116
    %vm1586 = vmand %vm1472, %vm1117
    %vm1587 = vmand %vm1473, %vm1118
    %vm1588 = vmand %vm1474, %vm1119
    %vm1589 = vmand %vm1475, %vm1120
    %vm1590 = vmand %vm1476, %vm1121
    %vm1591 = vmand %vm1477, %vm1122
    %vm1592 = vmand %vm1478, %vm1123
    %vm1593 = vmand %vm1577, %vm1140
    %vm1594 = vmand %vm1578, %vm1141
    %vm1595 = vmand %vm1579, %vm1142
    %vm1596 = vmand %vm1580, %vm1143
    %vm1597 = vmand %vm1581, %vm1144
    %vm1598 = vmand %vm1582, %vm1145
    %vm1599 = vmand %vm1583, %vm1146
    %vm1600 = vmand %vm1584, %vm1147
    %vm1601 = vmand %vm1585, %vm1148
    %vm1602 = vmand %vm1586, %vm1149
    %vm1603 = vmand %vm1587, %vm1150
    %vm1604 = vmand %vm1588, %vm1151
    %vm1605 = vmand %vm1589, %vm1152
    %vm1606 = vmand %vm1590, %vm1153
    %vm1607 = vmand %vm1591, %vm1154
    %vm1608 = vmand %vm1592, %vm1155
    %v1609 = vld [vmem:[#allocation2 + $0x91] sm:$0xff]
    %v1610 = vsel %vm1593, %v1174, 0.0
    %v1611 = vsel %vm1594, %v1175, 0.0
    %v1612 = vsel %vm1595, %v1176, 0.0
    %v1613 = vsel %vm1596, %v1177, 0.0
    %v1614 = vsel %vm1597, %v1178, 0.0
    %v1615 = vsel %vm1598, %v1179, 0.0
    %v1616 = vsel %vm1599, %v1180, 0.0
    %v1617 = vsel %vm1600, %v1181, 0.0
    %v1618 = vsel %vm1601, %v1182, 0.0
    %v1619 = vsel %vm1602, %v1183, 0.0
    %v1620 = vsel %vm1603, %v1184, 0.0
    %v1621 = vsel %vm1604, %v1185, 0.0
    %v1622 = vsel %vm1605, %v1186, 0.0
    %v1623 = vsel %vm1606, %v1187, 0.0
    %v1624 = vsel %vm1607, %v1398, 0.0
    %v1625 = vsel %vm1608, %v1609, 0.0
    %1642 = vrot.lane.b32.xlu0 %v1076, 16
    %v1643 = vpop.permute.xlu0 %1642
    %1644 = vrot.lane.b32.xlu0 %v1077, 16
    %v1645 = vpop.permute.xlu0 %1644
    %1646 = vrot.lane.b32.xlu0 %v1078, 16
    %v1647 = vpop.permute.xlu0 %1646
    %1648 = vrot.lane.b32.xlu0 %v1079, 16
    %v1649 = vpop.permute.xlu0 %1648
    %1650 = vrot.lane.b32.xlu0 %v1080, 16
    %v1651 = vpop.permute.xlu0 %1650
    %1652 = vrot.lane.b32.xlu0 %v1081, 16
    %v1653 = vpop.permute.xlu0 %1652
    %1654 = vrot.lane.b32.xlu0 %v1082, 16
    %v1655 = vpop.permute.xlu0 %1654
    %1656 = vrot.lane.b32.xlu0 %v1083, 16
    %v1657 = vpop.permute.xlu0 %1656
    %1658 = vrot.lane.b32.xlu0 %v1084, 16
    %v1659 = vpop.permute.xlu0 %1658
    %1660 = vrot.lane.b32.xlu0 %v1085, 16
    %v1661 = vpop.permute.xlu0 %1660
    %1662 = vrot.lane.b32.xlu0 %v1086, 16
    %v1663 = vpop.permute.xlu0 %1662
    %1664 = vrot.lane.b32.xlu0 %v1087, 16
    %v1665 = vpop.permute.xlu0 %1664
    %1666 = vrot.lane.b32.xlu0 %v1088, 16
    %v1667 = vpop.permute.xlu0 %1666
    %1668 = vrot.lane.b32.xlu0 %v1089, 16
    %v1669 = vpop.permute.xlu0 %1668
    %1670 = vrot.lane.b32.xlu0 %v1090, 16
    %v1671 = vpop.permute.xlu0 %1670
    %1672 = vrot.lane.b32.xlu0 %v1091, 16
    %v1673 = vpop.permute.xlu0 %1672
    %1706 = vrot.lane.b32.xlu0 %v1188, 32
    %v1707 = vpop.permute.xlu0 %1706
    %1708 = vrot.lane.b32.xlu0 %v1189, 32
    %v1709 = vpop.permute.xlu0 %1708
    %1710 = vrot.lane.b32.xlu0 %v1190, 32
    %v1711 = vpop.permute.xlu0 %1710
    %1712 = vrot.lane.b32.xlu0 %v1191, 32
    %v1713 = vpop.permute.xlu0 %1712
    %1714 = vrot.lane.b32.xlu0 %v1192, 32
    %v1715 = vpop.permute.xlu0 %1714
    %1716 = vrot.lane.b32.xlu0 %v1193, 32
    %v1717 = vpop.permute.xlu0 %1716
    %1718 = vrot.lane.b32.xlu0 %v1194, 32
    %v1719 = vpop.permute.xlu0 %1718
    %1720 = vrot.lane.b32.xlu0 %v1195, 32
    %v1721 = vpop.permute.xlu0 %1720
    %1722 = vrot.lane.b32.xlu0 %v1196, 32
    %v1723 = vpop.permute.xlu0 %1722
    %1724 = vrot.lane.b32.xlu0 %v1197, 32
    %v1725 = vpop.permute.xlu0 %1724
    %1726 = vrot.lane.b32.xlu0 %v1198, 32
    %v1727 = vpop.permute.xlu0 %1726
    %1728 = vrot.lane.b32.xlu0 %v1199, 32
    %v1729 = vpop.permute.xlu0 %1728
    %1730 = vrot.lane.b32.xlu0 %v1200, 32
    %v1731 = vpop.permute.xlu0 %1730
    %1732 = vrot.lane.b32.xlu0 %v1201, 32
    %v1733 = vpop.permute.xlu0 %1732
    %1734 = vrot.lane.b32.xlu0 %v1202, 32
    %v1735 = vpop.permute.xlu0 %1734
    %1736 = vrot.lane.b32.xlu0 %v1203, 32
    %v1737 = vpop.permute.xlu0 %1736
    %1770 = vrot.lane.b32.xlu0 %v1301, 48
    %v1771 = vpop.permute.xlu0 %1770
    %1772 = vrot.lane.b32.xlu0 %v1302, 48
    %v1773 = vpop.permute.xlu0 %1772
    %1774 = vrot.lane.b32.xlu0 %v1303, 48
    %v1775 = vpop.permute.xlu0 %1774
    %1776 = vrot.lane.b32.xlu0 %v1304, 48
    %v1777 = vpop.permute.xlu0 %1776
    %1778 = vrot.lane.b32.xlu0 %v1305, 48
    %v1779 = vpop.permute.xlu0 %1778
    %1780 = vrot.lane.b32.xlu0 %v1306, 48
    %v1781 = vpop.permute.xlu0 %1780
    %1782 = vrot.lane.b32.xlu0 %v1307, 48
    %v1783 = vpop.permute.xlu0 %1782
    %1784 = vrot.lane.b32.xlu0 %v1308, 48
    %v1785 = vpop.permute.xlu0 %1784
    %1786 = vrot.lane.b32.xlu0 %v1309, 48
    %v1787 = vpop.permute.xlu0 %1786
    %1788 = vrot.lane.b32.xlu0 %v1310, 48
    %v1789 = vpop.permute.xlu0 %1788
    %1790 = vrot.lane.b32.xlu0 %v1311, 48
    %v1791 = vpop.permute.xlu0 %1790
    %1792 = vrot.lane.b32.xlu0 %v1312, 48
    %v1793 = vpop.permute.xlu0 %1792
    %1794 = vrot.lane.b32.xlu0 %v1313, 48
    %v1795 = vpop.permute.xlu0 %1794
    %1796 = vrot.lane.b32.xlu0 %v1314, 48
    %v1797 = vpop.permute.xlu0 %1796
    %1798 = vrot.lane.b32.xlu0 %v1315, 48
    %v1799 = vpop.permute.xlu0 %1798
    %1800 = vrot.lane.b32.xlu0 %v1316, 48
    %v1801 = vpop.permute.xlu0 %1800
    %1834 = vrot.lane.b32.xlu0 %v1350, 64
    %v1835 = vpop.permute.xlu0 %1834
    %1836 = vrot.lane.b32.xlu0 %v1351, 64
    %v1837 = vpop.permute.xlu0 %1836
    %1838 = vrot.lane.b32.xlu0 %v1352, 64
    %v1839 = vpop.permute.xlu0 %1838
    %1840 = vrot.lane.b32.xlu0 %v1353, 64
    %v1841 = vpop.permute.xlu0 %1840
    %1842 = vrot.lane.b32.xlu0 %v1354, 64
    %v1843 = vpop.permute.xlu0 %1842
    %1844 = vrot.lane.b32.xlu0 %v1355, 64
    %v1845 = vpop.permute.xlu0 %1844
    %1846 = vrot.lane.b32.xlu0 %v1356, 64
    %v1847 = vpop.permute.xlu0 %1846
    %1848 = vrot.lane.b32.xlu0 %v1357, 64
    %v1849 = vpop.permute.xlu0 %1848
    %1850 = vrot.lane.b32.xlu0 %v1358, 64
    %v1851 = vpop.permute.xlu0 %1850
    %1852 = vrot.lane.b32.xlu0 %v1359, 64
    %v1853 = vpop.permute.xlu0 %1852
    %1854 = vrot.lane.b32.xlu0 %v1360, 64
    %v1855 = vpop.permute.xlu0 %1854
    %1856 = vrot.lane.b32.xlu0 %v1361, 64
    %v1857 = vpop.permute.xlu0 %1856
    %1858 = vrot.lane.b32.xlu0 %v1362, 64
    %v1859 = vpop.permute.xlu0 %1858
    %1860 = vrot.lane.b32.xlu0 %v1363, 64
    %v1861 = vpop.permute.xlu0 %1860
    %1862 = vrot.lane.b32.xlu0 %v1364, 64
    %v1863 = vpop.permute.xlu0 %1862
    %1864 = vrot.lane.b32.xlu0 %v1365, 64
    %v1865 = vpop.permute.xlu0 %1864
    %1898 = vrot.lane.b32.xlu0 %v1399, 80
    %v1899 = vpop.permute.xlu0 %1898
    %1900 = vrot.lane.b32.xlu0 %v1400, 80
    %v1901 = vpop.permute.xlu0 %1900
    %1902 = vrot.lane.b32.xlu0 %v1401, 80
    %v1903 = vpop.permute.xlu0 %1902
    %1904 = vrot.lane.b32.xlu0 %v1402, 80
    %v1905 = vpop.permute.xlu0 %1904
    %1906 = vrot.lane.b32.xlu0 %v1403, 80
    %v1907 = vpop.permute.xlu0 %1906
    %1908 = vrot.lane.b32.xlu0 %v1404, 80
    %v1909 = vpop.permute.xlu0 %1908
    %1910 = vrot.lane.b32.xlu0 %v1405, 80
    %v1911 = vpop.permute.xlu0 %1910
    %1912 = vrot.lane.b32.xlu0 %v1406, 80
    %v1913 = vpop.permute.xlu0 %1912
    %1914 = vrot.lane.b32.xlu0 %v1407, 80
    %v1915 = vpop.permute.xlu0 %1914
    %1916 = vrot.lane.b32.xlu0 %v1408, 80
    %v1917 = vpop.permute.xlu0 %1916
    %1918 = vrot.lane.b32.xlu0 %v1409, 80
    %v1919 = vpop.permute.xlu0 %1918
    %1920 = vrot.lane.b32.xlu0 %v1410, 80
    %v1921 = vpop.permute.xlu0 %1920
    %1922 = vrot.lane.b32.xlu0 %v1411, 80
    %v1923 = vpop.permute.xlu0 %1922
    %1924 = vrot.lane.b32.xlu0 %v1412, 80
    %v1925 = vpop.permute.xlu0 %1924
    %1926 = vrot.lane.b32.xlu0 %v1413, 80
    %v1927 = vpop.permute.xlu0 %1926
    %1928 = vrot.lane.b32.xlu0 %v1414, 80
    %v1929 = vpop.permute.xlu0 %1928
    %1962 = vrot.lane.b32.xlu0 %v1512, 96
    %v1963 = vpop.permute.xlu0 %1962
    %1964 = vrot.lane.b32.xlu0 %v1513, 96
    %v1965 = vpop.permute.xlu0 %1964
    %1966 = vrot.lane.b32.xlu0 %v1514, 96
    %v1967 = vpop.permute.xlu0 %1966
    %1968 = vrot.lane.b32.xlu0 %v1515, 96
    %v1969 = vpop.permute.xlu0 %1968
    %1970 = vrot.lane.b32.xlu0 %v1516, 96
    %v1971 = vpop.permute.xlu0 %1970
    %1972 = vrot.lane.b32.xlu0 %v1517, 96
    %v1973 = vpop.permute.xlu0 %1972
    %1974 = vrot.lane.b32.xlu0 %v1518, 96
    %v1975 = vpop.permute.xlu0 %1974
    %1976 = vrot.lane.b32.xlu0 %v1519, 96
    %v1977 = vpop.permute.xlu0 %1976
    %1978 = vrot.lane.b32.xlu0 %v1520, 96
    %v1979 = vpop.permute.xlu0 %1978
    %1980 = vrot.lane.b32.xlu0 %v1521, 96
    %v1981 = vpop.permute.xlu0 %1980
    %1982 = vrot.lane.b32.xlu0 %v1522, 96
    %v1983 = vpop.permute.xlu0 %1982
    %1984 = vrot.lane.b32.xlu0 %v1523, 96
    %v1985 = vpop.permute.xlu0 %1984
    %1986 = vrot.lane.b32.xlu0 %v1524, 96
    %v1987 = vpop.permute.xlu0 %1986
    %1988 = vrot.lane.b32.xlu0 %v1525, 96
    %v1989 = vpop.permute.xlu0 %1988
    %1990 = vrot.lane.b32.xlu0 %v1526, 96
    %v1991 = vpop.permute.xlu0 %1990
    %1992 = vrot.lane.b32.xlu0 %v1527, 96
    %v1993 = vpop.permute.xlu0 %1992
    %2026 = vrot.lane.b32.xlu0 %v1561, 112
    %v2027 = vpop.permute.xlu0 %2026
    %2028 = vrot.lane.b32.xlu0 %v1562, 112
    %v2029 = vpop.permute.xlu0 %2028
    %2030 = vrot.lane.b32.xlu0 %v1563, 112
    %v2031 = vpop.permute.xlu0 %2030
    %2032 = vrot.lane.b32.xlu0 %v1564, 112
    %v2033 = vpop.permute.xlu0 %2032
    %2034 = vrot.lane.b32.xlu0 %v1565, 112
    %v2035 = vpop.permute.xlu0 %2034
    %2036 = vrot.lane.b32.xlu0 %v1566, 112
    %v2037 = vpop.permute.xlu0 %2036
    %2038 = vrot.lane.b32.xlu0 %v1567, 112
    %v2039 = vpop.permute.xlu0 %2038
    %2040 = vrot.lane.b32.xlu0 %v1568, 112
    %v2041 = vpop.permute.xlu0 %2040
    %2042 = vrot.lane.b32.xlu0 %v1569, 112
    %v2043 = vpop.permute.xlu0 %2042
    %2044 = vrot.lane.b32.xlu0 %v1570, 112
    %v2045 = vpop.permute.xlu0 %2044
    %2046 = vrot.lane.b32.xlu0 %v1571, 112
    %v2047 = vpop.permute.xlu0 %2046
    %2048 = vrot.lane.b32.xlu0 %v1572, 112
    %v2049 = vpop.permute.xlu0 %2048
    %2050 = vrot.lane.b32.xlu0 %v1573, 112
    %v2051 = vpop.permute.xlu0 %2050
    %2052 = vrot.lane.b32.xlu0 %v1574, 112
    %v2053 = vpop.permute.xlu0 %2052
    %2054 = vrot.lane.b32.xlu0 %v1575, 112
    %v2055 = vpop.permute.xlu0 %2054
    %2056 = vrot.lane.b32.xlu0 %v1576, 112
    %v2057 = vpop.permute.xlu0 %2056
    %v2074 = vsel %vm638, %v964, %v1643
    %v2075 = vsel %vm638, %v965, %v1645
    %v2076 = vsel %vm638, %v966, %v1647
    %v2077 = vsel %vm638, %v967, %v1649
    %v2078 = vsel %vm638, %v968, %v1651
    %v2079 = vsel %vm638, %v969, %v1653
    %v2080 = vsel %vm638, %v970, %v1655
    %v2081 = vsel %vm638, %v971, %v1657
    %v2082 = vsel %vm638, %v972, %v1659
    %v2083 = vsel %vm638, %v973, %v1661
    %v2084 = vsel %vm638, %v974, %v1663
    %v2085 = vsel %vm638, %v975, %v1665
    %v2086 = vsel %vm638, %v976, %v1667
    %v2087 = vsel %vm638, %v977, %v1669
    %v2088 = vsel %vm638, %v978, %v1671
    %v2089 = vsel %vm638, %v979, %v1673
    %vm2090 = vcmask 261120
    %v2091 = vsel %vm2090, %v2074, %v1707
    %v2092 = vsel %vm2090, %v2075, %v1709
    %v2093 = vsel %vm2090, %v2076, %v1711
    %v2094 = vsel %vm2090, %v2077, %v1713
    %v2095 = vsel %vm2090, %v2078, %v1715
    %v2096 = vsel %vm2090, %v2079, %v1717
    %v2097 = vsel %vm2090, %v2080, %v1719
    %v2098 = vsel %vm2090, %v2081, %v1721
    %v2099 = vsel %vm2090, %v2082, %v1723
    %v2100 = vsel %vm2090, %v2083, %v1725
    %v2101 = vsel %vm2090, %v2084, %v1727
    %v2102 = vsel %vm2090, %v2085, %v1729
    %v2103 = vsel %vm2090, %v2086, %v1731
    %v2104 = vsel %vm2090, %v2087, %v1733
    %v2105 = vsel %vm2090, %v2088, %v1735
    %v2106 = vsel %vm2090, %v2089, %v1737
    %vm2107 = vcmask 392192
    %v2108 = vsel %vm2107, %v2091, %v1771
    %v2109 = vsel %vm2107, %v2092, %v1773
    %v2110 = vsel %vm2107, %v2093, %v1775
    %v2111 = vsel %vm2107, %v2094, %v1777
    %v2112 = vsel %vm2107, %v2095, %v1779
    %v2113 = vsel %vm2107, %v2096, %v1781
    %v2114 = vsel %vm2107, %v2097, %v1783
    %v2115 = vsel %vm2107, %v2098, %v1785
    %v2116 = vsel %vm2107, %v2099, %v1787
    %v2117 = vsel %vm2107, %v2100, %v1789
    %v2118 = vsel %vm2107, %v2101, %v1791
    %v2119 = vsel %vm2107, %v2102, %v1793
    %v2120 = vsel %vm2107, %v2103, %v1795
    %v2121 = vsel %vm2107, %v2104, %v1797
    %v2122 = vsel %vm2107, %v2105, %v1799
    %v2123 = vsel %vm2107, %v2106, %v1801
    %vm2124 = vcmask 523264
    %v2125 = vsel %vm2124, %v2108, %v1835
    %v2126 = vsel %vm2124, %v2109, %v1837
    %v2127 = vsel %vm2124, %v2110, %v1839
    %v2128 = vsel %vm2124, %v2111, %v1841
    %v2129 = vsel %vm2124, %v2112, %v1843
    %v2130 = vsel %vm2124, %v2113, %v1845
    %v2131 = vsel %vm2124, %v2114, %v1847
    %v2132 = vsel %vm2124, %v2115, %v1849
    %v2133 = vsel %vm2124, %v2116, %v1851
    %v2134 = vsel %vm2124, %v2117, %v1853
    %v2135 = vsel %vm2124, %v2118, %v1855
    %v2136 = vsel %vm2124, %v2119, %v1857
    %v2137 = vsel %vm2124, %v2120, %v1859
    %v2138 = vsel %vm2124, %v2121, %v1861
    %v2139 = vsel %vm2124, %v2122, %v1863
    %v2140 = vsel %vm2124, %v2123, %v1865
    %vm2141 = vcmask 654336
    %v2142 = vsel %vm2141, %v2125, %v1899
    %v2143 = vsel %vm2141, %v2126, %v1901
    %v2144 = vsel %vm2141, %v2127, %v1903
    %v2145 = vsel %vm2141, %v2128, %v1905
    %v2146 = vsel %vm2141, %v2129, %v1907
    %v2147 = vsel %vm2141, %v2130, %v1909
    %v2148 = vsel %vm2141, %v2131, %v1911
    %v2149 = vsel %vm2141, %v2132, %v1913
    %v2150 = vsel %vm2141, %v2133, %v1915
    %v2151 = vsel %vm2141, %v2134, %v1917
    %v2152 = vsel %vm2141, %v2135, %v1919
    %v2153 = vsel %vm2141, %v2136, %v1921
    %v2154 = vsel %vm2141, %v2137, %v1923
    %v2155 = vsel %vm2141, %v2138, %v1925
    %v2156 = vsel %vm2141, %v2139, %v1927
    %v2157 = vsel %vm2141, %v2140, %v1929
    %vm2158 = vcmask 785408
    %v2159 = vsel %vm2158, %v2142, %v1963
    %v2160 = vsel %vm2158, %v2143, %v1965
    %v2161 = vsel %vm2158, %v2144, %v1967
    %v2162 = vsel %vm2158, %v2145, %v1969
    %v2163 = vsel %vm2158, %v2146, %v1971
    %v2164 = vsel %vm2158, %v2147, %v1973
    %v2165 = vsel %vm2158, %v2148, %v1975
    %v2166 = vsel %vm2158, %v2149, %v1977
    %v2167 = vsel %vm2158, %v2150, %v1979
    %v2168 = vsel %vm2158, %v2151, %v1981
    %v2169 = vsel %vm2158, %v2152, %v1983
    %v2170 = vsel %vm2158, %v2153, %v1985
    %v2171 = vsel %vm2158, %v2154, %v1987
    %v2172 = vsel %vm2158, %v2155, %v1989
    %v2173 = vsel %vm2158, %v2156, %v1991
    %v2174 = vsel %vm2158, %v2157, %v1993
    %vm2175 = vcmask 916480
    %v2176 = vsel %vm2175, %v2159, %v2027
    %v2177 = vsel %vm2175, %v2160, %v2029
    %v2178 = vsel %vm2175, %v2161, %v2031
    %v2179 = vsel %vm2175, %v2162, %v2033
    %v2180 = vsel %vm2175, %v2163, %v2035
    %v2181 = vsel %vm2175, %v2164, %v2037
    %v2182 = vsel %vm2175, %v2165, %v2039
    %v2183 = vsel %vm2175, %v2166, %v2041
    %v2184 = vsel %vm2175, %v2167, %v2043
    %v2185 = vsel %vm2175, %v2168, %v2045
    %v2186 = vsel %vm2175, %v2169, %v2047
    %v2187 = vsel %vm2175, %v2170, %v2049
    %v2188 = vsel %vm2175, %v2171, %v2051
    %v2189 = vsel %vm2175, %v2172, %v2053
    %v2190 = vsel %vm2175, %v2173, %v2055
    %v2191 = vsel %vm2175, %v2174, %v2057
    %v2192 = vpack.c.bf16 %v2177, %v2176
    %v2193 = vpack.c.bf16 %v1611, %v1610
    %v2194 = vpack.c.bf16 %v2179, %v2178
    %v2195 = vpack.c.bf16 %v1613, %v1612
    %v2196 = vpack.c.bf16 %v2181, %v2180
    %v2197 = vpack.c.bf16 %v1615, %v1614
    %v2198 = vpack.c.bf16 %v2183, %v2182
    %v2199 = vpack.c.bf16 %v1617, %v1616
    %v2200 = vpack.c.bf16 %v2185, %v2184
    %v2201 = vpack.c.bf16 %v1619, %v1618
    %v2202 = vpack.c.bf16 %v2187, %v2186
    %v2203 = vpack.c.bf16 %v1621, %v1620
    %v2204 = vpack.c.bf16 %v2189, %v2188
    %v2205 = vpack.c.bf16 %v1623, %v1622
    %v2206 = vpack.c.bf16 %v2191, %v2190
    %v2207 = vpack.c.bf16 %v1625, %v1624
    %v2208 = vld [vmem:[%s2] sm:$0xf]
    %v2209 = vld [vmem:[%s2 + $0x4] sm:$0xf]
    %v2210 = vld [vmem:[%s2 + $0x8] sm:$0xf]
    %v2211 = vld [vmem:[%s2 + $0xc] sm:$0xf]
    %v2212 = vld [vmem:[%s2 + $0x10] sm:$0xf]
    %v2213 = vld [vmem:[%s2 + $0x14] sm:$0xf]
    %v2214 = vld [vmem:[%s2 + $0x18] sm:$0xf]
    %v2215 = vld [vmem:[%s2 + $0x1c] sm:$0xf]
    %v2216 = vld [vmem:[%s2 + $0x20] sm:$0xf]
    %v2217 = vld [vmem:[%s2 + $0x24] sm:$0xf]
    %v2218 = vld [vmem:[%s2 + $0x28] sm:$0xf]
    %v2219 = vld [vmem:[%s2 + $0x2c] sm:$0xf]
    %v2220 = vld [vmem:[%s2 + $0x30] sm:$0xf]
    %v2221 = vld [vmem:[%s2 + $0x34] sm:$0xf]
    %v2222 = vld [vmem:[%s2 + $0x38] sm:$0xf]
    %v2223 = vld [vmem:[%s2 + $0x3c] sm:$0xf]
    %v2224 = vld [vmem:[%s2 + $0x40] sm:$0xf]
    %v2225 = vld [vmem:[%s2 + $0x44] sm:$0xf]
    %v2226 = vld [vmem:[#allocation3 + $0x5] ss:$0 sm:$0xff]
    %v2245 = vunpack.c.l.b16 %v2208
    %v2246 = vunpack.c.l.b16 %v2209
    %v2247 = vunpack.c.l.b16 %v2210
    %v2248 = vunpack.c.l.b16 %v2211
    %v2249 = vunpack.c.l.b16 %v2212
    %v2250 = vunpack.c.l.b16 %v2213
    %v2251 = vunpack.c.l.b16 %v2214
    %v2252 = vunpack.c.l.b16 %v2215
    %v2253 = vunpack.c.l.b16 %v2216
    %v2254 = vunpack.c.l.b16 %v2217
    %v2255 = vunpack.c.l.b16 %v2218
    %v2256 = vunpack.c.l.b16 %v2219
    %v2257 = vunpack.c.l.b16 %v2220
    %v2258 = vunpack.c.l.b16 %v2221
    %v2259 = vunpack.c.l.b16 %v2222
    %v2260 = vunpack.c.l.b16 %v2223
    %v2261 = vunpack.c.l.b16 %v2224
    %v2262 = vunpack.c.l.b16 %v2225
    %v2263 = vpack.c.b16 %v2246, %v2245
    %v2264 = vpack.c.b16 %v2248, %v2247
    %v2265 = vpack.c.b16 %v2250, %v2249
    %v2266 = vpack.c.b16 %v2252, %v2251
    %v2267 = vpack.c.b16 %v2254, %v2253
    %v2268 = vpack.c.b16 %v2256, %v2255
    %v2269 = vpack.c.b16 %v2258, %v2257
    %v2270 = vpack.c.b16 %v2260, %v2259
    %v2271 = vpack.c.b16 %v2262, %v2261
    %v2282 = vsel %vm638, %v2193, 0
    %v2285 = vsel %vm638, %v2195, 0
    %v2288 = vsel %vm638, %v2197, 0
    %v2291 = vsel %vm638, %v2199, 0
    %v2294 = vsel %vm638, %v2201, 0
    %v2297 = vsel %vm638, %v2203, 0
    %v2300 = vsel %vm638, %v2205, 0
    %v2303 = vsel %vm638, %v2207, 0
    %2305 = vmatpush.bf16.msra.mxu0 %v2270
    %2306 = vmatpush.bf16.msra.mxu0 %v2269
    %2307 = vmatpush.bf16.msra.mxu0 %v2268
    %2308 = vmatpush.bf16.msra.mxu0 %v2267
    %2309 = vmatpush.bf16.msra.mxu0 %v2266
    %2310 = vmatpush.bf16.msra.mxu0 %v2265
    %2311 = vmatpush.bf16.msra.mxu0 %v2264
    %2312 = vmatpush.bf16.msra.mxu0 %v2263
    %2313 = vmatmul.bf16.gmra.mxu0 %v2192
    %v2314 = vpop.f32.mrf.mxu0
    %v2315 = vadd.f32 %v2226, %v2314
    %v2316 = vpop.f32.mrf.mxu0
    %v2317 = vadd.f32 %v2226, %v2316
    %2318 = vmatmul.bf16.gmra.mxu0 %v2194
    %v2319 = vpop.f32.mrf.mxu0
    %v2320 = vadd.f32 %v2226, %v2319
    %v2321 = vpop.f32.mrf.mxu0
    %v2322 = vadd.f32 %v2226, %v2321
    %2323 = vmatmul.bf16.gmra.mxu0 %v2196
    %v2324 = vpop.f32.mrf.mxu0
    %v2325 = vadd.f32 %v2226, %v2324
    %v2326 = vpop.f32.mrf.mxu0
    %v2327 = vadd.f32 %v2226, %v2326
    %2328 = vmatmul.bf16.gmra.mxu0 %v2198
    %v2329 = vpop.f32.mrf.mxu0
    %v2330 = vadd.f32 %v2226, %v2329
    %v2331 = vpop.f32.mrf.mxu0
    %v2332 = vadd.f32 %v2226, %v2331
    %2333 = vmatmul.bf16.gmra.mxu0 %v2200
    %v2334 = vpop.f32.mrf.mxu0
    %v2335 = vadd.f32 %v2226, %v2334
    %v2336 = vpop.f32.mrf.mxu0
    %v2337 = vadd.f32 %v2226, %v2336
    %2338 = vmatmul.bf16.gmra.mxu0 %v2202
    %v2339 = vpop.f32.mrf.mxu0
    %v2340 = vadd.f32 %v2226, %v2339
    %v2341 = vpop.f32.mrf.mxu0
    %v2342 = vadd.f32 %v2226, %v2341
    %2343 = vmatmul.bf16.gmra.mxu0 %v2204
    %v2344 = vpop.f32.mrf.mxu0
    %v2345 = vadd.f32 %v2226, %v2344
    %v2346 = vpop.f32.mrf.mxu0
    %v2347 = vadd.f32 %v2226, %v2346
    %2348 = vmatmul.bf16.gmra.mxu0 %v2206
    %v2349 = vpop.f32.mrf.mxu0
    %v2350 = vadd.f32 %v2226, %v2349
    %v2351 = vpop.f32.mrf.mxu0
    %v2352 = vadd.f32 %v2226, %v2351
    %2353 = vdwg.mxu0
    %2354 = vmatpush.bf16.msra.mxu0 0
    %2355 = vmatpush.bf16.msra.mxu0 0
    %2356 = vmatpush.bf16.msra.mxu0 0
    %2357 = vmatpush.bf16.msra.mxu0 0
    %2358 = vmatpush.bf16.msra.mxu0 0
    %2359 = vmatpush.bf16.msra.mxu0 0
    %2360 = vmatpush.bf16.msra.mxu0 0
    %2361 = vmatpush.bf16.msra.mxu0 %v2271
    %2362 = vmatmul.bf16.gmra.mxu0 %v2282
    %v2363 = vpop.f32.mrf.mxu0
    %v2364 = vadd.f32 %v2315, %v2363
    %v2365 = vpop.f32.mrf.mxu0
    %v2366 = vadd.f32 %v2317, %v2365
    %2367 = vmatmul.bf16.gmra.mxu0 %v2285
    %v2368 = vpop.f32.mrf.mxu0
    %v2369 = vadd.f32 %v2320, %v2368
    %v2370 = vpop.f32.mrf.mxu0
    %v2371 = vadd.f32 %v2322, %v2370
    %2372 = vmatmul.bf16.gmra.mxu0 %v2288
    %v2373 = vpop.f32.mrf.mxu0
    %v2374 = vadd.f32 %v2325, %v2373
    %v2375 = vpop.f32.mrf.mxu0
    %v2376 = vadd.f32 %v2327, %v2375
    %2377 = vmatmul.bf16.gmra.mxu0 %v2291
    %v2378 = vpop.f32.mrf.mxu0
    %v2379 = vadd.f32 %v2330, %v2378
    %v2380 = vpop.f32.mrf.mxu0
    %v2381 = vadd.f32 %v2332, %v2380
    %2382 = vmatmul.bf16.gmra.mxu0 %v2294
    %v2383 = vpop.f32.mrf.mxu0
    %v2384 = vadd.f32 %v2335, %v2383
    %v2385 = vpop.f32.mrf.mxu0
    %v2386 = vadd.f32 %v2337, %v2385
    %2387 = vmatmul.bf16.gmra.mxu0 %v2297
    %v2388 = vpop.f32.mrf.mxu0
    %v2389 = vadd.f32 %v2340, %v2388
    %v2390 = vpop.f32.mrf.mxu0
    %v2391 = vadd.f32 %v2342, %v2390
    %2392 = vmatmul.bf16.gmra.mxu0 %v2300
    %v2393 = vpop.f32.mrf.mxu0
    %v2394 = vadd.f32 %v2345, %v2393
    %v2395 = vpop.f32.mrf.mxu0
    %v2396 = vadd.f32 %v2347, %v2395
    %2397 = vmatmul.bf16.gmra.mxu0 %v2303
    %v2398 = vpop.f32.mrf.mxu0
    %v2399 = vadd.f32 %v2350, %v2398
    %v2400 = vpop.f32.mrf.mxu0
    %v2401 = vadd.f32 %v2352, %v2400
    %2402 = vdwg.mxu0
    %v2403 = vmax.f32 %v2364, 0.0
    %v2404 = vmax.f32 %v2366, 0.0
    %v2405 = vmax.f32 %v2369, 0.0
    %v2406 = vmax.f32 %v2371, 0.0
    %v2407 = vmax.f32 %v2374, 0.0
    %v2408 = vmax.f32 %v2376, 0.0
    %v2409 = vmax.f32 %v2379, 0.0
    %v2410 = vmax.f32 %v2381, 0.0
    %v2411 = vmax.f32 %v2384, 0.0
    %v2412 = vmax.f32 %v2386, 0.0
    %v2413 = vmax.f32 %v2389, 0.0
    %v2414 = vmax.f32 %v2391, 0.0
    %v2415 = vmax.f32 %v2394, 0.0
    %v2416 = vmax.f32 %v2396, 0.0
    %v2417 = vmax.f32 %v2399, 0.0
    %v2418 = vmax.f32 %v2401, 0.0
    %v2419 = vsel %vm2124, %v2403, 0.0
    %v2420 = vsel %vm2124, %v2404, 0.0
    %v2421 = vadd.f32 %v2419, %v2420
    %v2422 = vsel %vm2124, %v2405, 0.0
    %v2423 = vadd.f32 %v2421, %v2422
    %v2424 = vsel %vm2124, %v2406, 0.0
    %v2425 = vadd.f32 %v2423, %v2424
    %v2426 = vsel %vm2124, %v2407, 0.0
    %v2427 = vadd.f32 %v2425, %v2426
    %v2428 = vsel %vm2124, %v2408, 0.0
    %v2429 = vadd.f32 %v2427, %v2428
    %v2430 = vsel %vm2124, %v2409, 0.0
    %v2431 = vadd.f32 %v2429, %v2430
    %v2432 = vsel %vm2124, %v2410, 0.0
    %v2433 = vadd.f32 %v2431, %v2432
    %v2434 = vrot.slane %v2433, 4
    %v2435 = vadd.f32 %v2433, %v2434
    %v2436 = vrot.slane %v2435, 2
    %v2437 = vadd.f32 %v2435, %v2436
    %v2438 = vrot.slane %v2437, 1
    %v2439 = vadd.f32 %v2437, %v2438
    %v2440 = vsel %vm2124, %v2411, 0.0
    %v2441 = vsel %vm2124, %v2412, 0.0
    %v2442 = vadd.f32 %v2440, %v2441
    %v2443 = vsel %vm2124, %v2413, 0.0
    %v2444 = vadd.f32 %v2442, %v2443
    %v2445 = vsel %vm2124, %v2414, 0.0
    %v2446 = vadd.f32 %v2444, %v2445
    %v2447 = vsel %vm2124, %v2415, 0.0
    %v2448 = vadd.f32 %v2446, %v2447
    %v2449 = vsel %vm2124, %v2416, 0.0
    %v2450 = vadd.f32 %v2448, %v2449
    %v2451 = vsel %vm2124, %v2417, 0.0
    %v2452 = vadd.f32 %v2450, %v2451
    %v2453 = vsel %vm2124, %v2418, 0.0
    %v2454 = vadd.f32 %v2452, %v2453
    %v2455 = vrot.slane %v2454, 4
    %v2456 = vadd.f32 %v2454, %v2455
    %v2457 = vrot.slane %v2456, 2
    %v2458 = vadd.f32 %v2456, %v2457
    %v2459 = vrot.slane %v2458, 1
    %v2460 = vadd.f32 %v2458, %v2459
    %v2461 = vrcp.pop 64.0
    %v2462 = vmul.f32 64.0, %v2461
    %v2463 = vsub.f32 1.0, %v2462
    %v2464 = vmul.f32 %v2461, %v2463
    %v2465 = vadd.f32 %v2461, %v2464
    %vm2466 = vweird.f32 %v2461
    %v2467 = vsel %vm2466, %v2461, %v2465
    %v2468 = vmul.f32 %v2439, %v2467
    %v2469 = vmul.f32 %v2460, %v2467
    %v2470 = vld [vmem:[%s0] sm:$0x1]
    %v2471 = vld [vmem:[#allocation5] sm:$0x33]
    %v2472 = vld [vmem:[#allocation5 + $0x8] sm:$0x33]
    %v2473 = vpack.c.bf16 %v2468, %v2468
    %v2474 = vpack.c.bf16 %v2469, %v2469
    %v2475 = vld [vmem:[#allocation5 + $0x20] sm:$0xff]
    %v2476 = vld [vmem:[#allocation5 + $0x28] sm:$0xff]
    %v2477 = vld [vmem:[#allocation5 + $0x30] sm:$0xff]
    %v2478 = vld [vmem:[#allocation5 + $0x38] sm:$0xff]
    %v2479 = vld [vmem:[#allocation5 + $0x40] sm:$0xff]
    %v2480 = vld [vmem:[#allocation5 + $0x48] sm:$0xff]
    %v2481 = vld [vmem:[#allocation5 + $0x50] sm:$0xff]
    %v2482 = vld [vmem:[#allocation5 + $0x58] sm:$0xff]
    %v2483 = vld [vmem:[#allocation5 + $0x60] sm:$0xff]
    %v2484 = vld [vmem:[#allocation5 + $0x68] sm:$0xff]
    %v2485 = vld [vmem:[#allocation5 + $0x70] sm:$0xff]
    %v2486 = vld [vmem:[#allocation5 + $0x78] sm:$0xff]
    %v2487 = vld [vmem:[#allocation5 + $0x80] sm:$0xff]
    %v2488 = vld [vmem:[#allocation5 + $0x88] sm:$0xff]
    %v2489 = vld [vmem:[#allocation5 + $0x90] sm:$0xff]
    %v2490 = vld [vmem:[#allocation5 + $0x98] sm:$0xff]
    %v2493 = vunpack.c.l.b16 %v2473
    %v2494 = vunpack.c.l.b16 %v2474
    %vm2495 = vcmask 1041409
    %v2496 = vsel %vm2495, %v2494, %v2493
    %v2497 = vpack.c.b16 %v2496, %v2496
    %v2514 = vunpack.c.l.b16 %v2475
    %v2515 = vunpack.c.h.b16 %v2475
    %v2516 = vunpack.c.l.b16 %v2476
    %v2517 = vunpack.c.h.b16 %v2476
    %v2518 = vunpack.c.l.b16 %v2477
    %v2519 = vunpack.c.h.b16 %v2477
    %v2520 = vunpack.c.l.b16 %v2478
    %v2521 = vunpack.c.h.b16 %v2478
    %v2522 = vunpack.c.l.b16 %v2479
    %v2523 = vunpack.c.h.b16 %v2479
    %v2524 = vunpack.c.l.b16 %v2480
    %v2525 = vunpack.c.h.b16 %v2480
    %v2526 = vunpack.c.l.b16 %v2481
    %v2527 = vunpack.c.h.b16 %v2481
    %v2528 = vunpack.c.l.b16 %v2482
    %v2529 = vunpack.c.h.b16 %v2482
    %v2530 = vunpack.c.l.b16 %v2483
    %v2531 = vunpack.c.h.b16 %v2483
    %v2532 = vunpack.c.l.b16 %v2484
    %v2533 = vunpack.c.h.b16 %v2484
    %v2534 = vunpack.c.l.b16 %v2485
    %v2535 = vunpack.c.h.b16 %v2485
    %v2536 = vunpack.c.l.b16 %v2486
    %v2537 = vunpack.c.h.b16 %v2486
    %v2538 = vunpack.c.l.b16 %v2487
    %v2539 = vunpack.c.h.b16 %v2487
    %v2540 = vunpack.c.l.b16 %v2488
    %v2541 = vunpack.c.h.b16 %v2488
    %v2542 = vunpack.c.l.b16 %v2489
    %v2543 = vunpack.c.h.b16 %v2489
    %v2544 = vunpack.c.l.b16 %v2490
    %v2545 = vunpack.c.h.b16 %v2490
    %v2546 = vpack.c.b16 %v2518, %v2514
    %v2547 = vpack.c.b16 %v2519, %v2515
    %v2548 = vpack.c.b16 %v2520, %v2516
    %v2549 = vpack.c.b16 %v2521, %v2517
    %v2550 = vpack.c.b16 %v2526, %v2522
    %v2551 = vpack.c.b16 %v2527, %v2523
    %v2552 = vpack.c.b16 %v2528, %v2524
    %v2553 = vpack.c.b16 %v2529, %v2525
    %v2554 = vpack.c.b16 %v2534, %v2530
    %v2555 = vpack.c.b16 %v2535, %v2531
    %v2556 = vpack.c.b16 %v2536, %v2532
    %v2557 = vpack.c.b16 %v2537, %v2533
    %v2558 = vpack.c.b16 %v2542, %v2538
    %v2559 = vpack.c.b16 %v2543, %v2539
    %v2560 = vpack.c.b16 %v2544, %v2540
    %v2561 = vpack.c.b16 %v2545, %v2541
    %v2579 = vsel %vm2124, %v2497, 0
    %2581 = vmatpush.bf16.msra.mxu0 0
    %2582 = vmatpush.bf16.msra.mxu0 0
    %2583 = vmatpush.bf16.msra.mxu0 0
    %2584 = vmatpush.bf16.msra.mxu0 0
    %2585 = vmatpush.bf16.msra.mxu0 %v2558
    %2586 = vmatpush.bf16.msra.mxu0 %v2554
    %2587 = vmatpush.bf16.msra.mxu0 %v2550
    %2588 = vmatpush.bf16.msra.mxu0 %v2546
    %2589 = vmatmul.bf16.gmra.mxu0 %v2579
    %v2590 = vpop.f32.mrf.mxu0
    %v2591 = vadd.f32 0.0, %v2590
    %v2592 = vpop.f32.mrf.mxu0
    %2593 = vdwg.mxu0
    %2594 = vmatpush.bf16.msra.mxu0 0
    %2595 = vmatpush.bf16.msra.mxu0 0
    %2596 = vmatpush.bf16.msra.mxu0 0
    %2597 = vmatpush.bf16.msra.mxu0 0
    %2598 = vmatpush.bf16.msra.mxu0 %v2559
    %2599 = vmatpush.bf16.msra.mxu0 %v2555
    %2600 = vmatpush.bf16.msra.mxu0 %v2551
    %2601 = vmatpush.bf16.msra.mxu0 %v2547
    %2602 = vmatmul.bf16.gmra.mxu0 %v2579
    %v2603 = vpop.f32.mrf.mxu0
    %v2604 = vadd.f32 0.0, %v2603
    %v2605 = vpop.f32.mrf.mxu0
    %2606 = vdwg.mxu0
    %2607 = vmatpush.bf16.msra.mxu0 0
    %2608 = vmatpush.bf16.msra.mxu0 0
    %2609 = vmatpush.bf16.msra.mxu0 0
    %2610 = vmatpush.bf16.msra.mxu0 0
    %2611 = vmatpush.bf16.msra.mxu0 %v2560
    %2612 = vmatpush.bf16.msra.mxu0 %v2556
    %2613 = vmatpush.bf16.msra.mxu0 %v2552
    %2614 = vmatpush.bf16.msra.mxu0 %v2548
    %2615 = vmatmul.bf16.gmra.mxu0 %v2579
    %v2616 = vpop.f32.mrf.mxu0
    %v2617 = vadd.f32 0.0, %v2616
    %v2618 = vpop.f32.mrf.mxu0
    %2619 = vdwg.mxu0
    %2620 = vmatpush.bf16.msra.mxu0 0
    %2621 = vmatpush.bf16.msra.mxu0 0
    %2622 = vmatpush.bf16.msra.mxu0 0
    %2623 = vmatpush.bf16.msra.mxu0 0
    %2624 = vmatpush.bf16.msra.mxu0 %v2561
    %2625 = vmatpush.bf16.msra.mxu0 %v2557
    %2626 = vmatpush.bf16.msra.mxu0 %v2553
    %2627 = vmatpush.bf16.msra.mxu0 %v2549
    %2628 = vmatmul.bf16.gmra.mxu0 %v2579
    %v2629 = vpop.f32.mrf.mxu0
    %v2630 = vadd.f32 0.0, %v2629
    %v2631 = vpop.f32.mrf.mxu0
    %2632 = vdwg.mxu0
    %v2635 = vunpack.c.l.b16 %v2471
    %v2636 = vunpack.c.h.b16 %v2471
    %v2637 = vunpack.c.l.b16 %v2472
    %v2638 = vunpack.c.h.b16 %v2472
    %v2639 = vpack.c.b16 %v2635, %v2635
    %v2640 = vpack.c.b16 %v2636, %v2636
    %v2641 = vpack.c.b16 %v2637, %v2637
    %v2642 = vpack.c.b16 %v2638, %v2638
    %vm2643 = vcmask 31744
    %v2645 = vsel %vm2643, %v2470, 0
    %vm2647 = vcmask 1041408
    %v2649 = vsel %vm2647, %v2639, 0
    %v2652 = vsel %vm2647, %v2640, 0
    %v2655 = vsel %vm2647, %v2641, 0
    %v2658 = vsel %vm2647, %v2642, 0
    %2660 = vmatpush.bf16.msra.mxu0 0
    %2661 = vmatpush.bf16.msra.mxu0 0
    %2662 = vmatpush.bf16.msra.mxu0 0
    %2663 = vmatpush.bf16.msra.mxu0 0
    %2664 = vmatpush.bf16.msra.mxu0 0
    %2665 = vmatpush.bf16.msra.mxu0 0
    %2666 = vmatpush.bf16.msra.mxu0 0
    %2667 = vmatpush.bf16.msra.mxu0 %v2649
    %2668 = vmatmul.bf16.gmra.mxu0 %v2645
    %v2669 = vpop.f32.mrf.mxu0
    %v2670 = vadd.f32 %v2591, %v2669
    %v2671 = vpop.f32.mrf.mxu0
    %2672 = vdwg.mxu0
    %2673 = vmatpush.bf16.msra.mxu0 0
    %2674 = vmatpush.bf16.msra.mxu0 0
    %2675 = vmatpush.bf16.msra.mxu0 0
    %2676 = vmatpush.bf16.msra.mxu0 0
    %2677 = vmatpush.bf16.msra.mxu0 0
    %2678 = vmatpush.bf16.msra.mxu0 0
    %2679 = vmatpush.bf16.msra.mxu0 0
    %2680 = vmatpush.bf16.msra.mxu0 %v2652
    %2681 = vmatmul.bf16.gmra.mxu0 %v2645
    %v2682 = vpop.f32.mrf.mxu0
    %v2683 = vadd.f32 %v2604, %v2682
    %v2684 = vpop.f32.mrf.mxu0
    %2685 = vdwg.mxu0
    %2686 = vmatpush.bf16.msra.mxu0 0
    %2687 = vmatpush.bf16.msra.mxu0 0
    %2688 = vmatpush.bf16.msra.mxu0 0
    %2689 = vmatpush.bf16.msra.mxu0 0
    %2690 = vmatpush.bf16.msra.mxu0 0
    %2691 = vmatpush.bf16.msra.mxu0 0
    %2692 = vmatpush.bf16.msra.mxu0 0
    %2693 = vmatpush.bf16.msra.mxu0 %v2655
    %2694 = vmatmul.bf16.gmra.mxu0 %v2645
    %v2695 = vpop.f32.mrf.mxu0
    %v2696 = vadd.f32 %v2617, %v2695
    %v2697 = vpop.f32.mrf.mxu0
    %2698 = vdwg.mxu0
    %2699 = vmatpush.bf16.msra.mxu0 0
    %2700 = vmatpush.bf16.msra.mxu0 0
    %2701 = vmatpush.bf16.msra.mxu0 0
    %2702 = vmatpush.bf16.msra.mxu0 0
    %2703 = vmatpush.bf16.msra.mxu0 0
    %2704 = vmatpush.bf16.msra.mxu0 0
    %2705 = vmatpush.bf16.msra.mxu0 0
    %2706 = vmatpush.bf16.msra.mxu0 %v2658
    %2707 = vmatmul.bf16.gmra.mxu0 %v2645
    %v2708 = vpop.f32.mrf.mxu0
    %v2709 = vadd.f32 %v2630, %v2708
    %v2710 = vpop.f32.mrf.mxu0
    %2711 = vdwg.mxu0
    %v2712 = vld [vmem:[#allocation3] ss:$8 sm:$0xf]
    %v2714 = vperm.slane %v2712, 0
    %v2715 = vperm.slane %v2712, 1
    %v2716 = vperm.slane %v2712, 2
    %v2717 = vperm.slane %v2712, 3
    %v2722 = vadd.f32 %v2670, %v2714
    %v2723 = vadd.f32 %v2683, %v2715
    %v2724 = vadd.f32 %v2696, %v2716
    %v2725 = vadd.f32 %v2709, %v2717
    %v2726 = vmax.f32 %v2722, 0.0
    %v2727 = vmax.f32 %v2723, 0.0
    %v2728 = vmax.f32 %v2724, 0.0
    %v2729 = vmax.f32 %v2725, 0.0
    %v2730 = vpack.c.bf16 %v2726, %v2726
    %v2731 = vpack.c.bf16 %v2727, %v2727
    %v2732 = vpack.c.bf16 %v2728, %v2728
    %v2733 = vpack.c.bf16 %v2729, %v2729
    %v2734 = vld [vmem:[#allocation5 + $0xa0] sm:$0xff]
    %v2735 = vld [vmem:[#allocation5 + $0xa8] sm:$0xff]
    %v2736 = vld [vmem:[#allocation5 + $0xb0] sm:$0xff]
    %v2737 = vld [vmem:[#allocation5 + $0xb8] sm:$0xff]
    %v2738 = vld [vmem:[#allocation5 + $0xc0] sm:$0xff]
    %v2739 = vld [vmem:[#allocation5 + $0xc8] sm:$0xff]
    %v2740 = vld [vmem:[#allocation5 + $0xd0] sm:$0xff]
    %v2741 = vld [vmem:[#allocation5 + $0xd8] sm:$0xff]
    %v2742 = vld [vmem:[#allocation5 + $0xe0] sm:$0xff]
    %v2743 = vld [vmem:[#allocation5 + $0xe8] sm:$0xff]
    %v2744 = vld [vmem:[#allocation5 + $0xf0] sm:$0xff]
    %v2745 = vld [vmem:[#allocation5 + $0xf8] sm:$0xff]
    %v2746 = vld [vmem:[#allocation5 + $0x100] sm:$0xff]
    %v2747 = vld [vmem:[#allocation5 + $0x108] sm:$0xff]
    %v2748 = vld [vmem:[#allocation5 + $0x110] sm:$0xff]
    %v2749 = vld [vmem:[#allocation5 + $0x118] sm:$0xff]
    %v2750 = vld [vmem:[#allocation5 + $0x120] sm:$0xff]
    %v2751 = vld [vmem:[#allocation5 + $0x128] sm:$0xff]
    %v2752 = vld [vmem:[#allocation5 + $0x130] sm:$0xff]
    %v2753 = vld [vmem:[#allocation5 + $0x138] sm:$0xff]
    %v2754 = vld [vmem:[#allocation5 + $0x140] sm:$0xff]
    %v2755 = vld [vmem:[#allocation5 + $0x148] sm:$0xff]
    %v2756 = vld [vmem:[#allocation5 + $0x150] sm:$0xff]
    %v2757 = vld [vmem:[#allocation5 + $0x158] sm:$0xff]
    %v2758 = vld [vmem:[#allocation5 + $0x160] sm:$0xff]
    %v2759 = vld [vmem:[#allocation5 + $0x168] sm:$0xff]
    %v2760 = vld [vmem:[#allocation5 + $0x170] sm:$0xff]
    %v2761 = vld [vmem:[#allocation5 + $0x178] sm:$0xff]
    %v2762 = vld [vmem:[#allocation5 + $0x180] sm:$0xff]
    %v2763 = vld [vmem:[#allocation5 + $0x188] sm:$0xff]
    %v2764 = vld [vmem:[#allocation5 + $0x190] sm:$0xff]
    %v2765 = vld [vmem:[#allocation5 + $0x198] sm:$0xff]
    %v2766 = vld [vmem:[#allocation5 + $0x1a0] sm:$0xff]
    %v2767 = vld [vmem:[#allocation5 + $0x1a8] sm:$0xff]
    %v2768 = vld [vmem:[#allocation5 + $0x1b0] sm:$0xff]
    %v2769 = vld [vmem:[#allocation5 + $0x1b8] sm:$0xff]
    %v2770 = vld [vmem:[#allocation5 + $0x1c0] sm:$0xff]
    %v2771 = vld [vmem:[#allocation5 + $0x1c8] sm:$0xff]
    %v2772 = vld [vmem:[#allocation5 + $0x1d0] sm:$0xff]
    %v2773 = vld [vmem:[#allocation5 + $0x1d8] sm:$0xff]
    %v2774 = vld [vmem:[#allocation5 + $0x1e0] sm:$0xff]
    %v2775 = vld [vmem:[#allocation5 + $0x1e8] sm:$0xff]
    %v2776 = vld [vmem:[#allocation5 + $0x1f0] sm:$0xff]
    %v2777 = vld [vmem:[#allocation5 + $0x1f8] sm:$0xff]
    %v2778 = vld [vmem:[#allocation5 + $0x200] sm:$0xff]
    %v2779 = vld [vmem:[#allocation5 + $0x208] sm:$0xff]
    %v2780 = vld [vmem:[#allocation5 + $0x210] sm:$0xff]
    %v2781 = vld [vmem:[#allocation5 + $0x218] sm:$0xff]
    %v2782 = vld [vmem:[#allocation5 + $0x220] sm:$0xff]
    %v2783 = vld [vmem:[#allocation5 + $0x228] sm:$0xff]
    %v2784 = vld [vmem:[#allocation5 + $0x230] sm:$0xff]
    %v2785 = vld [vmem:[#allocation5 + $0x238] sm:$0xff]
    %v2786 = vld [vmem:[#allocation5 + $0x240] sm:$0xff]
    %v2787 = vld [vmem:[#allocation5 + $0x248] sm:$0xff]
    %v2788 = vld [vmem:[#allocation5 + $0x250] sm:$0xff]
    %v2789 = vld [vmem:[#allocation5 + $0x258] sm:$0xff]
    %v2790 = vld [vmem:[#allocation5 + $0x260] sm:$0xff]
    %v2791 = vld [vmem:[#allocation5 + $0x268] sm:$0xff]
    %v2792 = vld [vmem:[#allocation5 + $0x270] sm:$0xff]
    %v2793 = vld [vmem:[#allocation5 + $0x278] sm:$0xff]
    %v2794 = vld [vmem:[#allocation5 + $0x280] sm:$0xff]
    %v2795 = vld [vmem:[#allocation5 + $0x288] sm:$0xff]
    %v2796 = vld [vmem:[#allocation5 + $0x290] sm:$0xff]
    %v2797 = vld [vmem:[#allocation5 + $0x298] sm:$0xff]
    %v2798 = vld [vmem:[#allocation5 + $0x2a0] sm:$0xff]
    %v2799 = vld [vmem:[#allocation5 + $0x2a8] sm:$0xff]
    %v2800 = vld [vmem:[#allocation5 + $0x2b0] sm:$0xff]
    %v2801 = vld [vmem:[#allocation5 + $0x2b8] sm:$0xff]
    %v2802 = vld [vmem:[#allocation5 + $0x2c0] sm:$0xff]
    %v2803 = vld [vmem:[#allocation5 + $0x2c8] sm:$0xff]
    %v2804 = vld [vmem:[#allocation5 + $0x2d0] sm:$0xff]
    %v2805 = vld [vmem:[#allocation5 + $0x2d8] sm:$0xff]
    %v2806 = vld [vmem:[#allocation5 + $0x2e0] sm:$0xff]
    %v2807 = vld [vmem:[#allocation5 + $0x2e8] sm:$0xff]
    %v2808 = vld [vmem:[#allocation5 + $0x2f0] sm:$0xff]
    %v2809 = vld [vmem:[#allocation5 + $0x2f8] sm:$0xff]
    %v2810 = vld [vmem:[#allocation5 + $0x300] sm:$0xff]
    %v2811 = vld [vmem:[#allocation5 + $0x308] sm:$0xff]
    %v2812 = vld [vmem:[#allocation5 + $0x310] sm:$0xff]
    %v2813 = vld [vmem:[#allocation5 + $0x318] sm:$0xff]
    %v2814 = vld [vmem:[#allocation5 + $0x320] sm:$0xff]
    %v2815 = vld [vmem:[#allocation5 + $0x328] sm:$0xff]
    %v2816 = vld [vmem:[#allocation5 + $0x330] sm:$0xff]
    %v2817 = vld [vmem:[#allocation5 + $0x338] sm:$0xff]
    %v2818 = vld [vmem:[#allocation5 + $0x340] sm:$0xff]
    %v2819 = vld [vmem:[#allocation5 + $0x348] sm:$0xff]
    %v2820 = vld [vmem:[#allocation5 + $0x350] sm:$0xff]
    %v2821 = vld [vmem:[#allocation5 + $0x358] sm:$0xff]
    %v2822 = vld [vmem:[#allocation5 + $0x360] sm:$0xff]
    %v2823 = vld [vmem:[#allocation5 + $0x368] sm:$0xff]
    %v2824 = vld [vmem:[#allocation5 + $0x370] sm:$0xff]
    %v2825 = vld [vmem:[#allocation5 + $0x378] sm:$0xff]
    %v2826 = vld [vmem:[#allocation5 + $0x380] sm:$0xff]
    %v2827 = vld [vmem:[#allocation5 + $0x388] sm:$0xff]
    %v2828 = vld [vmem:[#allocation5 + $0x390] sm:$0xff]
    %v2829 = vld [vmem:[#allocation5 + $0x398] sm:$0xff]
    %v2830 = vld [vmem:[#allocation5 + $0x3a0] sm:$0xff]
    %v2831 = vld [vmem:[#allocation5 + $0x3a8] sm:$0xff]
    %v2832 = vld [vmem:[#allocation5 + $0x3b0] sm:$0xff]
    %v2833 = vld [vmem:[#allocation5 + $0x3b8] sm:$0xff]
    %v2834 = vld [vmem:[#allocation5 + $0x3c0] sm:$0xff]
    %v2835 = vld [vmem:[#allocation5 + $0x3c8] sm:$0xff]
    %v2836 = vld [vmem:[#allocation5 + $0x3d0] sm:$0xff]
    %v2837 = vld [vmem:[#allocation5 + $0x3d8] sm:$0xff]
    %v2838 = vld [vmem:[#allocation5 + $0x3e0] sm:$0xff]
    %v2839 = vld [vmem:[#allocation5 + $0x3e8] sm:$0xff]
    %v2840 = vld [vmem:[#allocation5 + $0x3f0] sm:$0xff]
    %v2841 = vld [vmem:[#allocation5 + $0x3f8] sm:$0xff]
    %v2842 = vld [vmem:[#allocation5 + $0x400] sm:$0xff]
    %v2843 = vld [vmem:[#allocation5 + $0x408] sm:$0xff]
    %v2844 = vld [vmem:[#allocation5 + $0x410] sm:$0xff]
    %v2845 = vld [vmem:[#allocation5 + $0x418] sm:$0xff]
    %v2846 = vld [vmem:[#allocation5 + $0x420] sm:$0xff]
    %v2847 = vld [vmem:[#allocation5 + $0x428] sm:$0xff]
    %v2848 = vld [vmem:[#allocation5 + $0x430] sm:$0xff]
    %v2849 = vld [vmem:[#allocation5 + $0x438] sm:$0xff]
    %v2850 = vld [vmem:[#allocation5 + $0x440] sm:$0xff]
    %v2851 = vld [vmem:[#allocation5 + $0x448] sm:$0xff]
    %v2852 = vld [vmem:[#allocation5 + $0x450] sm:$0xff]
    %v2853 = vld [vmem:[#allocation5 + $0x458] sm:$0xff]
    %v2854 = vld [vmem:[#allocation5 + $0x460] sm:$0xff]
    %v2855 = vld [vmem:[#allocation5 + $0x468] sm:$0xff]
    %v2856 = vld [vmem:[#allocation5 + $0x470] sm:$0xff]
    %v2857 = vld [vmem:[#allocation5 + $0x478] sm:$0xff]
    %v2858 = vld [vmem:[#allocation5 + $0x480] sm:$0xff]
    %v2859 = vld [vmem:[#allocation5 + $0x488] sm:$0xff]
    %v2860 = vld [vmem:[#allocation5 + $0x490] sm:$0xff]
    %v2861 = vld [vmem:[#allocation5 + $0x498] sm:$0xff]
    %s2862 = scalar_lea.vmem [#allocation3], 1
    %v2863 = vld [vmem:[%s2862] ss:$8 sm:$0xf]
    %v2865 = vperm.slane %v2863, 0
    %v2866 = vperm.slane %v2863, 1
    %v2867 = vperm.slane %v2863, 2
    %v2868 = vperm.slane %v2863, 3
    %v3001 = vunpack.c.l.b16 %v2734
    %v3002 = vunpack.c.h.b16 %v2734
    %v3003 = vunpack.c.l.b16 %v2735
    %v3004 = vunpack.c.h.b16 %v2735
    %v3005 = vunpack.c.l.b16 %v2736
    %v3006 = vunpack.c.h.b16 %v2736
    %v3007 = vunpack.c.l.b16 %v2737
    %v3008 = vunpack.c.h.b16 %v2737
    %v3009 = vunpack.c.l.b16 %v2738
    %v3010 = vunpack.c.h.b16 %v2738
    %v3011 = vunpack.c.l.b16 %v2739
    %v3012 = vunpack.c.h.b16 %v2739
    %v3013 = vunpack.c.l.b16 %v2740
    %v3014 = vunpack.c.h.b16 %v2740
    %v3015 = vunpack.c.l.b16 %v2741
    %v3016 = vunpack.c.h.b16 %v2741
    %v3017 = vunpack.c.l.b16 %v2742
    %v3018 = vunpack.c.h.b16 %v2742
    %v3019 = vunpack.c.l.b16 %v2743
    %v3020 = vunpack.c.h.b16 %v2743
    %v3021 = vunpack.c.l.b16 %v2744
    %v3022 = vunpack.c.h.b16 %v2744
    %v3023 = vunpack.c.l.b16 %v2745
    %v3024 = vunpack.c.h.b16 %v2745
    %v3025 = vunpack.c.l.b16 %v2746
    %v3026 = vunpack.c.h.b16 %v2746
    %v3027 = vunpack.c.l.b16 %v2747
    %v3028 = vunpack.c.h.b16 %v2747
    %v3029 = vunpack.c.l.b16 %v2748
    %v3030 = vunpack.c.h.b16 %v2748
    %v3031 = vunpack.c.l.b16 %v2749
    %v3032 = vunpack.c.h.b16 %v2749
    %v3033 = vunpack.c.l.b16 %v2750
    %v3034 = vunpack.c.h.b16 %v2750
    %v3035 = vunpack.c.l.b16 %v2751
    %v3036 = vunpack.c.h.b16 %v2751
    %v3037 = vunpack.c.l.b16 %v2752
    %v3038 = vunpack.c.h.b16 %v2752
    %v3039 = vunpack.c.l.b16 %v2753
    %v3040 = vunpack.c.h.b16 %v2753
    %v3041 = vunpack.c.l.b16 %v2754
    %v3042 = vunpack.c.h.b16 %v2754
    %v3043 = vunpack.c.l.b16 %v2755
    %v3044 = vunpack.c.h.b16 %v2755
    %v3045 = vunpack.c.l.b16 %v2756
    %v3046 = vunpack.c.h.b16 %v2756
    %v3047 = vunpack.c.l.b16 %v2757
    %v3048 = vunpack.c.h.b16 %v2757
    %v3049 = vunpack.c.l.b16 %v2758
    %v3050 = vunpack.c.h.b16 %v2758
    %v3051 = vunpack.c.l.b16 %v2759
    %v3052 = vunpack.c.h.b16 %v2759
    %v3053 = vunpack.c.l.b16 %v2760
    %v3054 = vunpack.c.h.b16 %v2760
    %v3055 = vunpack.c.l.b16 %v2761
    %v3056 = vunpack.c.h.b16 %v2761
    %v3057 = vunpack.c.l.b16 %v2762
    %v3058 = vunpack.c.h.b16 %v2762
    %v3059 = vunpack.c.l.b16 %v2763
    %v3060 = vunpack.c.h.b16 %v2763
    %v3061 = vunpack.c.l.b16 %v2764
    %v3062 = vunpack.c.h.b16 %v2764
    %v3063 = vunpack.c.l.b16 %v2765
    %v3064 = vunpack.c.h.b16 %v2765
    %v3065 = vunpack.c.l.b16 %v2766
    %v3066 = vunpack.c.h.b16 %v2766
    %v3067 = vunpack.c.l.b16 %v2767
    %v3068 = vunpack.c.h.b16 %v2767
    %v3069 = vunpack.c.l.b16 %v2768
    %v3070 = vunpack.c.h.b16 %v2768
    %v3071 = vunpack.c.l.b16 %v2769
    %v3072 = vunpack.c.h.b16 %v2769
    %v3073 = vunpack.c.l.b16 %v2770
    %v3074 = vunpack.c.h.b16 %v2770
    %v3075 = vunpack.c.l.b16 %v2771
    %v3076 = vunpack.c.h.b16 %v2771
    %v3077 = vunpack.c.l.b16 %v2772
    %v3078 = vunpack.c.h.b16 %v2772
    %v3079 = vunpack.c.l.b16 %v2773
    %v3080 = vunpack.c.h.b16 %v2773
    %v3081 = vunpack.c.l.b16 %v2774
    %v3082 = vunpack.c.h.b16 %v2774
    %v3083 = vunpack.c.l.b16 %v2775
    %v3084 = vunpack.c.h.b16 %v2775
    %v3085 = vunpack.c.l.b16 %v2776
    %v3086 = vunpack.c.h.b16 %v2776
    %v3087 = vunpack.c.l.b16 %v2777
    %v3088 = vunpack.c.h.b16 %v2777
    %v3089 = vunpack.c.l.b16 %v2778
    %v3090 = vunpack.c.h.b16 %v2778
    %v3091 = vunpack.c.l.b16 %v2779
    %v3092 = vunpack.c.h.b16 %v2779
    %v3093 = vunpack.c.l.b16 %v2780
    %v3094 = vunpack.c.h.b16 %v2780
    %v3095 = vunpack.c.l.b16 %v2781
    %v3096 = vunpack.c.h.b16 %v2781
    %v3097 = vunpack.c.l.b16 %v2782
    %v3098 = vunpack.c.h.b16 %v2782
    %v3099 = vunpack.c.l.b16 %v2783
    %v3100 = vunpack.c.h.b16 %v2783
    %v3101 = vunpack.c.l.b16 %v2784
    %v3102 = vunpack.c.h.b16 %v2784
    %v3103 = vunpack.c.l.b16 %v2785
    %v3104 = vunpack.c.h.b16 %v2785
    %v3105 = vunpack.c.l.b16 %v2786
    %v3106 = vunpack.c.h.b16 %v2786
    %v3107 = vunpack.c.l.b16 %v2787
    %v3108 = vunpack.c.h.b16 %v2787
    %v3109 = vunpack.c.l.b16 %v2788
    %v3110 = vunpack.c.h.b16 %v2788
    %v3111 = vunpack.c.l.b16 %v2789
    %v3112 = vunpack.c.h.b16 %v2789
    %v3113 = vunpack.c.l.b16 %v2790
    %v3114 = vunpack.c.h.b16 %v2790
    %v3115 = vunpack.c.l.b16 %v2791
    %v3116 = vunpack.c.h.b16 %v2791
    %v3117 = vunpack.c.l.b16 %v2792
    %v3118 = vunpack.c.h.b16 %v2792
    %v3119 = vunpack.c.l.b16 %v2793
    %v3120 = vunpack.c.h.b16 %v2793
    %v3121 = vunpack.c.l.b16 %v2794
    %v3122 = vunpack.c.h.b16 %v2794
    %v3123 = vunpack.c.l.b16 %v2795
    %v3124 = vunpack.c.h.b16 %v2795
    %v3125 = vunpack.c.l.b16 %v2796
    %v3126 = vunpack.c.h.b16 %v2796
    %v3127 = vunpack.c.l.b16 %v2797
    %v3128 = vunpack.c.h.b16 %v2797
    %v3129 = vunpack.c.l.b16 %v2798
    %v3130 = vunpack.c.h.b16 %v2798
    %v3131 = vunpack.c.l.b16 %v2799
    %v3132 = vunpack.c.h.b16 %v2799
    %v3133 = vunpack.c.l.b16 %v2800
    %v3134 = vunpack.c.h.b16 %v2800
    %v3135 = vunpack.c.l.b16 %v2801
    %v3136 = vunpack.c.h.b16 %v2801
    %v3137 = vunpack.c.l.b16 %v2802
    %v3138 = vunpack.c.h.b16 %v2802
    %v3139 = vunpack.c.l.b16 %v2803
    %v3140 = vunpack.c.h.b16 %v2803
    %v3141 = vunpack.c.l.b16 %v2804
    %v3142 = vunpack.c.h.b16 %v2804
    %v3143 = vunpack.c.l.b16 %v2805
    %v3144 = vunpack.c.h.b16 %v2805
    %v3145 = vunpack.c.l.b16 %v2806
    %v3146 = vunpack.c.h.b16 %v2806
    %v3147 = vunpack.c.l.b16 %v2807
    %v3148 = vunpack.c.h.b16 %v2807
    %v3149 = vunpack.c.l.b16 %v2808
    %v3150 = vunpack.c.h.b16 %v2808
    %v3151 = vunpack.c.l.b16 %v2809
    %v3152 = vunpack.c.h.b16 %v2809
    %v3153 = vunpack.c.l.b16 %v2810
    %v3154 = vunpack.c.h.b16 %v2810
    %v3155 = vunpack.c.l.b16 %v2811
    %v3156 = vunpack.c.h.b16 %v2811
    %v3157 = vunpack.c.l.b16 %v2812
    %v3158 = vunpack.c.h.b16 %v2812
    %v3159 = vunpack.c.l.b16 %v2813
    %v3160 = vunpack.c.h.b16 %v2813
    %v3161 = vunpack.c.l.b16 %v2814
    %v3162 = vunpack.c.h.b16 %v2814
    %v3163 = vunpack.c.l.b16 %v2815
    %v3164 = vunpack.c.h.b16 %v2815
    %v3165 = vunpack.c.l.b16 %v2816
    %v3166 = vunpack.c.h.b16 %v2816
    %v3167 = vunpack.c.l.b16 %v2817
    %v3168 = vunpack.c.h.b16 %v2817
    %v3169 = vunpack.c.l.b16 %v2818
    %v3170 = vunpack.c.h.b16 %v2818
    %v3171 = vunpack.c.l.b16 %v2819
    %v3172 = vunpack.c.h.b16 %v2819
    %v3173 = vunpack.c.l.b16 %v2820
    %v3174 = vunpack.c.h.b16 %v2820
    %v3175 = vunpack.c.l.b16 %v2821
    %v3176 = vunpack.c.h.b16 %v2821
    %v3177 = vunpack.c.l.b16 %v2822
    %v3178 = vunpack.c.h.b16 %v2822
    %v3179 = vunpack.c.l.b16 %v2823
    %v3180 = vunpack.c.h.b16 %v2823
    %v3181 = vunpack.c.l.b16 %v2824
    %v3182 = vunpack.c.h.b16 %v2824
    %v3183 = vunpack.c.l.b16 %v2825
    %v3184 = vunpack.c.h.b16 %v2825
    %v3185 = vunpack.c.l.b16 %v2826
    %v3186 = vunpack.c.h.b16 %v2826
    %v3187 = vunpack.c.l.b16 %v2827
    %v3188 = vunpack.c.h.b16 %v2827
    %v3189 = vunpack.c.l.b16 %v2828
    %v3190 = vunpack.c.h.b16 %v2828
    %v3191 = vunpack.c.l.b16 %v2829
    %v3192 = vunpack.c.h.b16 %v2829
    %v3193 = vunpack.c.l.b16 %v2830
    %v3194 = vunpack.c.h.b16 %v2830
    %v3195 = vunpack.c.l.b16 %v2831
    %v3196 = vunpack.c.h.b16 %v2831
    %v3197 = vunpack.c.l.b16 %v2832
    %v3198 = vunpack.c.h.b16 %v2832
    %v3199 = vunpack.c.l.b16 %v2833
    %v3200 = vunpack.c.h.b16 %v2833
    %v3201 = vunpack.c.l.b16 %v2834
    %v3202 = vunpack.c.h.b16 %v2834
    %v3203 = vunpack.c.l.b16 %v2835
    %v3204 = vunpack.c.h.b16 %v2835
    %v3205 = vunpack.c.l.b16 %v2836
    %v3206 = vunpack.c.h.b16 %v2836
    %v3207 = vunpack.c.l.b16 %v2837
    %v3208 = vunpack.c.h.b16 %v2837
    %v3209 = vunpack.c.l.b16 %v2838
    %v3210 = vunpack.c.h.b16 %v2838
    %v3211 = vunpack.c.l.b16 %v2839
    %v3212 = vunpack.c.h.b16 %v2839
    %v3213 = vunpack.c.l.b16 %v2840
    %v3214 = vunpack.c.h.b16 %v2840
    %v3215 = vunpack.c.l.b16 %v2841
    %v3216 = vunpack.c.h.b16 %v2841
    %v3217 = vunpack.c.l.b16 %v2842
    %v3218 = vunpack.c.h.b16 %v2842
    %v3219 = vunpack.c.l.b16 %v2843
    %v3220 = vunpack.c.h.b16 %v2843
    %v3221 = vunpack.c.l.b16 %v2844
    %v3222 = vunpack.c.h.b16 %v2844
    %v3223 = vunpack.c.l.b16 %v2845
    %v3224 = vunpack.c.h.b16 %v2845
    %v3225 = vunpack.c.l.b16 %v2846
    %v3226 = vunpack.c.h.b16 %v2846
    %v3227 = vunpack.c.l.b16 %v2847
    %v3228 = vunpack.c.h.b16 %v2847
    %v3229 = vunpack.c.l.b16 %v2848
    %v3230 = vunpack.c.h.b16 %v2848
    %v3231 = vunpack.c.l.b16 %v2849
    %v3232 = vunpack.c.h.b16 %v2849
    %v3233 = vunpack.c.l.b16 %v2850
    %v3234 = vunpack.c.h.b16 %v2850
    %v3235 = vunpack.c.l.b16 %v2851
    %v3236 = vunpack.c.h.b16 %v2851
    %v3237 = vunpack.c.l.b16 %v2852
    %v3238 = vunpack.c.h.b16 %v2852
    %v3239 = vunpack.c.l.b16 %v2853
    %v3240 = vunpack.c.h.b16 %v2853
    %v3241 = vunpack.c.l.b16 %v2854
    %v3242 = vunpack.c.h.b16 %v2854
    %v3243 = vunpack.c.l.b16 %v2855
    %v3244 = vunpack.c.h.b16 %v2855
    %v3245 = vunpack.c.l.b16 %v2856
    %v3246 = vunpack.c.h.b16 %v2856
    %v3247 = vunpack.c.l.b16 %v2857
    %v3248 = vunpack.c.h.b16 %v2857
    %v3249 = vunpack.c.l.b16 %v2858
    %v3250 = vunpack.c.h.b16 %v2858
    %v3251 = vunpack.c.l.b16 %v2859
    %v3252 = vunpack.c.h.b16 %v2859
    %v3253 = vunpack.c.l.b16 %v2860
    %v3254 = vunpack.c.h.b16 %v2860
    %v3255 = vunpack.c.l.b16 %v2861
    %v3256 = vunpack.c.h.b16 %v2861
    %v3257 = vpack.c.b16 %v3005, %v3001
    %v3258 = vpack.c.b16 %v3006, %v3002
    %v3259 = vpack.c.b16 %v3007, %v3003
    %v3260 = vpack.c.b16 %v3008, %v3004
    %v3261 = vpack.c.b16 %v3013, %v3009
    %v3262 = vpack.c.b16 %v3014, %v3010
    %v3263 = vpack.c.b16 %v3015, %v3011
    %v3264 = vpack.c.b16 %v3016, %v3012
    %v3265 = vpack.c.b16 %v3021, %v3017
    %v3266 = vpack.c.b16 %v3022, %v3018
    %v3267 = vpack.c.b16 %v3023, %v3019
    %v3268 = vpack.c.b16 %v3024, %v3020
    %v3269 = vpack.c.b16 %v3029, %v3025
    %v3270 = vpack.c.b16 %v3030, %v3026
    %v3271 = vpack.c.b16 %v3031, %v3027
    %v3272 = vpack.c.b16 %v3032, %v3028
    %v3273 = vpack.c.b16 %v3037, %v3033
    %v3274 = vpack.c.b16 %v3038, %v3034
    %v3275 = vpack.c.b16 %v3039, %v3035
    %v3276 = vpack.c.b16 %v3040, %v3036
    %v3277 = vpack.c.b16 %v3045, %v3041
    %v3278 = vpack.c.b16 %v3046, %v3042
    %v3279 = vpack.c.b16 %v3047, %v3043
    %v3280 = vpack.c.b16 %v3048, %v3044
    %v3281 = vpack.c.b16 %v3053, %v3049
    %v3282 = vpack.c.b16 %v3054, %v3050
    %v3283 = vpack.c.b16 %v3055, %v3051
    %v3284 = vpack.c.b16 %v3056, %v3052
    %v3285 = vpack.c.b16 %v3061, %v3057
    %v3286 = vpack.c.b16 %v3062, %v3058
    %v3287 = vpack.c.b16 %v3063, %v3059
    %v3288 = vpack.c.b16 %v3064, %v3060
    %v3289 = vpack.c.b16 %v3069, %v3065
    %v3290 = vpack.c.b16 %v3070, %v3066
    %v3291 = vpack.c.b16 %v3071, %v3067
    %v3292 = vpack.c.b16 %v3072, %v3068
    %v3293 = vpack.c.b16 %v3077, %v3073
    %v3294 = vpack.c.b16 %v3078, %v3074
    %v3295 = vpack.c.b16 %v3079, %v3075
    %v3296 = vpack.c.b16 %v3080, %v3076
    %v3297 = vpack.c.b16 %v3085, %v3081
    %v3298 = vpack.c.b16 %v3086, %v3082
    %v3299 = vpack.c.b16 %v3087, %v3083
    %v3300 = vpack.c.b16 %v3088, %v3084
    %v3301 = vpack.c.b16 %v3093, %v3089
    %v3302 = vpack.c.b16 %v3094, %v3090
    %v3303 = vpack.c.b16 %v3095, %v3091
    %v3304 = vpack.c.b16 %v3096, %v3092
    %v3305 = vpack.c.b16 %v3101, %v3097
    %v3306 = vpack.c.b16 %v3102, %v3098
    %v3307 = vpack.c.b16 %v3103, %v3099
    %v3308 = vpack.c.b16 %v3104, %v3100
    %v3309 = vpack.c.b16 %v3109, %v3105
    %v3310 = vpack.c.b16 %v3110, %v3106
    %v3311 = vpack.c.b16 %v3111, %v3107
    %v3312 = vpack.c.b16 %v3112, %v3108
    %v3313 = vpack.c.b16 %v3117, %v3113
    %v3314 = vpack.c.b16 %v3118, %v3114
    %v3315 = vpack.c.b16 %v3119, %v3115
    %v3316 = vpack.c.b16 %v3120, %v3116
    %v3317 = vpack.c.b16 %v3125, %v3121
    %v3318 = vpack.c.b16 %v3126, %v3122
    %v3319 = vpack.c.b16 %v3127, %v3123
    %v3320 = vpack.c.b16 %v3128, %v3124
    %v3321 = vpack.c.b16 %v3133, %v3129
    %v3322 = vpack.c.b16 %v3134, %v3130
    %v3323 = vpack.c.b16 %v3135, %v3131
    %v3324 = vpack.c.b16 %v3136, %v3132
    %v3325 = vpack.c.b16 %v3141, %v3137
    %v3326 = vpack.c.b16 %v3142, %v3138
    %v3327 = vpack.c.b16 %v3143, %v3139
    %v3328 = vpack.c.b16 %v3144, %v3140
    %v3329 = vpack.c.b16 %v3149, %v3145
    %v3330 = vpack.c.b16 %v3150, %v3146
    %v3331 = vpack.c.b16 %v3151, %v3147
    %v3332 = vpack.c.b16 %v3152, %v3148
    %v3333 = vpack.c.b16 %v3157, %v3153
    %v3334 = vpack.c.b16 %v3158, %v3154
    %v3335 = vpack.c.b16 %v3159, %v3155
    %v3336 = vpack.c.b16 %v3160, %v3156
    %v3337 = vpack.c.b16 %v3165, %v3161
    %v3338 = vpack.c.b16 %v3166, %v3162
    %v3339 = vpack.c.b16 %v3167, %v3163
    %v3340 = vpack.c.b16 %v3168, %v3164
    %v3341 = vpack.c.b16 %v3173, %v3169
    %v3342 = vpack.c.b16 %v3174, %v3170
    %v3343 = vpack.c.b16 %v3175, %v3171
    %v3344 = vpack.c.b16 %v3176, %v3172
    %v3345 = vpack.c.b16 %v3181, %v3177
    %v3346 = vpack.c.b16 %v3182, %v3178
    %v3347 = vpack.c.b16 %v3183, %v3179
    %v3348 = vpack.c.b16 %v3184, %v3180
    %v3349 = vpack.c.b16 %v3189, %v3185
    %v3350 = vpack.c.b16 %v3190, %v3186
    %v3351 = vpack.c.b16 %v3191, %v3187
    %v3352 = vpack.c.b16 %v3192, %v3188
    %v3353 = vpack.c.b16 %v3197, %v3193
    %v3354 = vpack.c.b16 %v3198, %v3194
    %v3355 = vpack.c.b16 %v3199, %v3195
    %v3356 = vpack.c.b16 %v3200, %v3196
    %v3357 = vpack.c.b16 %v3205, %v3201
    %v3358 = vpack.c.b16 %v3206, %v3202
    %v3359 = vpack.c.b16 %v3207, %v3203
    %v3360 = vpack.c.b16 %v3208, %v3204
    %v3361 = vpack.c.b16 %v3213, %v3209
    %v3362 = vpack.c.b16 %v3214, %v3210
    %v3363 = vpack.c.b16 %v3215, %v3211
    %v3364 = vpack.c.b16 %v3216, %v3212
    %v3365 = vpack.c.b16 %v3221, %v3217
    %v3366 = vpack.c.b16 %v3222, %v3218
    %v3367 = vpack.c.b16 %v3223, %v3219
    %v3368 = vpack.c.b16 %v3224, %v3220
    %v3369 = vpack.c.b16 %v3229, %v3225
    %v3370 = vpack.c.b16 %v3230, %v3226
    %v3371 = vpack.c.b16 %v3231, %v3227
    %v3372 = vpack.c.b16 %v3232, %v3228
    %v3373 = vpack.c.b16 %v3237, %v3233
    %v3374 = vpack.c.b16 %v3238, %v3234
    %v3375 = vpack.c.b16 %v3239, %v3235
    %v3376 = vpack.c.b16 %v3240, %v3236
    %v3377 = vpack.c.b16 %v3245, %v3241
    %v3378 = vpack.c.b16 %v3246, %v3242
    %v3379 = vpack.c.b16 %v3247, %v3243
    %v3380 = vpack.c.b16 %v3248, %v3244
    %v3381 = vpack.c.b16 %v3253, %v3249
    %v3382 = vpack.c.b16 %v3254, %v3250
    %v3383 = vpack.c.b16 %v3255, %v3251
    %v3384 = vpack.c.b16 %v3256, %v3252
    %3513 = vmatpush.bf16.msra.mxu0 %v3285
    %3514 = vmatpush.bf16.msra.mxu0 %v3281
    %3515 = vmatpush.bf16.msra.mxu0 %v3277
    %3516 = vmatpush.bf16.msra.mxu0 %v3273
    %3517 = vmatpush.bf16.msra.mxu0 %v3269
    %3518 = vmatpush.bf16.msra.mxu0 %v3265
    %3519 = vmatpush.bf16.msra.mxu0 %v3261
    %3520 = vmatpush.bf16.msra.mxu0 %v3257
    %3521 = vmatmul.bf16.gmra.mxu0 %v2730
    %v3522 = vpop.f32.mrf.mxu0
    %v3523 = vadd.f32 %v2865, %v3522
    %v3524 = vpop.f32.mrf.mxu0
    %3525 = vdwg.mxu0
    %3526 = vmatpush.bf16.msra.mxu0 %v3317
    %3527 = vmatpush.bf16.msra.mxu0 %v3313
    %3528 = vmatpush.bf16.msra.mxu0 %v3309
    %3529 = vmatpush.bf16.msra.mxu0 %v3305
    %3530 = vmatpush.bf16.msra.mxu0 %v3301
    %3531 = vmatpush.bf16.msra.mxu0 %v3297
    %3532 = vmatpush.bf16.msra.mxu0 %v3293
    %3533 = vmatpush.bf16.msra.mxu0 %v3289
    %3534 = vmatmul.bf16.gmra.mxu0 %v2731
    %v3535 = vpop.f32.mrf.mxu0
    %v3536 = vadd.f32 %v3523, %v3535
    %v3537 = vpop.f32.mrf.mxu0
    %3538 = vdwg.mxu0
    %3539 = vmatpush.bf16.msra.mxu0 %v3349
    %3540 = vmatpush.bf16.msra.mxu0 %v3345
    %3541 = vmatpush.bf16.msra.mxu0 %v3341
    %3542 = vmatpush.bf16.msra.mxu0 %v3337
    %3543 = vmatpush.bf16.msra.mxu0 %v3333
    %3544 = vmatpush.bf16.msra.mxu0 %v3329
    %3545 = vmatpush.bf16.msra.mxu0 %v3325
    %3546 = vmatpush.bf16.msra.mxu0 %v3321
    %3547 = vmatmul.bf16.gmra.mxu0 %v2732
    %v3548 = vpop.f32.mrf.mxu0
    %v3549 = vadd.f32 %v3536, %v3548
    %v3550 = vpop.f32.mrf.mxu0
    %3551 = vdwg.mxu0
    %3552 = vmatpush.bf16.msra.mxu0 %v3381
    %3553 = vmatpush.bf16.msra.mxu0 %v3377
    %3554 = vmatpush.bf16.msra.mxu0 %v3373
    %3555 = vmatpush.bf16.msra.mxu0 %v3369
    %3556 = vmatpush.bf16.msra.mxu0 %v3365
    %3557 = vmatpush.bf16.msra.mxu0 %v3361
    %3558 = vmatpush.bf16.msra.mxu0 %v3357
    %3559 = vmatpush.bf16.msra.mxu0 %v3353
    %3560 = vmatmul.bf16.gmra.mxu0 %v2733
    %v3561 = vpop.f32.mrf.mxu0
    %v3562 = vadd.f32 %v3549, %v3561
    %v3563 = vpop.f32.mrf.mxu0
    %3564 = vdwg.mxu0
    %3565 = vmatpush.bf16.msra.mxu0 %v3286
    %3566 = vmatpush.bf16.msra.mxu0 %v3282
    %3567 = vmatpush.bf16.msra.mxu0 %v3278
    %3568 = vmatpush.bf16.msra.mxu0 %v3274
    %3569 = vmatpush.bf16.msra.mxu0 %v3270
    %3570 = vmatpush.bf16.msra.mxu0 %v3266
    %3571 = vmatpush.bf16.msra.mxu0 %v3262
    %3572 = vmatpush.bf16.msra.mxu0 %v3258
    %3573 = vmatmul.bf16.gmra.mxu0 %v2730
    %v3574 = vpop.f32.mrf.mxu0
    %v3575 = vadd.f32 %v2866, %v3574
    %v3576 = vpop.f32.mrf.mxu0
    %3577 = vdwg.mxu0
    %3578 = vmatpush.bf16.msra.mxu0 %v3318
    %3579 = vmatpush.bf16.msra.mxu0 %v3314
    %3580 = vmatpush.bf16.msra.mxu0 %v3310
    %3581 = vmatpush.bf16.msra.mxu0 %v3306
    %3582 = vmatpush.bf16.msra.mxu0 %v3302
    %3583 = vmatpush.bf16.msra.mxu0 %v3298
    %3584 = vmatpush.bf16.msra.mxu0 %v3294
    %3585 = vmatpush.bf16.msra.mxu0 %v3290
    %3586 = vmatmul.bf16.gmra.mxu0 %v2731
    %v3587 = vpop.f32.mrf.mxu0
    %v3588 = vadd.f32 %v3575, %v3587
    %v3589 = vpop.f32.mrf.mxu0
    %3590 = vdwg.mxu0
    %3591 = vmatpush.bf16.msra.mxu0 %v3350
    %3592 = vmatpush.bf16.msra.mxu0 %v3346
    %3593 = vmatpush.bf16.msra.mxu0 %v3342
    %3594 = vmatpush.bf16.msra.mxu0 %v3338
    %3595 = vmatpush.bf16.msra.mxu0 %v3334
    %3596 = vmatpush.bf16.msra.mxu0 %v3330
    %3597 = vmatpush.bf16.msra.mxu0 %v3326
    %3598 = vmatpush.bf16.msra.mxu0 %v3322
    %3599 = vmatmul.bf16.gmra.mxu0 %v2732
    %v3600 = vpop.f32.mrf.mxu0
    %v3601 = vadd.f32 %v3588, %v3600
    %v3602 = vpop.f32.mrf.mxu0
    %3603 = vdwg.mxu0
    %3604 = vmatpush.bf16.msra.mxu0 %v3382
    %3605 = vmatpush.bf16.msra.mxu0 %v3378
    %3606 = vmatpush.bf16.msra.mxu0 %v3374
    %3607 = vmatpush.bf16.msra.mxu0 %v3370
    %3608 = vmatpush.bf16.msra.mxu0 %v3366
    %3609 = vmatpush.bf16.msra.mxu0 %v3362
    %3610 = vmatpush.bf16.msra.mxu0 %v3358
    %3611 = vmatpush.bf16.msra.mxu0 %v3354
    %3612 = vmatmul.bf16.gmra.mxu0 %v2733
    %v3613 = vpop.f32.mrf.mxu0
    %v3614 = vadd.f32 %v3601, %v3613
    %v3615 = vpop.f32.mrf.mxu0
    %3616 = vdwg.mxu0
    %3617 = vmatpush.bf16.msra.mxu0 %v3287
    %3618 = vmatpush.bf16.msra.mxu0 %v3283
    %3619 = vmatpush.bf16.msra.mxu0 %v3279
    %3620 = vmatpush.bf16.msra.mxu0 %v3275
    %3621 = vmatpush.bf16.msra.mxu0 %v3271
    %3622 = vmatpush.bf16.msra.mxu0 %v3267
    %3623 = vmatpush.bf16.msra.mxu0 %v3263
    %3624 = vmatpush.bf16.msra.mxu0 %v3259
    %3625 = vmatmul.bf16.gmra.mxu0 %v2730
    %v3626 = vpop.f32.mrf.mxu0
    %v3627 = vadd.f32 %v2867, %v3626
    %v3628 = vpop.f32.mrf.mxu0
    %3629 = vdwg.mxu0
    %3630 = vmatpush.bf16.msra.mxu0 %v3319
    %3631 = vmatpush.bf16.msra.mxu0 %v3315
    %3632 = vmatpush.bf16.msra.mxu0 %v3311
    %3633 = vmatpush.bf16.msra.mxu0 %v3307
    %3634 = vmatpush.bf16.msra.mxu0 %v3303
    %3635 = vmatpush.bf16.msra.mxu0 %v3299
    %3636 = vmatpush.bf16.msra.mxu0 %v3295
    %3637 = vmatpush.bf16.msra.mxu0 %v3291
    %3638 = vmatmul.bf16.gmra.mxu0 %v2731
    %v3639 = vpop.f32.mrf.mxu0
    %v3640 = vadd.f32 %v3627, %v3639
    %v3641 = vpop.f32.mrf.mxu0
    %3642 = vdwg.mxu0
    %3643 = vmatpush.bf16.msra.mxu0 %v3351
    %3644 = vmatpush.bf16.msra.mxu0 %v3347
    %3645 = vmatpush.bf16.msra.mxu0 %v3343
    %3646 = vmatpush.bf16.msra.mxu0 %v3339
    %3647 = vmatpush.bf16.msra.mxu0 %v3335
    %3648 = vmatpush.bf16.msra.mxu0 %v3331
    %3649 = vmatpush.bf16.msra.mxu0 %v3327
    %3650 = vmatpush.bf16.msra.mxu0 %v3323
    %3651 = vmatmul.bf16.gmra.mxu0 %v2732
    %v3652 = vpop.f32.mrf.mxu0
    %v3653 = vadd.f32 %v3640, %v3652
    %v3654 = vpop.f32.mrf.mxu0
    %3655 = vdwg.mxu0
    %3656 = vmatpush.bf16.msra.mxu0 %v3383
    %3657 = vmatpush.bf16.msra.mxu0 %v3379
    %3658 = vmatpush.bf16.msra.mxu0 %v3375
    %3659 = vmatpush.bf16.msra.mxu0 %v3371
    %3660 = vmatpush.bf16.msra.mxu0 %v3367
    %3661 = vmatpush.bf16.msra.mxu0 %v3363
    %3662 = vmatpush.bf16.msra.mxu0 %v3359
    %3663 = vmatpush.bf16.msra.mxu0 %v3355
    %3664 = vmatmul.bf16.gmra.mxu0 %v2733
    %v3665 = vpop.f32.mrf.mxu0
    %v3666 = vadd.f32 %v3653, %v3665
    %v3667 = vpop.f32.mrf.mxu0
    %3668 = vdwg.mxu0
    %3669 = vmatpush.bf16.msra.mxu0 %v3288
    %3670 = vmatpush.bf16.msra.mxu0 %v3284
    %3671 = vmatpush.bf16.msra.mxu0 %v3280
    %3672 = vmatpush.bf16.msra.mxu0 %v3276
    %3673 = vmatpush.bf16.msra.mxu0 %v3272
    %3674 = vmatpush.bf16.msra.mxu0 %v3268
    %3675 = vmatpush.bf16.msra.mxu0 %v3264
    %3676 = vmatpush.bf16.msra.mxu0 %v3260
    %3677 = vmatmul.bf16.gmra.mxu0 %v2730
    %v3678 = vpop.f32.mrf.mxu0
    %v3679 = vadd.f32 %v2868, %v3678
    %v3680 = vpop.f32.mrf.mxu0
    %3681 = vdwg.mxu0
    %3682 = vmatpush.bf16.msra.mxu0 %v3320
    %3683 = vmatpush.bf16.msra.mxu0 %v3316
    %3684 = vmatpush.bf16.msra.mxu0 %v3312
    %3685 = vmatpush.bf16.msra.mxu0 %v3308
    %3686 = vmatpush.bf16.msra.mxu0 %v3304
    %3687 = vmatpush.bf16.msra.mxu0 %v3300
    %3688 = vmatpush.bf16.msra.mxu0 %v3296
    %3689 = vmatpush.bf16.msra.mxu0 %v3292
    %3690 = vmatmul.bf16.gmra.mxu0 %v2731
    %v3691 = vpop.f32.mrf.mxu0
    %v3692 = vadd.f32 %v3679, %v3691
    %v3693 = vpop.f32.mrf.mxu0
    %3694 = vdwg.mxu0
    %3695 = vmatpush.bf16.msra.mxu0 %v3352
    %3696 = vmatpush.bf16.msra.mxu0 %v3348
    %3697 = vmatpush.bf16.msra.mxu0 %v3344
    %3698 = vmatpush.bf16.msra.mxu0 %v3340
    %3699 = vmatpush.bf16.msra.mxu0 %v3336
    %3700 = vmatpush.bf16.msra.mxu0 %v3332
    %3701 = vmatpush.bf16.msra.mxu0 %v3328
    %3702 = vmatpush.bf16.msra.mxu0 %v3324
    %3703 = vmatmul.bf16.gmra.mxu0 %v2732
    %v3704 = vpop.f32.mrf.mxu0
    %v3705 = vadd.f32 %v3692, %v3704
    %v3706 = vpop.f32.mrf.mxu0
    %3707 = vdwg.mxu0
    %3708 = vmatpush.bf16.msra.mxu0 %v3384
    %3709 = vmatpush.bf16.msra.mxu0 %v3380
    %3710 = vmatpush.bf16.msra.mxu0 %v3376
    %3711 = vmatpush.bf16.msra.mxu0 %v3372
    %3712 = vmatpush.bf16.msra.mxu0 %v3368
    %3713 = vmatpush.bf16.msra.mxu0 %v3364
    %3714 = vmatpush.bf16.msra.mxu0 %v3360
    %3715 = vmatpush.bf16.msra.mxu0 %v3356
    %3716 = vmatmul.bf16.gmra.mxu0 %v2733
    %v3717 = vpop.f32.mrf.mxu0
    %v3718 = vadd.f32 %v3705, %v3717
    %v3719 = vpop.f32.mrf.mxu0
    %3720 = vdwg.mxu0
    %v3721 = vmax.f32 %v3562, 0.0
    %v3722 = vmax.f32 %v3614, 0.0
    %v3723 = vmax.f32 %v3666, 0.0
    %v3724 = vmax.f32 %v3718, 0.0
    %v3725 = vpack.c.bf16 %v3721, %v3721
    %v3726 = vpack.c.bf16 %v3722, %v3722
    %v3727 = vpack.c.bf16 %v3723, %v3723
    %v3728 = vpack.c.bf16 %v3724, %v3724
    %v3729 = vld [vmem:[#allocation5 + $0x4a0] sm:$0xff]
    %v3730 = vld [vmem:[#allocation5 + $0x4a8] sm:$0xff]
    %v3731 = vld [vmem:[#allocation5 + $0x4b0] sm:$0xff]
    %v3732 = vld [vmem:[#allocation5 + $0x4b8] sm:$0xff]
    %v3733 = vld [vmem:[#allocation5 + $0x4c0] sm:$0xff]
    %v3734 = vld [vmem:[#allocation5 + $0x4c8] sm:$0xff]
    %v3735 = vld [vmem:[#allocation5 + $0x4d0] sm:$0xff]
    %v3736 = vld [vmem:[#allocation5 + $0x4d8] sm:$0xff]
    %v3737 = vld [vmem:[#allocation5 + $0x4e0] sm:$0xff]
    %v3738 = vld [vmem:[#allocation5 + $0x4e8] sm:$0xff]
    %v3739 = vld [vmem:[#allocation5 + $0x4f0] sm:$0xff]
    %v3740 = vld [vmem:[#allocation5 + $0x4f8] sm:$0xff]
    %v3741 = vld [vmem:[#allocation5 + $0x500] sm:$0xff]
    %v3742 = vld [vmem:[#allocation5 + $0x508] sm:$0xff]
    %v3743 = vld [vmem:[#allocation5 + $0x510] sm:$0xff]
    %v3744 = vld [vmem:[#allocation5 + $0x518] sm:$0xff]
    %v3745 = vld [vmem:[#allocation5 + $0x520] sm:$0xff]
    %v3746 = vld [vmem:[#allocation5 + $0x528] sm:$0xff]
    %v3747 = vld [vmem:[#allocation5 + $0x530] sm:$0xff]
    %v3748 = vld [vmem:[#allocation5 + $0x538] sm:$0xff]
    %v3749 = vld [vmem:[#allocation5 + $0x540] sm:$0xff]
    %v3750 = vld [vmem:[#allocation5 + $0x548] sm:$0xff]
    %v3751 = vld [vmem:[#allocation5 + $0x550] sm:$0xff]
    %v3752 = vld [vmem:[#allocation5 + $0x558] sm:$0xff]
    %v3753 = vld [vmem:[#allocation5 + $0x560] sm:$0xff]
    %v3754 = vld [vmem:[#allocation5 + $0x568] sm:$0xff]
    %v3755 = vld [vmem:[#allocation5 + $0x570] sm:$0xff]
    %v3756 = vld [vmem:[#allocation5 + $0x578] sm:$0xff]
    %v3757 = vld [vmem:[#allocation5 + $0x580] sm:$0xff]
    %v3758 = vld [vmem:[#allocation5 + $0x588] sm:$0xff]
    %v3759 = vld [vmem:[#allocation5 + $0x590] sm:$0xff]
    %v3760 = vld [vmem:[#allocation5 + $0x598] sm:$0xff]
    %v3761 = vld [vmem:[#allocation5 + $0x5a0] sm:$0xff]
    %v3762 = vld [vmem:[#allocation5 + $0x5a8] sm:$0xff]
    %v3763 = vld [vmem:[#allocation5 + $0x5b0] sm:$0xff]
    %v3764 = vld [vmem:[#allocation5 + $0x5b8] sm:$0xff]
    %v3765 = vld [vmem:[#allocation5 + $0x5c0] sm:$0xff]
    %v3766 = vld [vmem:[#allocation5 + $0x5c8] sm:$0xff]
    %v3767 = vld [vmem:[#allocation5 + $0x5d0] sm:$0xff]
    %v3768 = vld [vmem:[#allocation5 + $0x5d8] sm:$0xff]
    %v3769 = vld [vmem:[#allocation5 + $0x5e0] sm:$0xff]
    %v3770 = vld [vmem:[#allocation5 + $0x5e8] sm:$0xff]
    %v3771 = vld [vmem:[#allocation5 + $0x5f0] sm:$0xff]
    %v3772 = vld [vmem:[#allocation5 + $0x5f8] sm:$0xff]
    %v3773 = vld [vmem:[#allocation5 + $0x600] sm:$0xff]
    %v3774 = vld [vmem:[#allocation5 + $0x608] sm:$0xff]
    %v3775 = vld [vmem:[#allocation5 + $0x610] sm:$0xff]
    %v3776 = vld [vmem:[#allocation5 + $0x618] sm:$0xff]
    %v3777 = vld [vmem:[#allocation5 + $0x620] sm:$0xff]
    %v3778 = vld [vmem:[#allocation5 + $0x628] sm:$0xff]
    %v3779 = vld [vmem:[#allocation5 + $0x630] sm:$0xff]
    %v3780 = vld [vmem:[#allocation5 + $0x638] sm:$0xff]
    %v3781 = vld [vmem:[#allocation5 + $0x640] sm:$0xff]
    %v3782 = vld [vmem:[#allocation5 + $0x648] sm:$0xff]
    %v3783 = vld [vmem:[#allocation5 + $0x650] sm:$0xff]
    %v3784 = vld [vmem:[#allocation5 + $0x658] sm:$0xff]
    %v3785 = vld [vmem:[#allocation5 + $0x660] sm:$0xff]
    %v3786 = vld [vmem:[#allocation5 + $0x668] sm:$0xff]
    %v3787 = vld [vmem:[#allocation5 + $0x670] sm:$0xff]
    %v3788 = vld [vmem:[#allocation5 + $0x678] sm:$0xff]
    %v3789 = vld [vmem:[#allocation5 + $0x680] sm:$0xff]
    %v3790 = vld [vmem:[#allocation5 + $0x688] sm:$0xff]
    %v3791 = vld [vmem:[#allocation5 + $0x690] sm:$0xff]
    %v3792 = vld [vmem:[#allocation5 + $0x698] sm:$0xff]
    %v3793 = vld [vmem:[#allocation5 + $0x6a0] sm:$0xff]
    %v3794 = vld [vmem:[#allocation5 + $0x6a8] sm:$0xff]
    %v3795 = vld [vmem:[#allocation5 + $0x6b0] sm:$0xff]
    %v3796 = vld [vmem:[#allocation5 + $0x6b8] sm:$0xff]
    %v3797 = vld [vmem:[#allocation5 + $0x6c0] sm:$0xff]
    %v3798 = vld [vmem:[#allocation5 + $0x6c8] sm:$0xff]
    %v3799 = vld [vmem:[#allocation5 + $0x6d0] sm:$0xff]
    %v3800 = vld [vmem:[#allocation5 + $0x6d8] sm:$0xff]
    %v3801 = vld [vmem:[#allocation5 + $0x6e0] sm:$0xff]
    %v3802 = vld [vmem:[#allocation5 + $0x6e8] sm:$0xff]
    %v3803 = vld [vmem:[#allocation5 + $0x6f0] sm:$0xff]
    %v3804 = vld [vmem:[#allocation5 + $0x6f8] sm:$0xff]
    %v3805 = vld [vmem:[#allocation5 + $0x700] sm:$0xff]
    %v3806 = vld [vmem:[#allocation5 + $0x708] sm:$0xff]
    %v3807 = vld [vmem:[#allocation5 + $0x710] sm:$0xff]
    %v3808 = vld [vmem:[#allocation5 + $0x718] sm:$0xff]
    %v3809 = vld [vmem:[#allocation5 + $0x720] sm:$0xff]
    %v3810 = vld [vmem:[#allocation5 + $0x728] sm:$0xff]
    %v3811 = vld [vmem:[#allocation5 + $0x730] sm:$0xff]
    %v3812 = vld [vmem:[#allocation5 + $0x738] sm:$0xff]
    %v3813 = vld [vmem:[#allocation5 + $0x740] sm:$0xff]
    %v3814 = vld [vmem:[#allocation5 + $0x748] sm:$0xff]
    %v3815 = vld [vmem:[#allocation5 + $0x750] sm:$0xff]
    %v3816 = vld [vmem:[#allocation5 + $0x758] sm:$0xff]
    %v3817 = vld [vmem:[#allocation5 + $0x760] sm:$0xff]
    %v3818 = vld [vmem:[#allocation5 + $0x768] sm:$0xff]
    %v3819 = vld [vmem:[#allocation5 + $0x770] sm:$0xff]
    %v3820 = vld [vmem:[#allocation5 + $0x778] sm:$0xff]
    %v3821 = vld [vmem:[#allocation5 + $0x780] sm:$0xff]
    %v3822 = vld [vmem:[#allocation5 + $0x788] sm:$0xff]
    %v3823 = vld [vmem:[#allocation5 + $0x790] sm:$0xff]
    %v3824 = vld [vmem:[#allocation5 + $0x798] sm:$0xff]
    %v3825 = vld [vmem:[#allocation5 + $0x7a0] sm:$0xff]
    %v3826 = vld [vmem:[#allocation5 + $0x7a8] sm:$0xff]
    %v3827 = vld [vmem:[#allocation5 + $0x7b0] sm:$0xff]
    %v3828 = vld [vmem:[#allocation5 + $0x7b8] sm:$0xff]
    %v3829 = vld [vmem:[#allocation5 + $0x7c0] sm:$0xff]
    %v3830 = vld [vmem:[#allocation5 + $0x7c8] sm:$0xff]
    %v3831 = vld [vmem:[#allocation5 + $0x7d0] sm:$0xff]
    %v3832 = vld [vmem:[#allocation5 + $0x7d8] sm:$0xff]
    %v3833 = vld [vmem:[#allocation5 + $0x7e0] sm:$0xff]
    %v3834 = vld [vmem:[#allocation5 + $0x7e8] sm:$0xff]
    %v3835 = vld [vmem:[#allocation5 + $0x7f0] sm:$0xff]
    %v3836 = vld [vmem:[#allocation5 + $0x7f8] sm:$0xff]
    %v3837 = vld [vmem:[#allocation5 + $0x800] sm:$0xff]
    %v3838 = vld [vmem:[#allocation5 + $0x808] sm:$0xff]
    %v3839 = vld [vmem:[#allocation5 + $0x810] sm:$0xff]
    %v3840 = vld [vmem:[#allocation5 + $0x818] sm:$0xff]
    %v3841 = vld [vmem:[#allocation5 + $0x820] sm:$0xff]
    %v3842 = vld [vmem:[#allocation5 + $0x828] sm:$0xff]
    %v3843 = vld [vmem:[#allocation5 + $0x830] sm:$0xff]
    %v3844 = vld [vmem:[#allocation5 + $0x838] sm:$0xff]
    %v3845 = vld [vmem:[#allocation5 + $0x840] sm:$0xff]
    %v3846 = vld [vmem:[#allocation5 + $0x848] sm:$0xff]
    %v3847 = vld [vmem:[#allocation5 + $0x850] sm:$0xff]
    %v3848 = vld [vmem:[#allocation5 + $0x858] sm:$0xff]
    %v3849 = vld [vmem:[#allocation5 + $0x860] sm:$0xff]
    %v3850 = vld [vmem:[#allocation5 + $0x868] sm:$0xff]
    %v3851 = vld [vmem:[#allocation5 + $0x870] sm:$0xff]
    %v3852 = vld [vmem:[#allocation5 + $0x878] sm:$0xff]
    %v3853 = vld [vmem:[#allocation5 + $0x880] sm:$0xff]
    %v3854 = vld [vmem:[#allocation5 + $0x888] sm:$0xff]
    %v3855 = vld [vmem:[#allocation5 + $0x890] sm:$0xff]
    %v3856 = vld [vmem:[#allocation5 + $0x898] sm:$0xff]
    %s3857 = scalar_lea.vmem [#allocation3], 2
    %v3858 = vld [vmem:[%s3857] ss:$8 sm:$0xf]
    %v3860 = vperm.slane %v3858, 0
    %v3861 = vperm.slane %v3858, 1
    %v3862 = vperm.slane %v3858, 2
    %v3863 = vperm.slane %v3858, 3
    %v3996 = vunpack.c.l.b16 %v3729
    %v3997 = vunpack.c.h.b16 %v3729
    %v3998 = vunpack.c.l.b16 %v3730
    %v3999 = vunpack.c.h.b16 %v3730
    %v4000 = vunpack.c.l.b16 %v3731
    %v4001 = vunpack.c.h.b16 %v3731
    %v4002 = vunpack.c.l.b16 %v3732
    %v4003 = vunpack.c.h.b16 %v3732
    %v4004 = vunpack.c.l.b16 %v3733
    %v4005 = vunpack.c.h.b16 %v3733
    %v4006 = vunpack.c.l.b16 %v3734
    %v4007 = vunpack.c.h.b16 %v3734
    %v4008 = vunpack.c.l.b16 %v3735
    %v4009 = vunpack.c.h.b16 %v3735
    %v4010 = vunpack.c.l.b16 %v3736
    %v4011 = vunpack.c.h.b16 %v3736
    %v4012 = vunpack.c.l.b16 %v3737
    %v4013 = vunpack.c.h.b16 %v3737
    %v4014 = vunpack.c.l.b16 %v3738
    %v4015 = vunpack.c.h.b16 %v3738
    %v4016 = vunpack.c.l.b16 %v3739
    %v4017 = vunpack.c.h.b16 %v3739
    %v4018 = vunpack.c.l.b16 %v3740
    %v4019 = vunpack.c.h.b16 %v3740
    %v4020 = vunpack.c.l.b16 %v3741
    %v4021 = vunpack.c.h.b16 %v3741
    %v4022 = vunpack.c.l.b16 %v3742
    %v4023 = vunpack.c.h.b16 %v3742
    %v4024 = vunpack.c.l.b16 %v3743
    %v4025 = vunpack.c.h.b16 %v3743
    %v4026 = vunpack.c.l.b16 %v3744
    %v4027 = vunpack.c.h.b16 %v3744
    %v4028 = vunpack.c.l.b16 %v3745
    %v4029 = vunpack.c.h.b16 %v3745
    %v4030 = vunpack.c.l.b16 %v3746
    %v4031 = vunpack.c.h.b16 %v3746
    %v4032 = vunpack.c.l.b16 %v3747
    %v4033 = vunpack.c.h.b16 %v3747
    %v4034 = vunpack.c.l.b16 %v3748
    %v4035 = vunpack.c.h.b16 %v3748
    %v4036 = vunpack.c.l.b16 %v3749
    %v4037 = vunpack.c.h.b16 %v3749
    %v4038 = vunpack.c.l.b16 %v3750
    %v4039 = vunpack.c.h.b16 %v3750
    %v4040 = vunpack.c.l.b16 %v3751
    %v4041 = vunpack.c.h.b16 %v3751
    %v4042 = vunpack.c.l.b16 %v3752
    %v4043 = vunpack.c.h.b16 %v3752
    %v4044 = vunpack.c.l.b16 %v3753
    %v4045 = vunpack.c.h.b16 %v3753
    %v4046 = vunpack.c.l.b16 %v3754
    %v4047 = vunpack.c.h.b16 %v3754
    %v4048 = vunpack.c.l.b16 %v3755
    %v4049 = vunpack.c.h.b16 %v3755
    %v4050 = vunpack.c.l.b16 %v3756
    %v4051 = vunpack.c.h.b16 %v3756
    %v4052 = vunpack.c.l.b16 %v3757
    %v4053 = vunpack.c.h.b16 %v3757
    %v4054 = vunpack.c.l.b16 %v3758
    %v4055 = vunpack.c.h.b16 %v3758
    %v4056 = vunpack.c.l.b16 %v3759
    %v4057 = vunpack.c.h.b16 %v3759
    %v4058 = vunpack.c.l.b16 %v3760
    %v4059 = vunpack.c.h.b16 %v3760
    %v4060 = vunpack.c.l.b16 %v3761
    %v4061 = vunpack.c.h.b16 %v3761
    %v4062 = vunpack.c.l.b16 %v3762
    %v4063 = vunpack.c.h.b16 %v3762
    %v4064 = vunpack.c.l.b16 %v3763
    %v4065 = vunpack.c.h.b16 %v3763
    %v4066 = vunpack.c.l.b16 %v3764
    %v4067 = vunpack.c.h.b16 %v3764
    %v4068 = vunpack.c.l.b16 %v3765
    %v4069 = vunpack.c.h.b16 %v3765
    %v4070 = vunpack.c.l.b16 %v3766
    %v4071 = vunpack.c.h.b16 %v3766
    %v4072 = vunpack.c.l.b16 %v3767
    %v4073 = vunpack.c.h.b16 %v3767
    %v4074 = vunpack.c.l.b16 %v3768
    %v4075 = vunpack.c.h.b16 %v3768
    %v4076 = vunpack.c.l.b16 %v3769
    %v4077 = vunpack.c.h.b16 %v3769
    %v4078 = vunpack.c.l.b16 %v3770
    %v4079 = vunpack.c.h.b16 %v3770
    %v4080 = vunpack.c.l.b16 %v3771
    %v4081 = vunpack.c.h.b16 %v3771
    %v4082 = vunpack.c.l.b16 %v3772
    %v4083 = vunpack.c.h.b16 %v3772
    %v4084 = vunpack.c.l.b16 %v3773
    %v4085 = vunpack.c.h.b16 %v3773
    %v4086 = vunpack.c.l.b16 %v3774
    %v4087 = vunpack.c.h.b16 %v3774
    %v4088 = vunpack.c.l.b16 %v3775
    %v4089 = vunpack.c.h.b16 %v3775
    %v4090 = vunpack.c.l.b16 %v3776
    %v4091 = vunpack.c.h.b16 %v3776
    %v4092 = vunpack.c.l.b16 %v3777
    %v4093 = vunpack.c.h.b16 %v3777
    %v4094 = vunpack.c.l.b16 %v3778
    %v4095 = vunpack.c.h.b16 %v3778
    %v4096 = vunpack.c.l.b16 %v3779
    %v4097 = vunpack.c.h.b16 %v3779
    %v4098 = vunpack.c.l.b16 %v3780
    %v4099 = vunpack.c.h.b16 %v3780
    %v4100 = vunpack.c.l.b16 %v3781
    %v4101 = vunpack.c.h.b16 %v3781
    %v4102 = vunpack.c.l.b16 %v3782
    %v4103 = vunpack.c.h.b16 %v3782
    %v4104 = vunpack.c.l.b16 %v3783
    %v4105 = vunpack.c.h.b16 %v3783
    %v4106 = vunpack.c.l.b16 %v3784
    %v4107 = vunpack.c.h.b16 %v3784
    %v4108 = vunpack.c.l.b16 %v3785
    %v4109 = vunpack.c.h.b16 %v3785
    %v4110 = vunpack.c.l.b16 %v3786
    %v4111 = vunpack.c.h.b16 %v3786
    %v4112 = vunpack.c.l.b16 %v3787
    %v4113 = vunpack.c.h.b16 %v3787
    %v4114 = vunpack.c.l.b16 %v3788
    %v4115 = vunpack.c.h.b16 %v3788
    %v4116 = vunpack.c.l.b16 %v3789
    %v4117 = vunpack.c.h.b16 %v3789
    %v4118 = vunpack.c.l.b16 %v3790
    %v4119 = vunpack.c.h.b16 %v3790
    %v4120 = vunpack.c.l.b16 %v3791
    %v4121 = vunpack.c.h.b16 %v3791
    %v4122 = vunpack.c.l.b16 %v3792
    %v4123 = vunpack.c.h.b16 %v3792
    %v4124 = vunpack.c.l.b16 %v3793
    %v4125 = vunpack.c.h.b16 %v3793
    %v4126 = vunpack.c.l.b16 %v3794
    %v4127 = vunpack.c.h.b16 %v3794
    %v4128 = vunpack.c.l.b16 %v3795
    %v4129 = vunpack.c.h.b16 %v3795
    %v4130 = vunpack.c.l.b16 %v3796
    %v4131 = vunpack.c.h.b16 %v3796
    %v4132 = vunpack.c.l.b16 %v3797
    %v4133 = vunpack.c.h.b16 %v3797
    %v4134 = vunpack.c.l.b16 %v3798
    %v4135 = vunpack.c.h.b16 %v3798
    %v4136 = vunpack.c.l.b16 %v3799
    %v4137 = vunpack.c.h.b16 %v3799
    %v4138 = vunpack.c.l.b16 %v3800
    %v4139 = vunpack.c.h.b16 %v3800
    %v4140 = vunpack.c.l.b16 %v3801
    %v4141 = vunpack.c.h.b16 %v3801
    %v4142 = vunpack.c.l.b16 %v3802
    %v4143 = vunpack.c.h.b16 %v3802
    %v4144 = vunpack.c.l.b16 %v3803
    %v4145 = vunpack.c.h.b16 %v3803
    %v4146 = vunpack.c.l.b16 %v3804
    %v4147 = vunpack.c.h.b16 %v3804
    %v4148 = vunpack.c.l.b16 %v3805
    %v4149 = vunpack.c.h.b16 %v3805
    %v4150 = vunpack.c.l.b16 %v3806
    %v4151 = vunpack.c.h.b16 %v3806
    %v4152 = vunpack.c.l.b16 %v3807
    %v4153 = vunpack.c.h.b16 %v3807
    %v4154 = vunpack.c.l.b16 %v3808
    %v4155 = vunpack.c.h.b16 %v3808
    %v4156 = vunpack.c.l.b16 %v3809
    %v4157 = vunpack.c.h.b16 %v3809
    %v4158 = vunpack.c.l.b16 %v3810
    %v4159 = vunpack.c.h.b16 %v3810
    %v4160 = vunpack.c.l.b16 %v3811
    %v4161 = vunpack.c.h.b16 %v3811
    %v4162 = vunpack.c.l.b16 %v3812
    %v4163 = vunpack.c.h.b16 %v3812
    %v4164 = vunpack.c.l.b16 %v3813
    %v4165 = vunpack.c.h.b16 %v3813
    %v4166 = vunpack.c.l.b16 %v3814
    %v4167 = vunpack.c.h.b16 %v3814
    %v4168 = vunpack.c.l.b16 %v3815
    %v4169 = vunpack.c.h.b16 %v3815
    %v4170 = vunpack.c.l.b16 %v3816
    %v4171 = vunpack.c.h.b16 %v3816
    %v4172 = vunpack.c.l.b16 %v3817
    %v4173 = vunpack.c.h.b16 %v3817
    %v4174 = vunpack.c.l.b16 %v3818
    %v4175 = vunpack.c.h.b16 %v3818
    %v4176 = vunpack.c.l.b16 %v3819
    %v4177 = vunpack.c.h.b16 %v3819
    %v4178 = vunpack.c.l.b16 %v3820
    %v4179 = vunpack.c.h.b16 %v3820
    %v4180 = vunpack.c.l.b16 %v3821
    %v4181 = vunpack.c.h.b16 %v3821
    %v4182 = vunpack.c.l.b16 %v3822
    %v4183 = vunpack.c.h.b16 %v3822
    %v4184 = vunpack.c.l.b16 %v3823
    %v4185 = vunpack.c.h.b16 %v3823
    %v4186 = vunpack.c.l.b16 %v3824
    %v4187 = vunpack.c.h.b16 %v3824
    %v4188 = vunpack.c.l.b16 %v3825
    %v4189 = vunpack.c.h.b16 %v3825
    %v4190 = vunpack.c.l.b16 %v3826
    %v4191 = vunpack.c.h.b16 %v3826
    %v4192 = vunpack.c.l.b16 %v3827
    %v4193 = vunpack.c.h.b16 %v3827
    %v4194 = vunpack.c.l.b16 %v3828
    %v4195 = vunpack.c.h.b16 %v3828
    %v4196 = vunpack.c.l.b16 %v3829
    %v4197 = vunpack.c.h.b16 %v3829
    %v4198 = vunpack.c.l.b16 %v3830
    %v4199 = vunpack.c.h.b16 %v3830
    %v4200 = vunpack.c.l.b16 %v3831
    %v4201 = vunpack.c.h.b16 %v3831
    %v4202 = vunpack.c.l.b16 %v3832
    %v4203 = vunpack.c.h.b16 %v3832
    %v4204 = vunpack.c.l.b16 %v3833
    %v4205 = vunpack.c.h.b16 %v3833
    %v4206 = vunpack.c.l.b16 %v3834
    %v4207 = vunpack.c.h.b16 %v3834
    %v4208 = vunpack.c.l.b16 %v3835
    %v4209 = vunpack.c.h.b16 %v3835
    %v4210 = vunpack.c.l.b16 %v3836
    %v4211 = vunpack.c.h.b16 %v3836
    %v4212 = vunpack.c.l.b16 %v3837
    %v4213 = vunpack.c.h.b16 %v3837
    %v4214 = vunpack.c.l.b16 %v3838
    %v4215 = vunpack.c.h.b16 %v3838
    %v4216 = vunpack.c.l.b16 %v3839
    %v4217 = vunpack.c.h.b16 %v3839
    %v4218 = vunpack.c.l.b16 %v3840
    %v4219 = vunpack.c.h.b16 %v3840
    %v4220 = vunpack.c.l.b16 %v3841
    %v4221 = vunpack.c.h.b16 %v3841
    %v4222 = vunpack.c.l.b16 %v3842
    %v4223 = vunpack.c.h.b16 %v3842
    %v4224 = vunpack.c.l.b16 %v3843
    %v4225 = vunpack.c.h.b16 %v3843
    %v4226 = vunpack.c.l.b16 %v3844
    %v4227 = vunpack.c.h.b16 %v3844
    %v4228 = vunpack.c.l.b16 %v3845
    %v4229 = vunpack.c.h.b16 %v3845
    %v4230 = vunpack.c.l.b16 %v3846
    %v4231 = vunpack.c.h.b16 %v3846
    %v4232 = vunpack.c.l.b16 %v3847
    %v4233 = vunpack.c.h.b16 %v3847
    %v4234 = vunpack.c.l.b16 %v3848
    %v4235 = vunpack.c.h.b16 %v3848
    %v4236 = vunpack.c.l.b16 %v3849
    %v4237 = vunpack.c.h.b16 %v3849
    %v4238 = vunpack.c.l.b16 %v3850
    %v4239 = vunpack.c.h.b16 %v3850
    %v4240 = vunpack.c.l.b16 %v3851
    %v4241 = vunpack.c.h.b16 %v3851
    %v4242 = vunpack.c.l.b16 %v3852
    %v4243 = vunpack.c.h.b16 %v3852
    %v4244 = vunpack.c.l.b16 %v3853
    %v4245 = vunpack.c.h.b16 %v3853
    %v4246 = vunpack.c.l.b16 %v3854
    %v4247 = vunpack.c.h.b16 %v3854
    %v4248 = vunpack.c.l.b16 %v3855
    %v4249 = vunpack.c.h.b16 %v3855
    %v4250 = vunpack.c.l.b16 %v3856
    %v4251 = vunpack.c.h.b16 %v3856
    %v4252 = vpack.c.b16 %v4000, %v3996
    %v4253 = vpack.c.b16 %v4001, %v3997
    %v4254 = vpack.c.b16 %v4002, %v3998
    %v4255 = vpack.c.b16 %v4003, %v3999
    %v4256 = vpack.c.b16 %v4008, %v4004
    %v4257 = vpack.c.b16 %v4009, %v4005
    %v4258 = vpack.c.b16 %v4010, %v4006
    %v4259 = vpack.c.b16 %v4011, %v4007
    %v4260 = vpack.c.b16 %v4016, %v4012
    %v4261 = vpack.c.b16 %v4017, %v4013
    %v4262 = vpack.c.b16 %v4018, %v4014
    %v4263 = vpack.c.b16 %v4019, %v4015
    %v4264 = vpack.c.b16 %v4024, %v4020
    %v4265 = vpack.c.b16 %v4025, %v4021
    %v4266 = vpack.c.b16 %v4026, %v4022
    %v4267 = vpack.c.b16 %v4027, %v4023
    %v4268 = vpack.c.b16 %v4032, %v4028
    %v4269 = vpack.c.b16 %v4033, %v4029
    %v4270 = vpack.c.b16 %v4034, %v4030
    %v4271 = vpack.c.b16 %v4035, %v4031
    %v4272 = vpack.c.b16 %v4040, %v4036
    %v4273 = vpack.c.b16 %v4041, %v4037
    %v4274 = vpack.c.b16 %v4042, %v4038
    %v4275 = vpack.c.b16 %v4043, %v4039
    %v4276 = vpack.c.b16 %v4048, %v4044
    %v4277 = vpack.c.b16 %v4049, %v4045
    %v4278 = vpack.c.b16 %v4050, %v4046
    %v4279 = vpack.c.b16 %v4051, %v4047
    %v4280 = vpack.c.b16 %v4056, %v4052
    %v4281 = vpack.c.b16 %v4057, %v4053
    %v4282 = vpack.c.b16 %v4058, %v4054
    %v4283 = vpack.c.b16 %v4059, %v4055
    %v4284 = vpack.c.b16 %v4064, %v4060
    %v4285 = vpack.c.b16 %v4065, %v4061
    %v4286 = vpack.c.b16 %v4066, %v4062
    %v4287 = vpack.c.b16 %v4067, %v4063
    %v4288 = vpack.c.b16 %v4072, %v4068
    %v4289 = vpack.c.b16 %v4073, %v4069
    %v4290 = vpack.c.b16 %v4074, %v4070
    %v4291 = vpack.c.b16 %v4075, %v4071
    %v4292 = vpack.c.b16 %v4080, %v4076
    %v4293 = vpack.c.b16 %v4081, %v4077
    %v4294 = vpack.c.b16 %v4082, %v4078
    %v4295 = vpack.c.b16 %v4083, %v4079
    %v4296 = vpack.c.b16 %v4088, %v4084
    %v4297 = vpack.c.b16 %v4089, %v4085
    %v4298 = vpack.c.b16 %v4090, %v4086
    %v4299 = vpack.c.b16 %v4091, %v4087
    %v4300 = vpack.c.b16 %v4096, %v4092
    %v4301 = vpack.c.b16 %v4097, %v4093
    %v4302 = vpack.c.b16 %v4098, %v4094
    %v4303 = vpack.c.b16 %v4099, %v4095
    %v4304 = vpack.c.b16 %v4104, %v4100
    %v4305 = vpack.c.b16 %v4105, %v4101
    %v4306 = vpack.c.b16 %v4106, %v4102
    %v4307 = vpack.c.b16 %v4107, %v4103
    %v4308 = vpack.c.b16 %v4112, %v4108
    %v4309 = vpack.c.b16 %v4113, %v4109
    %v4310 = vpack.c.b16 %v4114, %v4110
    %v4311 = vpack.c.b16 %v4115, %v4111
    %v4312 = vpack.c.b16 %v4120, %v4116
    %v4313 = vpack.c.b16 %v4121, %v4117
    %v4314 = vpack.c.b16 %v4122, %v4118
    %v4315 = vpack.c.b16 %v4123, %v4119
    %v4316 = vpack.c.b16 %v4128, %v4124
    %v4317 = vpack.c.b16 %v4129, %v4125
    %v4318 = vpack.c.b16 %v4130, %v4126
    %v4319 = vpack.c.b16 %v4131, %v4127
    %v4320 = vpack.c.b16 %v4136, %v4132
    %v4321 = vpack.c.b16 %v4137, %v4133
    %v4322 = vpack.c.b16 %v4138, %v4134
    %v4323 = vpack.c.b16 %v4139, %v4135
    %v4324 = vpack.c.b16 %v4144, %v4140
    %v4325 = vpack.c.b16 %v4145, %v4141
    %v4326 = vpack.c.b16 %v4146, %v4142
    %v4327 = vpack.c.b16 %v4147, %v4143
    %v4328 = vpack.c.b16 %v4152, %v4148
    %v4329 = vpack.c.b16 %v4153, %v4149
    %v4330 = vpack.c.b16 %v4154, %v4150
    %v4331 = vpack.c.b16 %v4155, %v4151
    %v4332 = vpack.c.b16 %v4160, %v4156
    %v4333 = vpack.c.b16 %v4161, %v4157
    %v4334 = vpack.c.b16 %v4162, %v4158
    %v4335 = vpack.c.b16 %v4163, %v4159
    %v4336 = vpack.c.b16 %v4168, %v4164
    %v4337 = vpack.c.b16 %v4169, %v4165
    %v4338 = vpack.c.b16 %v4170, %v4166
    %v4339 = vpack.c.b16 %v4171, %v4167
    %v4340 = vpack.c.b16 %v4176, %v4172
    %v4341 = vpack.c.b16 %v4177, %v4173
    %v4342 = vpack.c.b16 %v4178, %v4174
    %v4343 = vpack.c.b16 %v4179, %v4175
    %v4344 = vpack.c.b16 %v4184, %v4180
    %v4345 = vpack.c.b16 %v4185, %v4181
    %v4346 = vpack.c.b16 %v4186, %v4182
    %v4347 = vpack.c.b16 %v4187, %v4183
    %v4348 = vpack.c.b16 %v4192, %v4188
    %v4349 = vpack.c.b16 %v4193, %v4189
    %v4350 = vpack.c.b16 %v4194, %v4190
    %v4351 = vpack.c.b16 %v4195, %v4191
    %v4352 = vpack.c.b16 %v4200, %v4196
    %v4353 = vpack.c.b16 %v4201, %v4197
    %v4354 = vpack.c.b16 %v4202, %v4198
    %v4355 = vpack.c.b16 %v4203, %v4199
    %v4356 = vpack.c.b16 %v4208, %v4204
    %v4357 = vpack.c.b16 %v4209, %v4205
    %v4358 = vpack.c.b16 %v4210, %v4206
    %v4359 = vpack.c.b16 %v4211, %v4207
    %v4360 = vpack.c.b16 %v4216, %v4212
    %v4361 = vpack.c.b16 %v4217, %v4213
    %v4362 = vpack.c.b16 %v4218, %v4214
    %v4363 = vpack.c.b16 %v4219, %v4215
    %v4364 = vpack.c.b16 %v4224, %v4220
    %v4365 = vpack.c.b16 %v4225, %v4221
    %v4366 = vpack.c.b16 %v4226, %v4222
    %v4367 = vpack.c.b16 %v4227, %v4223
    %v4368 = vpack.c.b16 %v4232, %v4228
    %v4369 = vpack.c.b16 %v4233, %v4229
    %v4370 = vpack.c.b16 %v4234, %v4230
    %v4371 = vpack.c.b16 %v4235, %v4231
    %v4372 = vpack.c.b16 %v4240, %v4236
    %v4373 = vpack.c.b16 %v4241, %v4237
    %v4374 = vpack.c.b16 %v4242, %v4238
    %v4375 = vpack.c.b16 %v4243, %v4239
    %v4376 = vpack.c.b16 %v4248, %v4244
    %v4377 = vpack.c.b16 %v4249, %v4245
    %v4378 = vpack.c.b16 %v4250, %v4246
    %v4379 = vpack.c.b16 %v4251, %v4247
    %4508 = vmatpush.bf16.msra.mxu0 %v4280
    %4509 = vmatpush.bf16.msra.mxu0 %v4276
    %4510 = vmatpush.bf16.msra.mxu0 %v4272
    %4511 = vmatpush.bf16.msra.mxu0 %v4268
    %4512 = vmatpush.bf16.msra.mxu0 %v4264
    %4513 = vmatpush.bf16.msra.mxu0 %v4260
    %4514 = vmatpush.bf16.msra.mxu0 %v4256
    %4515 = vmatpush.bf16.msra.mxu0 %v4252
    %4516 = vmatmul.bf16.gmra.mxu0 %v3725
    %v4517 = vpop.f32.mrf.mxu0
    %v4518 = vadd.f32 %v3860, %v4517
    %v4519 = vpop.f32.mrf.mxu0
    %4520 = vdwg.mxu0
    %4521 = vmatpush.bf16.msra.mxu0 %v4312
    %4522 = vmatpush.bf16.msra.mxu0 %v4308
    %4523 = vmatpush.bf16.msra.mxu0 %v4304
    %4524 = vmatpush.bf16.msra.mxu0 %v4300
    %4525 = vmatpush.bf16.msra.mxu0 %v4296
    %4526 = vmatpush.bf16.msra.mxu0 %v4292
    %4527 = vmatpush.bf16.msra.mxu0 %v4288
    %4528 = vmatpush.bf16.msra.mxu0 %v4284
    %4529 = vmatmul.bf16.gmra.mxu0 %v3726
    %v4530 = vpop.f32.mrf.mxu0
    %v4531 = vadd.f32 %v4518, %v4530
    %v4532 = vpop.f32.mrf.mxu0
    %4533 = vdwg.mxu0
    %4534 = vmatpush.bf16.msra.mxu0 %v4344
    %4535 = vmatpush.bf16.msra.mxu0 %v4340
    %4536 = vmatpush.bf16.msra.mxu0 %v4336
    %4537 = vmatpush.bf16.msra.mxu0 %v4332
    %4538 = vmatpush.bf16.msra.mxu0 %v4328
    %4539 = vmatpush.bf16.msra.mxu0 %v4324
    %4540 = vmatpush.bf16.msra.mxu0 %v4320
    %4541 = vmatpush.bf16.msra.mxu0 %v4316
    %4542 = vmatmul.bf16.gmra.mxu0 %v3727
    %v4543 = vpop.f32.mrf.mxu0
    %v4544 = vadd.f32 %v4531, %v4543
    %v4545 = vpop.f32.mrf.mxu0
    %4546 = vdwg.mxu0
    %4547 = vmatpush.bf16.msra.mxu0 %v4376
    %4548 = vmatpush.bf16.msra.mxu0 %v4372
    %4549 = vmatpush.bf16.msra.mxu0 %v4368
    %4550 = vmatpush.bf16.msra.mxu0 %v4364
    %4551 = vmatpush.bf16.msra.mxu0 %v4360
    %4552 = vmatpush.bf16.msra.mxu0 %v4356
    %4553 = vmatpush.bf16.msra.mxu0 %v4352
    %4554 = vmatpush.bf16.msra.mxu0 %v4348
    %4555 = vmatmul.bf16.gmra.mxu0 %v3728
    %v4556 = vpop.f32.mrf.mxu0
    %v4557 = vadd.f32 %v4544, %v4556
    %v4558 = vpop.f32.mrf.mxu0
    %4559 = vdwg.mxu0
    %4560 = vmatpush.bf16.msra.mxu0 %v4281
    %4561 = vmatpush.bf16.msra.mxu0 %v4277
    %4562 = vmatpush.bf16.msra.mxu0 %v4273
    %4563 = vmatpush.bf16.msra.mxu0 %v4269
    %4564 = vmatpush.bf16.msra.mxu0 %v4265
    %4565 = vmatpush.bf16.msra.mxu0 %v4261
    %4566 = vmatpush.bf16.msra.mxu0 %v4257
    %4567 = vmatpush.bf16.msra.mxu0 %v4253
    %4568 = vmatmul.bf16.gmra.mxu0 %v3725
    %v4569 = vpop.f32.mrf.mxu0
    %v4570 = vadd.f32 %v3861, %v4569
    %v4571 = vpop.f32.mrf.mxu0
    %4572 = vdwg.mxu0
    %4573 = vmatpush.bf16.msra.mxu0 %v4313
    %4574 = vmatpush.bf16.msra.mxu0 %v4309
    %4575 = vmatpush.bf16.msra.mxu0 %v4305
    %4576 = vmatpush.bf16.msra.mxu0 %v4301
    %4577 = vmatpush.bf16.msra.mxu0 %v4297
    %4578 = vmatpush.bf16.msra.mxu0 %v4293
    %4579 = vmatpush.bf16.msra.mxu0 %v4289
    %4580 = vmatpush.bf16.msra.mxu0 %v4285
    %4581 = vmatmul.bf16.gmra.mxu0 %v3726
    %v4582 = vpop.f32.mrf.mxu0
    %v4583 = vadd.f32 %v4570, %v4582
    %v4584 = vpop.f32.mrf.mxu0
    %4585 = vdwg.mxu0
    %4586 = vmatpush.bf16.msra.mxu0 %v4345
    %4587 = vmatpush.bf16.msra.mxu0 %v4341
    %4588 = vmatpush.bf16.msra.mxu0 %v4337
    %4589 = vmatpush.bf16.msra.mxu0 %v4333
    %4590 = vmatpush.bf16.msra.mxu0 %v4329
    %4591 = vmatpush.bf16.msra.mxu0 %v4325
    %4592 = vmatpush.bf16.msra.mxu0 %v4321
    %4593 = vmatpush.bf16.msra.mxu0 %v4317
    %4594 = vmatmul.bf16.gmra.mxu0 %v3727
    %v4595 = vpop.f32.mrf.mxu0
    %v4596 = vadd.f32 %v4583, %v4595
    %v4597 = vpop.f32.mrf.mxu0
    %4598 = vdwg.mxu0
    %4599 = vmatpush.bf16.msra.mxu0 %v4377
    %4600 = vmatpush.bf16.msra.mxu0 %v4373
    %4601 = vmatpush.bf16.msra.mxu0 %v4369
    %4602 = vmatpush.bf16.msra.mxu0 %v4365
    %4603 = vmatpush.bf16.msra.mxu0 %v4361
    %4604 = vmatpush.bf16.msra.mxu0 %v4357
    %4605 = vmatpush.bf16.msra.mxu0 %v4353
    %4606 = vmatpush.bf16.msra.mxu0 %v4349
    %4607 = vmatmul.bf16.gmra.mxu0 %v3728
    %v4608 = vpop.f32.mrf.mxu0
    %v4609 = vadd.f32 %v4596, %v4608
    %v4610 = vpop.f32.mrf.mxu0
    %4611 = vdwg.mxu0
    %4612 = vmatpush.bf16.msra.mxu0 %v4282
    %4613 = vmatpush.bf16.msra.mxu0 %v4278
    %4614 = vmatpush.bf16.msra.mxu0 %v4274
    %4615 = vmatpush.bf16.msra.mxu0 %v4270
    %4616 = vmatpush.bf16.msra.mxu0 %v4266
    %4617 = vmatpush.bf16.msra.mxu0 %v4262
    %4618 = vmatpush.bf16.msra.mxu0 %v4258
    %4619 = vmatpush.bf16.msra.mxu0 %v4254
    %4620 = vmatmul.bf16.gmra.mxu0 %v3725
    %v4621 = vpop.f32.mrf.mxu0
    %v4622 = vadd.f32 %v3862, %v4621
    %v4623 = vpop.f32.mrf.mxu0
    %4624 = vdwg.mxu0
    %4625 = vmatpush.bf16.msra.mxu0 %v4314
    %4626 = vmatpush.bf16.msra.mxu0 %v4310
    %4627 = vmatpush.bf16.msra.mxu0 %v4306
    %4628 = vmatpush.bf16.msra.mxu0 %v4302
    %4629 = vmatpush.bf16.msra.mxu0 %v4298
    %4630 = vmatpush.bf16.msra.mxu0 %v4294
    %4631 = vmatpush.bf16.msra.mxu0 %v4290
    %4632 = vmatpush.bf16.msra.mxu0 %v4286
    %4633 = vmatmul.bf16.gmra.mxu0 %v3726
    %v4634 = vpop.f32.mrf.mxu0
    %v4635 = vadd.f32 %v4622, %v4634
    %v4636 = vpop.f32.mrf.mxu0
    %4637 = vdwg.mxu0
    %4638 = vmatpush.bf16.msra.mxu0 %v4346
    %4639 = vmatpush.bf16.msra.mxu0 %v4342
    %4640 = vmatpush.bf16.msra.mxu0 %v4338
    %4641 = vmatpush.bf16.msra.mxu0 %v4334
    %4642 = vmatpush.bf16.msra.mxu0 %v4330
    %4643 = vmatpush.bf16.msra.mxu0 %v4326
    %4644 = vmatpush.bf16.msra.mxu0 %v4322
    %4645 = vmatpush.bf16.msra.mxu0 %v4318
    %4646 = vmatmul.bf16.gmra.mxu0 %v3727
    %v4647 = vpop.f32.mrf.mxu0
    %v4648 = vadd.f32 %v4635, %v4647
    %v4649 = vpop.f32.mrf.mxu0
    %4650 = vdwg.mxu0
    %4651 = vmatpush.bf16.msra.mxu0 %v4378
    %4652 = vmatpush.bf16.msra.mxu0 %v4374
    %4653 = vmatpush.bf16.msra.mxu0 %v4370
    %4654 = vmatpush.bf16.msra.mxu0 %v4366
    %4655 = vmatpush.bf16.msra.mxu0 %v4362
    %4656 = vmatpush.bf16.msra.mxu0 %v4358
    %4657 = vmatpush.bf16.msra.mxu0 %v4354
    %4658 = vmatpush.bf16.msra.mxu0 %v4350
    %4659 = vmatmul.bf16.gmra.mxu0 %v3728
    %v4660 = vpop.f32.mrf.mxu0
    %v4661 = vadd.f32 %v4648, %v4660
    %v4662 = vpop.f32.mrf.mxu0
    %4663 = vdwg.mxu0
    %4664 = vmatpush.bf16.msra.mxu0 %v4283
    %4665 = vmatpush.bf16.msra.mxu0 %v4279
    %4666 = vmatpush.bf16.msra.mxu0 %v4275
    %4667 = vmatpush.bf16.msra.mxu0 %v4271
    %4668 = vmatpush.bf16.msra.mxu0 %v4267
    %4669 = vmatpush.bf16.msra.mxu0 %v4263
    %4670 = vmatpush.bf16.msra.mxu0 %v4259
    %4671 = vmatpush.bf16.msra.mxu0 %v4255
    %4672 = vmatmul.bf16.gmra.mxu0 %v3725
    %v4673 = vpop.f32.mrf.mxu0
    %v4674 = vadd.f32 %v3863, %v4673
    %v4675 = vpop.f32.mrf.mxu0
    %4676 = vdwg.mxu0
    %4677 = vmatpush.bf16.msra.mxu0 %v4315
    %4678 = vmatpush.bf16.msra.mxu0 %v4311
    %4679 = vmatpush.bf16.msra.mxu0 %v4307
    %4680 = vmatpush.bf16.msra.mxu0 %v4303
    %4681 = vmatpush.bf16.msra.mxu0 %v4299
    %4682 = vmatpush.bf16.msra.mxu0 %v4295
    %4683 = vmatpush.bf16.msra.mxu0 %v4291
    %4684 = vmatpush.bf16.msra.mxu0 %v4287
    %4685 = vmatmul.bf16.gmra.mxu0 %v3726
    %v4686 = vpop.f32.mrf.mxu0
    %v4687 = vadd.f32 %v4674, %v4686
    %v4688 = vpop.f32.mrf.mxu0
    %4689 = vdwg.mxu0
    %4690 = vmatpush.bf16.msra.mxu0 %v4347
    %4691 = vmatpush.bf16.msra.mxu0 %v4343
    %4692 = vmatpush.bf16.msra.mxu0 %v4339
    %4693 = vmatpush.bf16.msra.mxu0 %v4335
    %4694 = vmatpush.bf16.msra.mxu0 %v4331
    %4695 = vmatpush.bf16.msra.mxu0 %v4327
    %4696 = vmatpush.bf16.msra.mxu0 %v4323
    %4697 = vmatpush.bf16.msra.mxu0 %v4319
    %4698 = vmatmul.bf16.gmra.mxu0 %v3727
    %v4699 = vpop.f32.mrf.mxu0
    %v4700 = vadd.f32 %v4687, %v4699
    %v4701 = vpop.f32.mrf.mxu0
    %4702 = vdwg.mxu0
    %4703 = vmatpush.bf16.msra.mxu0 %v4379
    %4704 = vmatpush.bf16.msra.mxu0 %v4375
    %4705 = vmatpush.bf16.msra.mxu0 %v4371
    %4706 = vmatpush.bf16.msra.mxu0 %v4367
    %4707 = vmatpush.bf16.msra.mxu0 %v4363
    %4708 = vmatpush.bf16.msra.mxu0 %v4359
    %4709 = vmatpush.bf16.msra.mxu0 %v4355
    %4710 = vmatpush.bf16.msra.mxu0 %v4351
    %4711 = vmatmul.bf16.gmra.mxu0 %v3728
    %v4712 = vpop.f32.mrf.mxu0
    %v4713 = vadd.f32 %v4700, %v4712
    %v4714 = vpop.f32.mrf.mxu0
    %4715 = vdwg.mxu0
    %v4716 = vmax.f32 %v4557, 0.0
    %v4717 = vmax.f32 %v4609, 0.0
    %v4718 = vmax.f32 %v4661, 0.0
    %v4719 = vmax.f32 %v4713, 0.0
    %v4720 = vpack.c.bf16 %v4716, %v4716
    %v4721 = vpack.c.bf16 %v4717, %v4717
    %v4722 = vpack.c.bf16 %v4718, %v4718
    %v4723 = vpack.c.bf16 %v4719, %v4719
    %v4724 = vld [vmem:[#allocation7] sm:$0xf]
    %v4725 = vld [vmem:[#allocation7 + $0x4] sm:$0xf]
    %v4726 = vld [vmem:[#allocation7 + $0x8] sm:$0xf]
    %v4727 = vld [vmem:[#allocation7 + $0xc] sm:$0xf]
    %v4728 = vld [vmem:[#allocation7 + $0x10] sm:$0xf]
    %v4729 = vld [vmem:[#allocation7 + $0x14] sm:$0xf]
    %v4730 = vld [vmem:[#allocation7 + $0x18] sm:$0xf]
    %v4731 = vld [vmem:[#allocation7 + $0x1c] sm:$0xf]
    %v4732 = vld [vmem:[#allocation7 + $0x20] sm:$0xf]
    %v4733 = vld [vmem:[#allocation7 + $0x24] sm:$0xf]
    %v4734 = vld [vmem:[#allocation7 + $0x28] sm:$0xf]
    %v4735 = vld [vmem:[#allocation7 + $0x2c] sm:$0xf]
    %v4736 = vld [vmem:[#allocation7 + $0x30] sm:$0xf]
    %v4737 = vld [vmem:[#allocation7 + $0x34] sm:$0xf]
    %v4738 = vld [vmem:[#allocation7 + $0x38] sm:$0xf]
    %v4739 = vld [vmem:[#allocation7 + $0x3c] sm:$0xf]
    %v4740 = vld [vmem:[#allocation7 + $0x40] sm:$0xf]
    %v4741 = vld [vmem:[#allocation7 + $0x44] sm:$0xf]
    %v4742 = vld [vmem:[#allocation7 + $0x48] sm:$0xf]
    %v4743 = vld [vmem:[#allocation7 + $0x4c] sm:$0xf]
    %v4744 = vld [vmem:[#allocation7 + $0x50] sm:$0xf]
    %v4745 = vld [vmem:[#allocation7 + $0x54] sm:$0xf]
    %v4746 = vld [vmem:[#allocation7 + $0x58] sm:$0xf]
    %v4747 = vld [vmem:[#allocation7 + $0x5c] sm:$0xf]
    %v4748 = vld [vmem:[#allocation7 + $0x60] sm:$0xf]
    %v4749 = vld [vmem:[#allocation7 + $0x64] sm:$0xf]
    %v4750 = vld [vmem:[#allocation7 + $0x68] sm:$0xf]
    %v4751 = vld [vmem:[#allocation7 + $0x6c] sm:$0xf]
    %v4752 = vld [vmem:[#allocation7 + $0x70] sm:$0xf]
    %v4753 = vld [vmem:[#allocation7 + $0x74] sm:$0xf]
    %v4754 = vld [vmem:[#allocation7 + $0x78] sm:$0xf]
    %v4755 = vld [vmem:[#allocation7 + $0x7c] sm:$0xf]
    %v4756 = vld [vmem:[#allocation7 + $0x80] sm:$0xf]
    %v4757 = vld [vmem:[#allocation7 + $0x84] sm:$0xf]
    %v4758 = vld [vmem:[#allocation7 + $0x88] sm:$0xf]
    %v4759 = vld [vmem:[#allocation7 + $0x8c] sm:$0xf]
    %v4760 = vld [vmem:[#allocation7 + $0x90] sm:$0xf]
    %v4761 = vld [vmem:[#allocation7 + $0x94] sm:$0xf]
    %v4762 = vld [vmem:[#allocation7 + $0x98] sm:$0xf]
    %v4763 = vld [vmem:[#allocation7 + $0x9c] sm:$0xf]
    %v4764 = vld [vmem:[#allocation7 + $0xa0] sm:$0xf]
    %v4765 = vld [vmem:[#allocation7 + $0xa4] sm:$0xf]
    %v4766 = vld [vmem:[#allocation7 + $0xa8] sm:$0xf]
    %v4767 = vld [vmem:[#allocation7 + $0xac] sm:$0xf]
    %v4768 = vld [vmem:[#allocation7 + $0xb0] sm:$0xf]
    %v4769 = vld [vmem:[#allocation7 + $0xb4] sm:$0xf]
    %v4770 = vld [vmem:[#allocation7 + $0xb8] sm:$0xf]
    %v4771 = vld [vmem:[#allocation7 + $0xbc] sm:$0xf]
    %v4772 = vld [vmem:[#allocation7 + $0xc0] sm:$0xf]
    %v4773 = vld [vmem:[#allocation7 + $0xc4] sm:$0xf]
    %v4774 = vld [vmem:[#allocation7 + $0xc8] sm:$0xf]
    %v4775 = vld [vmem:[#allocation7 + $0xcc] sm:$0xf]
    %v4776 = vld [vmem:[#allocation7 + $0xd0] sm:$0xf]
    %v4777 = vld [vmem:[#allocation7 + $0xd4] sm:$0xf]
    %v4778 = vld [vmem:[#allocation7 + $0xd8] sm:$0xf]
    %v4779 = vld [vmem:[#allocation7 + $0xdc] sm:$0xf]
    %v4780 = vld [vmem:[#allocation7 + $0xe0] sm:$0xf]
    %v4781 = vld [vmem:[#allocation7 + $0xe4] sm:$0xf]
    %v4782 = vld [vmem:[#allocation7 + $0xe8] sm:$0xf]
    %v4783 = vld [vmem:[#allocation7 + $0xec] sm:$0xf]
    %v4784 = vld [vmem:[#allocation7 + $0xf0] sm:$0xf]
    %v4785 = vld [vmem:[#allocation7 + $0xf4] sm:$0xf]
    %v4786 = vld [vmem:[#allocation7 + $0xf8] sm:$0xf]
    %v4787 = vld [vmem:[#allocation7 + $0xfc] sm:$0xf]
    %v4788 = vld [vmem:[#allocation3 + $0x3] ss:$0 sm:$0xff]
    %v4853 = vunpack.c.l.b16 %v4724
    %v4854 = vunpack.c.l.b16 %v4725
    %v4855 = vunpack.c.l.b16 %v4726
    %v4856 = vunpack.c.l.b16 %v4727
    %v4857 = vunpack.c.l.b16 %v4728
    %v4858 = vunpack.c.l.b16 %v4729
    %v4859 = vunpack.c.l.b16 %v4730
    %v4860 = vunpack.c.l.b16 %v4731
    %v4861 = vunpack.c.l.b16 %v4732
    %v4862 = vunpack.c.l.b16 %v4733
    %v4863 = vunpack.c.l.b16 %v4734
    %v4864 = vunpack.c.l.b16 %v4735
    %v4865 = vunpack.c.l.b16 %v4736
    %v4866 = vunpack.c.l.b16 %v4737
    %v4867 = vunpack.c.l.b16 %v4738
    %v4868 = vunpack.c.l.b16 %v4739
    %v4869 = vunpack.c.l.b16 %v4740
    %v4870 = vunpack.c.l.b16 %v4741
    %v4871 = vunpack.c.l.b16 %v4742
    %v4872 = vunpack.c.l.b16 %v4743
    %v4873 = vunpack.c.l.b16 %v4744
    %v4874 = vunpack.c.l.b16 %v4745
    %v4875 = vunpack.c.l.b16 %v4746
    %v4876 = vunpack.c.l.b16 %v4747
    %v4877 = vunpack.c.l.b16 %v4748
    %v4878 = vunpack.c.l.b16 %v4749
    %v4879 = vunpack.c.l.b16 %v4750
    %v4880 = vunpack.c.l.b16 %v4751
    %v4881 = vunpack.c.l.b16 %v4752
    %v4882 = vunpack.c.l.b16 %v4753
    %v4883 = vunpack.c.l.b16 %v4754
    %v4884 = vunpack.c.l.b16 %v4755
    %v4885 = vunpack.c.l.b16 %v4756
    %v4886 = vunpack.c.l.b16 %v4757
    %v4887 = vunpack.c.l.b16 %v4758
    %v4888 = vunpack.c.l.b16 %v4759
    %v4889 = vunpack.c.l.b16 %v4760
    %v4890 = vunpack.c.l.b16 %v4761
    %v4891 = vunpack.c.l.b16 %v4762
    %v4892 = vunpack.c.l.b16 %v4763
    %v4893 = vunpack.c.l.b16 %v4764
    %v4894 = vunpack.c.l.b16 %v4765
    %v4895 = vunpack.c.l.b16 %v4766
    %v4896 = vunpack.c.l.b16 %v4767
    %v4897 = vunpack.c.l.b16 %v4768
    %v4898 = vunpack.c.l.b16 %v4769
    %v4899 = vunpack.c.l.b16 %v4770
    %v4900 = vunpack.c.l.b16 %v4771
    %v4901 = vunpack.c.l.b16 %v4772
    %v4902 = vunpack.c.l.b16 %v4773
    %v4903 = vunpack.c.l.b16 %v4774
    %v4904 = vunpack.c.l.b16 %v4775
    %v4905 = vunpack.c.l.b16 %v4776
    %v4906 = vunpack.c.l.b16 %v4777
    %v4907 = vunpack.c.l.b16 %v4778
    %v4908 = vunpack.c.l.b16 %v4779
    %v4909 = vunpack.c.l.b16 %v4780
    %v4910 = vunpack.c.l.b16 %v4781
    %v4911 = vunpack.c.l.b16 %v4782
    %v4912 = vunpack.c.l.b16 %v4783
    %v4913 = vunpack.c.l.b16 %v4784
    %v4914 = vunpack.c.l.b16 %v4785
    %v4915 = vunpack.c.l.b16 %v4786
    %v4916 = vunpack.c.l.b16 %v4787
    %v4917 = vpack.c.b16 %v4854, %v4853
    %v4918 = vpack.c.b16 %v4856, %v4855
    %v4919 = vpack.c.b16 %v4858, %v4857
    %v4920 = vpack.c.b16 %v4860, %v4859
    %v4921 = vpack.c.b16 %v4862, %v4861
    %v4922 = vpack.c.b16 %v4864, %v4863
    %v4923 = vpack.c.b16 %v4866, %v4865
    %v4924 = vpack.c.b16 %v4868, %v4867
    %v4925 = vpack.c.b16 %v4870, %v4869
    %v4926 = vpack.c.b16 %v4872, %v4871
    %v4927 = vpack.c.b16 %v4874, %v4873
    %v4928 = vpack.c.b16 %v4876, %v4875
    %v4929 = vpack.c.b16 %v4878, %v4877
    %v4930 = vpack.c.b16 %v4880, %v4879
    %v4931 = vpack.c.b16 %v4882, %v4881
    %v4932 = vpack.c.b16 %v4884, %v4883
    %v4933 = vpack.c.b16 %v4886, %v4885
    %v4934 = vpack.c.b16 %v4888, %v4887
    %v4935 = vpack.c.b16 %v4890, %v4889
    %v4936 = vpack.c.b16 %v4892, %v4891
    %v4937 = vpack.c.b16 %v4894, %v4893
    %v4938 = vpack.c.b16 %v4896, %v4895
    %v4939 = vpack.c.b16 %v4898, %v4897
    %v4940 = vpack.c.b16 %v4900, %v4899
    %v4941 = vpack.c.b16 %v4902, %v4901
    %v4942 = vpack.c.b16 %v4904, %v4903
    %v4943 = vpack.c.b16 %v4906, %v4905
    %v4944 = vpack.c.b16 %v4908, %v4907
    %v4945 = vpack.c.b16 %v4910, %v4909
    %v4946 = vpack.c.b16 %v4912, %v4911
    %v4947 = vpack.c.b16 %v4914, %v4913
    %v4948 = vpack.c.b16 %v4916, %v4915
    %4981 = vmatpush.bf16.msra.mxu0 %v4924
    %4982 = vmatpush.bf16.msra.mxu0 %v4923
    %4983 = vmatpush.bf16.msra.mxu0 %v4922
    %4984 = vmatpush.bf16.msra.mxu0 %v4921
    %4985 = vmatpush.bf16.msra.mxu0 %v4920
    %4986 = vmatpush.bf16.msra.mxu0 %v4919
    %4987 = vmatpush.bf16.msra.mxu0 %v4918
    %4988 = vmatpush.bf16.msra.mxu0 %v4917
    %4989 = vmatmul.bf16.gmra.mxu0 %v4720
    %v4990 = vpop.f32.mrf.mxu0
    %v4991 = vadd.f32 %v4788, %v4990
    %v4992 = vpop.f32.mrf.mxu0
    %4993 = vdwg.mxu0
    %4994 = vmatpush.bf16.msra.mxu0 %v4932
    %4995 = vmatpush.bf16.msra.mxu0 %v4931
    %4996 = vmatpush.bf16.msra.mxu0 %v4930
    %4997 = vmatpush.bf16.msra.mxu0 %v4929
    %4998 = vmatpush.bf16.msra.mxu0 %v4928
    %4999 = vmatpush.bf16.msra.mxu0 %v4927
    %5000 = vmatpush.bf16.msra.mxu0 %v4926
    %5001 = vmatpush.bf16.msra.mxu0 %v4925
    %5002 = vmatmul.bf16.gmra.mxu0 %v4721
    %v5003 = vpop.f32.mrf.mxu0
    %v5004 = vadd.f32 %v4991, %v5003
    %v5005 = vpop.f32.mrf.mxu0
    %5006 = vdwg.mxu0
    %5007 = vmatpush.bf16.msra.mxu0 %v4940
    %5008 = vmatpush.bf16.msra.mxu0 %v4939
    %5009 = vmatpush.bf16.msra.mxu0 %v4938
    %5010 = vmatpush.bf16.msra.mxu0 %v4937
    %5011 = vmatpush.bf16.msra.mxu0 %v4936
    %5012 = vmatpush.bf16.msra.mxu0 %v4935
    %5013 = vmatpush.bf16.msra.mxu0 %v4934
    %5014 = vmatpush.bf16.msra.mxu0 %v4933
    %5015 = vmatmul.bf16.gmra.mxu0 %v4722
    %v5016 = vpop.f32.mrf.mxu0
    %v5017 = vadd.f32 %v5004, %v5016
    %v5018 = vpop.f32.mrf.mxu0
    %5019 = vdwg.mxu0
    %5020 = vmatpush.bf16.msra.mxu0 %v4948
    %5021 = vmatpush.bf16.msra.mxu0 %v4947
    %5022 = vmatpush.bf16.msra.mxu0 %v4946
    %5023 = vmatpush.bf16.msra.mxu0 %v4945
    %5024 = vmatpush.bf16.msra.mxu0 %v4944
    %5025 = vmatpush.bf16.msra.mxu0 %v4943
    %5026 = vmatpush.bf16.msra.mxu0 %v4942
    %5027 = vmatpush.bf16.msra.mxu0 %v4941
    %5028 = vmatmul.bf16.gmra.mxu0 %v4723
    %v5029 = vpop.f32.mrf.mxu0
    %v5030 = vadd.f32 %v5017, %v5029
    %v5031 = vpop.f32.mrf.mxu0
    %5032 = vdwg.mxu0
    %v5033 = vmax.f32 %v5030, 0.0
    %v5034 = vpack.c.bf16 %v5033, %v5033
    %v5035 = vld [vmem:[%s2 + $0x50] sm:$0xf]
    %v5036 = vld [vmem:[%s2 + $0x54] sm:$0xf]
    %v5037 = vld [vmem:[%s2 + $0x58] sm:$0xf]
    %v5038 = vld [vmem:[%s2 + $0x5c] sm:$0xf]
    %v5039 = vld [vmem:[%s2 + $0x60] sm:$0xf]
    %v5040 = vld [vmem:[%s2 + $0x64] sm:$0xf]
    %v5041 = vld [vmem:[%s2 + $0x68] sm:$0xf]
    %v5042 = vld [vmem:[%s2 + $0x6c] sm:$0xf]
    %v5043 = vld [vmem:[%s2 + $0x70] sm:$0xf]
    %v5044 = vld [vmem:[%s2 + $0x74] sm:$0xf]
    %v5045 = vld [vmem:[%s2 + $0x78] sm:$0xf]
    %v5046 = vld [vmem:[%s2 + $0x7c] sm:$0xf]
    %v5047 = vld [vmem:[%s2 + $0x80] sm:$0xf]
    %v5048 = vld [vmem:[%s2 + $0x84] sm:$0xf]
    %v5049 = vld [vmem:[%s2 + $0x88] sm:$0xf]
    %v5050 = vld [vmem:[%s2 + $0x8c] sm:$0xf]
    %v5051 = vld [vmem:[#allocation3 + $0x6] ss:$0 sm:$0xff]
    %v5068 = vunpack.c.l.b16 %v5035
    %v5069 = vunpack.c.l.b16 %v5036
    %v5070 = vunpack.c.l.b16 %v5037
    %v5071 = vunpack.c.l.b16 %v5038
    %v5072 = vunpack.c.l.b16 %v5039
    %v5073 = vunpack.c.l.b16 %v5040
    %v5074 = vunpack.c.l.b16 %v5041
    %v5075 = vunpack.c.l.b16 %v5042
    %v5076 = vunpack.c.l.b16 %v5043
    %v5077 = vunpack.c.l.b16 %v5044
    %v5078 = vunpack.c.l.b16 %v5045
    %v5079 = vunpack.c.l.b16 %v5046
    %v5080 = vunpack.c.l.b16 %v5047
    %v5081 = vunpack.c.l.b16 %v5048
    %v5082 = vunpack.c.l.b16 %v5049
    %v5083 = vunpack.c.l.b16 %v5050
    %v5084 = vpack.c.b16 %v5069, %v5068
    %v5085 = vpack.c.b16 %v5071, %v5070
    %v5086 = vpack.c.b16 %v5073, %v5072
    %v5087 = vpack.c.b16 %v5075, %v5074
    %v5088 = vpack.c.b16 %v5077, %v5076
    %v5089 = vpack.c.b16 %v5079, %v5078
    %v5090 = vpack.c.b16 %v5081, %v5080
    %v5091 = vpack.c.b16 %v5083, %v5082
    %5100 = vmatpush.bf16.msra.mxu0 %v5091
    %5101 = vmatpush.bf16.msra.mxu0 %v5090
    %5102 = vmatpush.bf16.msra.mxu0 %v5089
    %5103 = vmatpush.bf16.msra.mxu0 %v5088
    %5104 = vmatpush.bf16.msra.mxu0 %v5087
    %5105 = vmatpush.bf16.msra.mxu0 %v5086
    %5106 = vmatpush.bf16.msra.mxu0 %v5085
    %5107 = vmatpush.bf16.msra.mxu0 %v5084
    %5108 = vmatmul.bf16.gmra.mxu0 %v5034
    %v5109 = vpop.f32.mrf.mxu0
    %v5110 = vadd.f32 %v5051, %v5109
    %v5111 = vpop.f32.mrf.mxu0
    %5112 = vdwg.mxu0
    %v5113 = vlaneseq
    %v5114 = vand.u32 %v5113, 127
    %vm5115 = vcmp.ge.s32.totalorder %v5114, 4
    %vm5116 = vcmp.lt.s32.totalorder %v5114, 8
    %vm5117 = vmand %vm5115, %vm5116
    %v5118 = vmul.f32 %v5110, 0.5
    %v5119 = vsel %vm5117, %v5118, 0.0
    %v5120 = vmul.f32 %v5119, 1.442695
    %v5121 = vpow.pop %v5120
    %v5122 = vsel %vm5117, %v5121, %v5110
    %vm5123 = vcmask 66560
    %5124 = vst.msk [vmem:[%s6] sm:$0x3] %vm5123, %v5122
    // Predicated region
    $region38: #{my_model_forward.1} parent=1 // pred_check
      _
    $region39: #{my_model_forward.1} parent=1 // pred_check_branch
      %5126 = sbr.rel (0) target = $region41
    $region40: #{my_model_forward.1} parent=1 // pred_region
      _
    $region41: #{my_model_forward.1} parent=1 // pred_fallthru
      _
    // Predicated region
    $region42: #{my_model_forward.1} parent=1 // pred_check
      _
    $region43: #{my_model_forward.1} parent=1 // pred_check_branch
      %5128 = sbr.rel (0) target = $region45
    $region44: #{my_model_forward.1} parent=1 // pred_region
      _
    $region45: #{my_model_forward.1} parent=1 // pred_fallthru
      _
    %5129 = vsyncpa [#allocation4], 1
    %5130 = vsyncpa [#allocation6], 1

</llo_original>
